<compile_context>
chip_gen: v7x
topology: tpu7x:2x2x1
jax: 0.10.0
libtpu: 0.0.40
codegen_flags: <defaults>
</compile_context>

<pallas_src>
import math

import jax
import jax.numpy as jnp
from jax.experimental import pallas as pl
from jax.experimental.pallas import tpu as pltpu

HIDDEN = 512
INTERMEDIATE = 2048
_INV_SQRT2 = 1.0 / math.sqrt(2.0)
_TM_MAX = 256  # multiple of 128 (v5e MXU) and 256 (v6e/v7x MXU)


def _mlp_kernel(x_ref, w1_ref, b1_ref, w2_ref, b2_ref, o_ref):
    # dense_h_to_4h: [tm, 512] @ [512, 2048]  (bf16 operands, f32 accumulate)
    h = jnp.dot(x_ref[...], w1_ref[...], preferred_element_type=jnp.float32)
    h = h + b1_ref[...]
    # exact (erf-based) GELU in f32 — matches ACT2FN['gelu'] / F.gelu default.
    # erf runs on the EUP, overlapping with MXU/VPU work.
    h = 0.5 * h * (1.0 + jax.lax.erf(h * _INV_SQRT2))
    # dense_4h_to_h: [tm, 2048] @ [2048, 512]
    y = jnp.dot(h.astype(w2_ref.dtype), w2_ref[...],
                preferred_element_type=jnp.float32)
    y = y + b2_ref[...]
    o_ref[...] = y.astype(o_ref.dtype)


def _round_up(x, n):
    return ((x + n - 1) // n) * n


@jax.jit
def gpt_neox_mlp(x, w1, b1, w2, b2):
    """x: [..., 512] -> [..., 512]. Weights stored as [in_features, out_features]."""
    orig_shape = x.shape
    x2d = x.reshape(-1, HIDDEN)
    m = x2d.shape[0]

    # Row tile: as large as possible (amortize grid-step overhead, fill the MXU
    # M dimension); multiple of 16 for bf16 sublane packing. Rows are padded to
    # a tile multiple and trimmed afterwards.
    tm = min(_TM_MAX, _round_up(m, 16))
    m_pad = _round_up(m, tm)
    if m_pad != m:
        x2d = jnp.pad(x2d, ((0, m_pad - m), (0, 0)))

    # bf16 matmul operands; accumulation / bias / GELU stay in f32.
    x_bf16 = x2d.astype(jnp.bfloat16)
    w1_bf16 = w1.astype(jnp.bfloat16)
    w2_bf16 = w2.astype(jnp.bfloat16)
    b1_2d = b1.reshape(1, INTERMEDIATE).astype(jnp.float32)
    b2_2d = b2.reshape(1, HIDDEN).astype(jnp.float32)

    grid = (m_pad // tm,)

    flops = 4 * m_pad * HIDDEN * INTERMEDIATE  # two matmuls: 2 * 2*M*512*2048
    bytes_accessed = (
        x_bf16.size * 2 + m_pad * HIDDEN * 4            # x in, y out
        + w1_bf16.size * 2 + w2_bf16.size * 2            # weights (bf16)
        + b1_2d.size * 4 + b2_2d.size * 4                # biases (f32)
    )

    out = pl.pallas_call(
        _mlp_kernel,
        out_shape=jax.ShapeDtypeStruct((m_pad, HIDDEN), x.dtype),
        grid_spec=pltpu.PrefetchScalarGridSpec(
            num_scalar_prefetch=0,
            grid=grid,
            in_specs=[
                # activation rows: double-buffered across the grid
                pl.BlockSpec((tm, HIDDEN), lambda i: (i, 0)),
                # grid-invariant weights/biases: single-buffered -> fetched once
                # and kept resident in VMEM (~4 MiB bf16 total)
                pl.BlockSpec((HIDDEN, INTERMEDIATE), lambda i: (0, 0),
                             pipeline_mode=pl.Buffered(1)),
                pl.BlockSpec((1, INTERMEDIATE), lambda i: (0, 0),
                             pipeline_mode=pl.Buffered(1)),
                pl.BlockSpec((INTERMEDIATE, HIDDEN), lambda i: (0, 0),
                             pipeline_mode=pl.Buffered(1)),
                pl.BlockSpec((1, HIDDEN), lambda i: (0, 0),
                             pipeline_mode=pl.Buffered(1)),
            ],
            out_specs=pl.BlockSpec((tm, HIDDEN), lambda i: (i, 0)),
        ),
        compiler_params=pltpu.CompilerParams(
            dimension_semantics=("parallel",),   # row tiles shard across TCs (v7x)
            vmem_limit_bytes=32 * 1024 * 1024,   # fits v5e/v6e/v7x budgets
        ),
        cost_estimate=pl.CostEstimate(
            flops=flops,
            transcendentals=m_pad * INTERMEDIATE,  # erf in the GELU
            bytes_accessed=bytes_accessed,
        ),
    )(x_bf16, w1_bf16, b1_2d, w2_bf16, b2_2d)

    if m_pad != m:
        out = out[:m]
    return out.reshape(orig_shape)


def _reference(x, w1, b1, w2, b2):
    h = x @ w1 + b1
    h = jax.nn.gelu(h, approximate=False)
    return h @ w2 + b2


if __name__ == "__main__":
    key = jax.random.PRNGKey(0)
    k_x, k_w1, k_b1, k_w2, k_b2 = jax.random.split(key, 5)

    batch, seq = 2, 8
    x = jax.random.normal(k_x, (batch, seq, HIDDEN), dtype=jnp.float32)

    # Deterministic parameter init (PyTorch nn.Linear-style uniform bounds),
    # stored as [in_features, out_features].
    bound1 = 1.0 / math.sqrt(HIDDEN)
    w1 = jax.random.uniform(k_w1, (HIDDEN, INTERMEDIATE), jnp.float32,
                            -bound1, bound1)
    b1 = jax.random.uniform(k_b1, (INTERMEDIATE,), jnp.float32,
                            -bound1, bound1)
    bound2 = 1.0 / math.sqrt(INTERMEDIATE)
    w2 = jax.random.uniform(k_w2, (INTERMEDIATE, HIDDEN), jnp.float32,
                            -bound2, bound2)
    b2 = jax.random.uniform(k_b2, (HIDDEN,), jnp.float32,
                            -bound2, bound2)

    out = jax.block_until_ready(gpt_neox_mlp(x, w1, b1, w2, b2))

    ref = _reference(x, w1, b1, w2, b2)
    assert out.shape == (batch, seq, HIDDEN)
    # bf16 matmul operands vs. an f32 reference -> loosened tolerance.
    assert jnp.allclose(out, ref, atol=5e-2, rtol=5e-2), "mismatch vs reference"

    print("KERNEL_OK")
</pallas_src>

<mosaic_0001>
module attributes {stable_mosaic.version = 11 : i64} {
  func.func @_mlp_kernel(%arg0: i32, %arg1: memref<16x512xbf16, #tpu.memory_space<vmem>>, %arg2: memref<512x2048xbf16, #tpu.memory_space<vmem>>, %arg3: memref<1x2048xf32, #tpu.memory_space<vmem>>, %arg4: memref<2048x512xbf16, #tpu.memory_space<vmem>>, %arg5: memref<1x512xf32, #tpu.memory_space<vmem>>, %arg6: memref<16x512xf32, #tpu.memory_space<vmem>>) attributes {dimension_semantics = [#tpu.dimension_semantics<parallel>], iteration_bounds = array<i64: 1>, scalar_prefetch = 0 : i64, scratch_operands = 0 : i64, tpu.core_type = #tpu.core_type<tc>, window_params = [{transform_indices = @transform_0, window_bounds = array<i64: 16, 512>}, {pipeline_mode = #tpu.pipeline_mode<synchronous>, transform_indices = @transform_1, window_bounds = array<i64: 512, 2048>}, {pipeline_mode = #tpu.pipeline_mode<synchronous>, transform_indices = @transform_2, window_bounds = array<i64: 1, 2048>}, {pipeline_mode = #tpu.pipeline_mode<synchronous>, transform_indices = @transform_3, window_bounds = array<i64: 2048, 512>}, {pipeline_mode = #tpu.pipeline_mode<synchronous>, transform_indices = @transform_4, window_bounds = array<i64: 1, 512>}, {transform_indices = @transform_5, window_bounds = array<i64: 16, 512>}]} {
    %c0 = arith.constant 0 : index
    %c0_0 = arith.constant 0 : index
    %0 = vector.load %arg1[%c0, %c0_0] : memref<16x512xbf16, #tpu.memory_space<vmem>>, vector<16x512xbf16>
    %c0_1 = arith.constant 0 : index
    %c0_2 = arith.constant 0 : index
    %1 = vector.load %arg2[%c0_1, %c0_2] : memref<512x2048xbf16, #tpu.memory_space<vmem>>, vector<512x2048xbf16>
    %cst = arith.constant dense<0.000000e+00> : vector<16x2048xf32>
    %2 = tpu.matmul %0, %1, %cst {dimension_numbers = #tpu.dot_dimension_numbers<[1], [0], [0], [1], [0, 0, 1, 1], [], []>} : vector<16x512xbf16>, vector<512x2048xbf16>, vector<16x2048xf32> -> vector<16x2048xf32>
    %c0_3 = arith.constant 0 : index
    %c0_4 = arith.constant 0 : index
    %3 = vector.load %arg3[%c0_3, %c0_4] : memref<1x2048xf32, #tpu.memory_space<vmem>>, vector<1x2048xf32>
    %4 = vector.broadcast %3 : vector<1x2048xf32> to vector<16x2048xf32>
    %5 = arith.addf %2, %4 : vector<16x2048xf32>
    %cst_5 = arith.constant 5.000000e-01 : f32
    %6 = vector.broadcast %cst_5 : f32 to vector<16x2048xf32>
    %7 = arith.mulf %6, %5 : vector<16x2048xf32>
    %cst_6 = arith.constant 0.707106769 : f32
    %8 = vector.broadcast %cst_6 : f32 to vector<16x2048xf32>
    %9 = arith.mulf %5, %8 : vector<16x2048xf32>
    %10 = math.erf %9 : vector<16x2048xf32>
    %cst_7 = arith.constant 1.000000e+00 : f32
    %11 = vector.broadcast %cst_7 : f32 to vector<16x2048xf32>
    %12 = arith.addf %11, %10 : vector<16x2048xf32>
    %13 = arith.mulf %7, %12 : vector<16x2048xf32>
    %14 = arith.truncf %13 : vector<16x2048xf32> to vector<16x2048xbf16>
    %c0_8 = arith.constant 0 : index
    %c0_9 = arith.constant 0 : index
    %15 = vector.load %arg4[%c0_8, %c0_9] : memref<2048x512xbf16, #tpu.memory_space<vmem>>, vector<2048x512xbf16>
    %cst_10 = arith.constant dense<0.000000e+00> : vector<16x512xf32>
    %16 = tpu.matmul %14, %15, %cst_10 {dimension_numbers = #tpu.dot_dimension_numbers<[1], [0], [0], [1], [0, 0, 1, 1], [], []>} : vector<16x2048xbf16>, vector<2048x512xbf16>, vector<16x512xf32> -> vector<16x512xf32>
    %c0_11 = arith.constant 0 : index
    %c0_12 = arith.constant 0 : index
    %17 = vector.load %arg5[%c0_11, %c0_12] : memref<1x512xf32, #tpu.memory_space<vmem>>, vector<1x512xf32>
    %18 = vector.broadcast %17 : vector<1x512xf32> to vector<16x512xf32>
    %19 = arith.addf %16, %18 : vector<16x512xf32>
    %c0_13 = arith.constant 0 : index
    %c0_14 = arith.constant 0 : index
    %20 = vector.load %arg6[%c0_13, %c0_14] : memref<16x512xf32, #tpu.memory_space<vmem>>, vector<16x512xf32>
    tpu.vector_store %arg6[%c0_13, %c0_14], %19 {strides = array<i32>} : memref<16x512xf32, #tpu.memory_space<vmem>>, vector<16x512xf32>,
    return
  }
  func.func @transform_0(%arg0: i32) -> (i32, i32) {
    %c0_i32 = arith.constant 0 : i32
    %c0_i32_0 = arith.constant 0 : i32
    return %arg0, %c0_i32 : i32, i32
  }
  func.func @transform_1(%arg0: i32) -> (i32, i32) {
    %c0_i32 = arith.constant 0 : i32
    %c0_i32_0 = arith.constant 0 : i32
    %c0_i32_1 = arith.constant 0 : i32
    return %c0_i32, %c0_i32_0 : i32, i32
  }
  func.func @transform_2(%arg0: i32) -> (i32, i32) {
    %c0_i32 = arith.constant 0 : i32
    %c0_i32_0 = arith.constant 0 : i32
    %c0_i32_1 = arith.constant 0 : i32
    return %c0_i32, %c0_i32_0 : i32, i32
  }
  func.func @transform_3(%arg0: i32) -> (i32, i32) {
    %c0_i32 = arith.constant 0 : i32
    %c0_i32_0 = arith.constant 0 : i32
    %c0_i32_1 = arith.constant 0 : i32
    return %c0_i32, %c0_i32_0 : i32, i32
  }
  func.func @transform_4(%arg0: i32) -> (i32, i32) {
    %c0_i32 = arith.constant 0 : i32
    %c0_i32_0 = arith.constant 0 : i32
    %c0_i32_1 = arith.constant 0 : i32
    return %c0_i32, %c0_i32_0 : i32, i32
  }
  func.func @transform_5(%arg0: i32) -> (i32, i32) {
    %c0_i32 = arith.constant 0 : i32
    %c0_i32_0 = arith.constant 0 : i32
    return %arg0, %c0_i32 : i32, i32
  }
}

</mosaic_0001>

<llo_original>
// kernel: gpt_neox_mlp.1
$region0: #{gpt_neox_mlp.1}
  #allocation0 [shape = 'u32[]', space=smem, size = 0x4, offset = 0x4, fixed_abs, tag = 'smem constant byte address 0x4 - core index']
  #allocation1 [shape = 'u32[144,128]{1,0:T(1,128)}', space=vmem, size = 0x12000, scoped, tag = 'internal scratch']
  %s0 = inlined_call_operand.vmem [shape: bf16[16,512], index: 0, kind: input, shape index: {}]
  %s1 = inlined_call_operand.vmem [shape: bf16[512,2048], index: 1, kind: input, shape index: {}]
  %s2 = inlined_call_operand.vmem [shape: f32[1,2048], index: 2, kind: input, shape index: {}]
  %s3 = inlined_call_operand.vmem [shape: bf16[2048,512], index: 3, kind: input, shape index: {}]
  %s4 = inlined_call_operand.vmem [shape: f32[1,512], index: 4, kind: input, shape index: {}]
  %s5 = inlined_call_operand.hbm [shape: f32[16,512], index: 5, kind: output, shape index: {}]
  %s6 = sld [smem:[#allocation0]]
  $region30: #{gpt_neox_mlp.1} parent=0
    _
  %s8 = ssub.s32 1, %s6
  %s9 = scalar_select 0, %s8, %s6
  $region1: #{gpt_neox_mlp.1} parent=0
    #allocation2 [shape = 'u8[32768]{0}', space=vmem, size = 0x8000, scoped, tag = 'output window, operand 0, single buffered']
    #allocation3 [shape = 's32[1]{0}', space=sflag, size = 0x4, scoped, tag = 'scoped memory for gpt_neox_mlp.1']
    %10 = vsyncpa [#allocation3], 0
    // Predicated region
    $region2: #{gpt_neox_mlp.1} parent=1 // pred_check
      _
    $region3: #{gpt_neox_mlp.1} parent=1 // pred_check_branch
      %12 = sbr.rel (0) target = $region5
    $region4: #{gpt_neox_mlp.1} parent=1 // pred_region
      _
    $region5: #{gpt_neox_mlp.1} parent=1 // pred_fallthru
      _
    // Predicated region
    $region6: #{gpt_neox_mlp.1} parent=1 // pred_check
      _
    $region7: #{gpt_neox_mlp.1} parent=1 // pred_check_branch
      %14 = sbr.rel (0) target = $region9
    $region8: #{gpt_neox_mlp.1} parent=1 // pred_region
      _
    $region9: #{gpt_neox_mlp.1} parent=1 // pred_fallthru
      _
    // Predicated region
    $region10: #{gpt_neox_mlp.1} parent=1 // pred_check
      _
    $region11: #{gpt_neox_mlp.1} parent=1 // pred_check_branch
      %16 = sbr.rel (0) target = $region13
    $region12: #{gpt_neox_mlp.1} parent=1 // pred_region
      _
    $region13: #{gpt_neox_mlp.1} parent=1 // pred_fallthru
      _
    // Predicated region
    $region14: #{gpt_neox_mlp.1} parent=1 // pred_check
      _
    $region15: #{gpt_neox_mlp.1} parent=1 // pred_check_branch
      %18 = sbr.rel (0) target = $region17
    $region16: #{gpt_neox_mlp.1} parent=1 // pred_region
      _
    $region17: #{gpt_neox_mlp.1} parent=1 // pred_fallthru
      _
    // Predicated region
    $region18: #{gpt_neox_mlp.1} parent=1 // pred_check
      _
    $region19: #{gpt_neox_mlp.1} parent=1 // pred_check_branch
      %20 = sbr.rel (0) target = $region21
    $region20: #{gpt_neox_mlp.1} parent=1 // pred_region
      _
    $region21: #{gpt_neox_mlp.1} parent=1 // pred_fallthru
      _
    %v21 = vld [vmem:[%s0] sm:$0xff]
    %v22 = vld [vmem:[%s0 + $0x8] sm:$0xff]
    %v23 = vld [vmem:[%s0 + $0x10] sm:$0xff]
    %v24 = vld [vmem:[%s0 + $0x18] sm:$0xff]
    %v25 = vld [vmem:[%s1] sm:$0xff]
    %v26 = vld [vmem:[%s1 + $0x8] sm:$0xff]
    %v27 = vld [vmem:[%s1 + $0x10] sm:$0xff]
    %v28 = vld [vmem:[%s1 + $0x18] sm:$0xff]
    %v29 = vld [vmem:[%s1 + $0x20] sm:$0xff]
    %v30 = vld [vmem:[%s1 + $0x28] sm:$0xff]
    %v31 = vld [vmem:[%s1 + $0x30] sm:$0xff]
    %v32 = vld [vmem:[%s1 + $0x38] sm:$0xff]
    %v33 = vld [vmem:[%s1 + $0x40] sm:$0xff]
    %v34 = vld [vmem:[%s1 + $0x48] sm:$0xff]
    %v35 = vld [vmem:[%s1 + $0x50] sm:$0xff]
    %v36 = vld [vmem:[%s1 + $0x58] sm:$0xff]
    %v37 = vld [vmem:[%s1 + $0x60] sm:$0xff]
    %v38 = vld [vmem:[%s1 + $0x68] sm:$0xff]
    %v39 = vld [vmem:[%s1 + $0x70] sm:$0xff]
    %v40 = vld [vmem:[%s1 + $0x78] sm:$0xff]
    %v41 = vld [vmem:[%s1 + $0x80] sm:$0xff]
    %v42 = vld [vmem:[%s1 + $0x88] sm:$0xff]
    %v43 = vld [vmem:[%s1 + $0x90] sm:$0xff]
    %v44 = vld [vmem:[%s1 + $0x98] sm:$0xff]
    %v45 = vld [vmem:[%s1 + $0xa0] sm:$0xff]
    %v46 = vld [vmem:[%s1 + $0xa8] sm:$0xff]
    %v47 = vld [vmem:[%s1 + $0xb0] sm:$0xff]
    %v48 = vld [vmem:[%s1 + $0xb8] sm:$0xff]
    %v49 = vld [vmem:[%s1 + $0xc0] sm:$0xff]
    %v50 = vld [vmem:[%s1 + $0xc8] sm:$0xff]
    %v51 = vld [vmem:[%s1 + $0xd0] sm:$0xff]
    %v52 = vld [vmem:[%s1 + $0xd8] sm:$0xff]
    %v53 = vld [vmem:[%s1 + $0xe0] sm:$0xff]
    %v54 = vld [vmem:[%s1 + $0xe8] sm:$0xff]
    %v55 = vld [vmem:[%s1 + $0xf0] sm:$0xff]
    %v56 = vld [vmem:[%s1 + $0xf8] sm:$0xff]
    %v57 = vld [vmem:[%s1 + $0x100] sm:$0xff]
    %v58 = vld [vmem:[%s1 + $0x108] sm:$0xff]
    %v59 = vld [vmem:[%s1 + $0x110] sm:$0xff]
    %v60 = vld [vmem:[%s1 + $0x118] sm:$0xff]
    %v61 = vld [vmem:[%s1 + $0x120] sm:$0xff]
    %v62 = vld [vmem:[%s1 + $0x128] sm:$0xff]
    %v63 = vld [vmem:[%s1 + $0x130] sm:$0xff]
    %v64 = vld [vmem:[%s1 + $0x138] sm:$0xff]
    %v65 = vld [vmem:[%s1 + $0x140] sm:$0xff]
    %v66 = vld [vmem:[%s1 + $0x148] sm:$0xff]
    %v67 = vld [vmem:[%s1 + $0x150] sm:$0xff]
    %v68 = vld [vmem:[%s1 + $0x158] sm:$0xff]
    %v69 = vld [vmem:[%s1 + $0x160] sm:$0xff]
    %v70 = vld [vmem:[%s1 + $0x168] sm:$0xff]
    %v71 = vld [vmem:[%s1 + $0x170] sm:$0xff]
    %v72 = vld [vmem:[%s1 + $0x178] sm:$0xff]
    %v73 = vld [vmem:[%s1 + $0x180] sm:$0xff]
    %v74 = vld [vmem:[%s1 + $0x188] sm:$0xff]
    %v75 = vld [vmem:[%s1 + $0x190] sm:$0xff]
    %v76 = vld [vmem:[%s1 + $0x198] sm:$0xff]
    %v77 = vld [vmem:[%s1 + $0x1a0] sm:$0xff]
    %v78 = vld [vmem:[%s1 + $0x1a8] sm:$0xff]
    %v79 = vld [vmem:[%s1 + $0x1b0] sm:$0xff]
    %v80 = vld [vmem:[%s1 + $0x1b8] sm:$0xff]
    %v81 = vld [vmem:[%s1 + $0x1c0] sm:$0xff]
    %v82 = vld [vmem:[%s1 + $0x1c8] sm:$0xff]
    %v83 = vld [vmem:[%s1 + $0x1d0] sm:$0xff]
    %v84 = vld [vmem:[%s1 + $0x1d8] sm:$0xff]
    %v85 = vld [vmem:[%s1 + $0x1e0] sm:$0xff]
    %v86 = vld [vmem:[%s1 + $0x1e8] sm:$0xff]
    %v87 = vld [vmem:[%s1 + $0x1f0] sm:$0xff]
    %v88 = vld [vmem:[%s1 + $0x1f8] sm:$0xff]
    %v89 = vld [vmem:[%s1 + $0x200] sm:$0xff]
    %v90 = vld [vmem:[%s1 + $0x208] sm:$0xff]
    %v91 = vld [vmem:[%s1 + $0x210] sm:$0xff]
    %v92 = vld [vmem:[%s1 + $0x218] sm:$0xff]
    %v93 = vld [vmem:[%s1 + $0x220] sm:$0xff]
    %v94 = vld [vmem:[%s1 + $0x228] sm:$0xff]
    %v95 = vld [vmem:[%s1 + $0x230] sm:$0xff]
    %v96 = vld [vmem:[%s1 + $0x238] sm:$0xff]
    %v97 = vld [vmem:[%s1 + $0x240] sm:$0xff]
    %v98 = vld [vmem:[%s1 + $0x248] sm:$0xff]
    %v99 = vld [vmem:[%s1 + $0x250] sm:$0xff]
    %v100 = vld [vmem:[%s1 + $0x258] sm:$0xff]
    %v101 = vld [vmem:[%s1 + $0x260] sm:$0xff]
    %v102 = vld [vmem:[%s1 + $0x268] sm:$0xff]
    %v103 = vld [vmem:[%s1 + $0x270] sm:$0xff]
    %v104 = vld [vmem:[%s1 + $0x278] sm:$0xff]
    %v105 = vld [vmem:[%s1 + $0x280] sm:$0xff]
    %v106 = vld [vmem:[%s1 + $0x288] sm:$0xff]
    %v107 = vld [vmem:[%s1 + $0x290] sm:$0xff]
    %v108 = vld [vmem:[%s1 + $0x298] sm:$0xff]
    %v109 = vld [vmem:[%s1 + $0x2a0] sm:$0xff]
    %v110 = vld [vmem:[%s1 + $0x2a8] sm:$0xff]
    %v111 = vld [vmem:[%s1 + $0x2b0] sm:$0xff]
    %v112 = vld [vmem:[%s1 + $0x2b8] sm:$0xff]
    %v113 = vld [vmem:[%s1 + $0x2c0] sm:$0xff]
    %v114 = vld [vmem:[%s1 + $0x2c8] sm:$0xff]
    %v115 = vld [vmem:[%s1 + $0x2d0] sm:$0xff]
    %v116 = vld [vmem:[%s1 + $0x2d8] sm:$0xff]
    %v117 = vld [vmem:[%s1 + $0x2e0] sm:$0xff]
    %v118 = vld [vmem:[%s1 + $0x2e8] sm:$0xff]
    %v119 = vld [vmem:[%s1 + $0x2f0] sm:$0xff]
    %v120 = vld [vmem:[%s1 + $0x2f8] sm:$0xff]
    %v121 = vld [vmem:[%s1 + $0x300] sm:$0xff]
    %v122 = vld [vmem:[%s1 + $0x308] sm:$0xff]
    %v123 = vld [vmem:[%s1 + $0x310] sm:$0xff]
    %v124 = vld [vmem:[%s1 + $0x318] sm:$0xff]
    %v125 = vld [vmem:[%s1 + $0x320] sm:$0xff]
    %v126 = vld [vmem:[%s1 + $0x328] sm:$0xff]
    %v127 = vld [vmem:[%s1 + $0x330] sm:$0xff]
    %v128 = vld [vmem:[%s1 + $0x338] sm:$0xff]
    %v129 = vld [vmem:[%s1 + $0x340] sm:$0xff]
    %v130 = vld [vmem:[%s1 + $0x348] sm:$0xff]
    %v131 = vld [vmem:[%s1 + $0x350] sm:$0xff]
    %v132 = vld [vmem:[%s1 + $0x358] sm:$0xff]
    %v133 = vld [vmem:[%s1 + $0x360] sm:$0xff]
    %v134 = vld [vmem:[%s1 + $0x368] sm:$0xff]
    %v135 = vld [vmem:[%s1 + $0x370] sm:$0xff]
    %v136 = vld [vmem:[%s1 + $0x378] sm:$0xff]
    %v137 = vld [vmem:[%s1 + $0x380] sm:$0xff]
    %v138 = vld [vmem:[%s1 + $0x388] sm:$0xff]
    %v139 = vld [vmem:[%s1 + $0x390] sm:$0xff]
    %v140 = vld [vmem:[%s1 + $0x398] sm:$0xff]
    %v141 = vld [vmem:[%s1 + $0x3a0] sm:$0xff]
    %v142 = vld [vmem:[%s1 + $0x3a8] sm:$0xff]
    %v143 = vld [vmem:[%s1 + $0x3b0] sm:$0xff]
    %v144 = vld [vmem:[%s1 + $0x3b8] sm:$0xff]
    %v145 = vld [vmem:[%s1 + $0x3c0] sm:$0xff]
    %v146 = vld [vmem:[%s1 + $0x3c8] sm:$0xff]
    %v147 = vld [vmem:[%s1 + $0x3d0] sm:$0xff]
    %v148 = vld [vmem:[%s1 + $0x3d8] sm:$0xff]
    %v149 = vld [vmem:[%s1 + $0x3e0] sm:$0xff]
    %v150 = vld [vmem:[%s1 + $0x3e8] sm:$0xff]
    %v151 = vld [vmem:[%s1 + $0x3f0] sm:$0xff]
    %v152 = vld [vmem:[%s1 + $0x3f8] sm:$0xff]
    %v153 = vld [vmem:[%s1 + $0x400] sm:$0xff]
    %v154 = vld [vmem:[%s1 + $0x408] sm:$0xff]
    %v155 = vld [vmem:[%s1 + $0x410] sm:$0xff]
    %v156 = vld [vmem:[%s1 + $0x418] sm:$0xff]
    %v157 = vld [vmem:[%s1 + $0x420] sm:$0xff]
    %v158 = vld [vmem:[%s1 + $0x428] sm:$0xff]
    %v159 = vld [vmem:[%s1 + $0x430] sm:$0xff]
    %v160 = vld [vmem:[%s1 + $0x438] sm:$0xff]
    %v161 = vld [vmem:[%s1 + $0x440] sm:$0xff]
    %v162 = vld [vmem:[%s1 + $0x448] sm:$0xff]
    %v163 = vld [vmem:[%s1 + $0x450] sm:$0xff]
    %v164 = vld [vmem:[%s1 + $0x458] sm:$0xff]
    %v165 = vld [vmem:[%s1 + $0x460] sm:$0xff]
    %v166 = vld [vmem:[%s1 + $0x468] sm:$0xff]
    %v167 = vld [vmem:[%s1 + $0x470] sm:$0xff]
    %v168 = vld [vmem:[%s1 + $0x478] sm:$0xff]
    %v169 = vld [vmem:[%s1 + $0x480] sm:$0xff]
    %v170 = vld [vmem:[%s1 + $0x488] sm:$0xff]
    %v171 = vld [vmem:[%s1 + $0x490] sm:$0xff]
    %v172 = vld [vmem:[%s1 + $0x498] sm:$0xff]
    %v173 = vld [vmem:[%s1 + $0x4a0] sm:$0xff]
    %v174 = vld [vmem:[%s1 + $0x4a8] sm:$0xff]
    %v175 = vld [vmem:[%s1 + $0x4b0] sm:$0xff]
    %v176 = vld [vmem:[%s1 + $0x4b8] sm:$0xff]
    %v177 = vld [vmem:[%s1 + $0x4c0] sm:$0xff]
    %v178 = vld [vmem:[%s1 + $0x4c8] sm:$0xff]
    %v179 = vld [vmem:[%s1 + $0x4d0] sm:$0xff]
    %v180 = vld [vmem:[%s1 + $0x4d8] sm:$0xff]
    %v181 = vld [vmem:[%s1 + $0x4e0] sm:$0xff]
    %v182 = vld [vmem:[%s1 + $0x4e8] sm:$0xff]
    %v183 = vld [vmem:[%s1 + $0x4f0] sm:$0xff]
    %v184 = vld [vmem:[%s1 + $0x4f8] sm:$0xff]
    %v185 = vld [vmem:[%s1 + $0x500] sm:$0xff]
    %v186 = vld [vmem:[%s1 + $0x508] sm:$0xff]
    %v187 = vld [vmem:[%s1 + $0x510] sm:$0xff]
    %v188 = vld [vmem:[%s1 + $0x518] sm:$0xff]
    %v189 = vld [vmem:[%s1 + $0x520] sm:$0xff]
    %v190 = vld [vmem:[%s1 + $0x528] sm:$0xff]
    %v191 = vld [vmem:[%s1 + $0x530] sm:$0xff]
    %v192 = vld [vmem:[%s1 + $0x538] sm:$0xff]
    %v193 = vld [vmem:[%s1 + $0x540] sm:$0xff]
    %v194 = vld [vmem:[%s1 + $0x548] sm:$0xff]
    %v195 = vld [vmem:[%s1 + $0x550] sm:$0xff]
    %v196 = vld [vmem:[%s1 + $0x558] sm:$0xff]
    %v197 = vld [vmem:[%s1 + $0x560] sm:$0xff]
    %v198 = vld [vmem:[%s1 + $0x568] sm:$0xff]
    %v199 = vld [vmem:[%s1 + $0x570] sm:$0xff]
    %v200 = vld [vmem:[%s1 + $0x578] sm:$0xff]
    %v201 = vld [vmem:[%s1 + $0x580] sm:$0xff]
    %v202 = vld [vmem:[%s1 + $0x588] sm:$0xff]
    %v203 = vld [vmem:[%s1 + $0x590] sm:$0xff]
    %v204 = vld [vmem:[%s1 + $0x598] sm:$0xff]
    %v205 = vld [vmem:[%s1 + $0x5a0] sm:$0xff]
    %v206 = vld [vmem:[%s1 + $0x5a8] sm:$0xff]
    %v207 = vld [vmem:[%s1 + $0x5b0] sm:$0xff]
    %v208 = vld [vmem:[%s1 + $0x5b8] sm:$0xff]
    %v209 = vld [vmem:[%s1 + $0x5c0] sm:$0xff]
    %v210 = vld [vmem:[%s1 + $0x5c8] sm:$0xff]
    %v211 = vld [vmem:[%s1 + $0x5d0] sm:$0xff]
    %v212 = vld [vmem:[%s1 + $0x5d8] sm:$0xff]
    %v213 = vld [vmem:[%s1 + $0x5e0] sm:$0xff]
    %v214 = vld [vmem:[%s1 + $0x5e8] sm:$0xff]
    %v215 = vld [vmem:[%s1 + $0x5f0] sm:$0xff]
    %v216 = vld [vmem:[%s1 + $0x5f8] sm:$0xff]
    %v217 = vld [vmem:[%s1 + $0x600] sm:$0xff]
    %v218 = vld [vmem:[%s1 + $0x608] sm:$0xff]
    %v219 = vld [vmem:[%s1 + $0x610] sm:$0xff]
    %v220 = vld [vmem:[%s1 + $0x618] sm:$0xff]
    %v221 = vld [vmem:[%s1 + $0x620] sm:$0xff]
    %v222 = vld [vmem:[%s1 + $0x628] sm:$0xff]
    %v223 = vld [vmem:[%s1 + $0x630] sm:$0xff]
    %v224 = vld [vmem:[%s1 + $0x638] sm:$0xff]
    %v225 = vld [vmem:[%s1 + $0x640] sm:$0xff]
    %v226 = vld [vmem:[%s1 + $0x648] sm:$0xff]
    %v227 = vld [vmem:[%s1 + $0x650] sm:$0xff]
    %v228 = vld [vmem:[%s1 + $0x658] sm:$0xff]
    %v229 = vld [vmem:[%s1 + $0x660] sm:$0xff]
    %v230 = vld [vmem:[%s1 + $0x668] sm:$0xff]
    %v231 = vld [vmem:[%s1 + $0x670] sm:$0xff]
    %v232 = vld [vmem:[%s1 + $0x678] sm:$0xff]
    %v233 = vld [vmem:[%s1 + $0x680] sm:$0xff]
    %v234 = vld [vmem:[%s1 + $0x688] sm:$0xff]
    %v235 = vld [vmem:[%s1 + $0x690] sm:$0xff]
    %v236 = vld [vmem:[%s1 + $0x698] sm:$0xff]
    %v237 = vld [vmem:[%s1 + $0x6a0] sm:$0xff]
    %v238 = vld [vmem:[%s1 + $0x6a8] sm:$0xff]
    %v239 = vld [vmem:[%s1 + $0x6b0] sm:$0xff]
    %v240 = vld [vmem:[%s1 + $0x6b8] sm:$0xff]
    %v241 = vld [vmem:[%s1 + $0x6c0] sm:$0xff]
    %v242 = vld [vmem:[%s1 + $0x6c8] sm:$0xff]
    %v243 = vld [vmem:[%s1 + $0x6d0] sm:$0xff]
    %v244 = vld [vmem:[%s1 + $0x6d8] sm:$0xff]
    %v245 = vld [vmem:[%s1 + $0x6e0] sm:$0xff]
    %v246 = vld [vmem:[%s1 + $0x6e8] sm:$0xff]
    %v247 = vld [vmem:[%s1 + $0x6f0] sm:$0xff]
    %v248 = vld [vmem:[%s1 + $0x6f8] sm:$0xff]
    %v249 = vld [vmem:[%s1 + $0x700] sm:$0xff]
    %v250 = vld [vmem:[%s1 + $0x708] sm:$0xff]
    %v251 = vld [vmem:[%s1 + $0x710] sm:$0xff]
    %v252 = vld [vmem:[%s1 + $0x718] sm:$0xff]
    %v253 = vld [vmem:[%s1 + $0x720] sm:$0xff]
    %v254 = vld [vmem:[%s1 + $0x728] sm:$0xff]
    %v255 = vld [vmem:[%s1 + $0x730] sm:$0xff]
    %v256 = vld [vmem:[%s1 + $0x738] sm:$0xff]
    %v257 = vld [vmem:[%s1 + $0x740] sm:$0xff]
    %v258 = vld [vmem:[%s1 + $0x748] sm:$0xff]
    %v259 = vld [vmem:[%s1 + $0x750] sm:$0xff]
    %v260 = vld [vmem:[%s1 + $0x758] sm:$0xff]
    %v261 = vld [vmem:[%s1 + $0x760] sm:$0xff]
    %v262 = vld [vmem:[%s1 + $0x768] sm:$0xff]
    %v263 = vld [vmem:[%s1 + $0x770] sm:$0xff]
    %v264 = vld [vmem:[%s1 + $0x778] sm:$0xff]
    %v265 = vld [vmem:[%s1 + $0x780] sm:$0xff]
    %v266 = vld [vmem:[%s1 + $0x788] sm:$0xff]
    %v267 = vld [vmem:[%s1 + $0x790] sm:$0xff]
    %v268 = vld [vmem:[%s1 + $0x798] sm:$0xff]
    %v269 = vld [vmem:[%s1 + $0x7a0] sm:$0xff]
    %v270 = vld [vmem:[%s1 + $0x7a8] sm:$0xff]
    %v271 = vld [vmem:[%s1 + $0x7b0] sm:$0xff]
    %v272 = vld [vmem:[%s1 + $0x7b8] sm:$0xff]
    %v273 = vld [vmem:[%s1 + $0x7c0] sm:$0xff]
    %v274 = vld [vmem:[%s1 + $0x7c8] sm:$0xff]
    %v275 = vld [vmem:[%s1 + $0x7d0] sm:$0xff]
    %v276 = vld [vmem:[%s1 + $0x7d8] sm:$0xff]
    %v277 = vld [vmem:[%s1 + $0x7e0] sm:$0xff]
    %v278 = vld [vmem:[%s1 + $0x7e8] sm:$0xff]
    %v279 = vld [vmem:[%s1 + $0x7f0] sm:$0xff]
    %v280 = vld [vmem:[%s1 + $0x7f8] sm:$0xff]
    %v281 = vld [vmem:[%s1 + $0x800] sm:$0xff]
    %v282 = vld [vmem:[%s1 + $0x808] sm:$0xff]
    %v283 = vld [vmem:[%s1 + $0x810] sm:$0xff]
    %v284 = vld [vmem:[%s1 + $0x818] sm:$0xff]
    %v285 = vld [vmem:[%s1 + $0x820] sm:$0xff]
    %v286 = vld [vmem:[%s1 + $0x828] sm:$0xff]
    %v287 = vld [vmem:[%s1 + $0x830] sm:$0xff]
    %v288 = vld [vmem:[%s1 + $0x838] sm:$0xff]
    %v289 = vld [vmem:[%s1 + $0x840] sm:$0xff]
    %v290 = vld [vmem:[%s1 + $0x848] sm:$0xff]
    %v291 = vld [vmem:[%s1 + $0x850] sm:$0xff]
    %v292 = vld [vmem:[%s1 + $0x858] sm:$0xff]
    %v293 = vld [vmem:[%s1 + $0x860] sm:$0xff]
    %v294 = vld [vmem:[%s1 + $0x868] sm:$0xff]
    %v295 = vld [vmem:[%s1 + $0x870] sm:$0xff]
    %v296 = vld [vmem:[%s1 + $0x878] sm:$0xff]
    %v297 = vld [vmem:[%s1 + $0x880] sm:$0xff]
    %v298 = vld [vmem:[%s1 + $0x888] sm:$0xff]
    %v299 = vld [vmem:[%s1 + $0x890] sm:$0xff]
    %v300 = vld [vmem:[%s1 + $0x898] sm:$0xff]
    %v301 = vld [vmem:[%s1 + $0x8a0] sm:$0xff]
    %v302 = vld [vmem:[%s1 + $0x8a8] sm:$0xff]
    %v303 = vld [vmem:[%s1 + $0x8b0] sm:$0xff]
    %v304 = vld [vmem:[%s1 + $0x8b8] sm:$0xff]
    %v305 = vld [vmem:[%s1 + $0x8c0] sm:$0xff]
    %v306 = vld [vmem:[%s1 + $0x8c8] sm:$0xff]
    %v307 = vld [vmem:[%s1 + $0x8d0] sm:$0xff]
    %v308 = vld [vmem:[%s1 + $0x8d8] sm:$0xff]
    %v309 = vld [vmem:[%s1 + $0x8e0] sm:$0xff]
    %v310 = vld [vmem:[%s1 + $0x8e8] sm:$0xff]
    %v311 = vld [vmem:[%s1 + $0x8f0] sm:$0xff]
    %v312 = vld [vmem:[%s1 + $0x8f8] sm:$0xff]
    %v313 = vld [vmem:[%s1 + $0x900] sm:$0xff]
    %v314 = vld [vmem:[%s1 + $0x908] sm:$0xff]
    %v315 = vld [vmem:[%s1 + $0x910] sm:$0xff]
    %v316 = vld [vmem:[%s1 + $0x918] sm:$0xff]
    %v317 = vld [vmem:[%s1 + $0x920] sm:$0xff]
    %v318 = vld [vmem:[%s1 + $0x928] sm:$0xff]
    %v319 = vld [vmem:[%s1 + $0x930] sm:$0xff]
    %v320 = vld [vmem:[%s1 + $0x938] sm:$0xff]
    %v321 = vld [vmem:[%s1 + $0x940] sm:$0xff]
    %v322 = vld [vmem:[%s1 + $0x948] sm:$0xff]
    %v323 = vld [vmem:[%s1 + $0x950] sm:$0xff]
    %v324 = vld [vmem:[%s1 + $0x958] sm:$0xff]
    %v325 = vld [vmem:[%s1 + $0x960] sm:$0xff]
    %v326 = vld [vmem:[%s1 + $0x968] sm:$0xff]
    %v327 = vld [vmem:[%s1 + $0x970] sm:$0xff]
    %v328 = vld [vmem:[%s1 + $0x978] sm:$0xff]
    %v329 = vld [vmem:[%s1 + $0x980] sm:$0xff]
    %v330 = vld [vmem:[%s1 + $0x988] sm:$0xff]
    %v331 = vld [vmem:[%s1 + $0x990] sm:$0xff]
    %v332 = vld [vmem:[%s1 + $0x998] sm:$0xff]
    %v333 = vld [vmem:[%s1 + $0x9a0] sm:$0xff]
    %v334 = vld [vmem:[%s1 + $0x9a8] sm:$0xff]
    %v335 = vld [vmem:[%s1 + $0x9b0] sm:$0xff]
    %v336 = vld [vmem:[%s1 + $0x9b8] sm:$0xff]
    %v337 = vld [vmem:[%s1 + $0x9c0] sm:$0xff]
    %v338 = vld [vmem:[%s1 + $0x9c8] sm:$0xff]
    %v339 = vld [vmem:[%s1 + $0x9d0] sm:$0xff]
    %v340 = vld [vmem:[%s1 + $0x9d8] sm:$0xff]
    %v341 = vld [vmem:[%s1 + $0x9e0] sm:$0xff]
    %v342 = vld [vmem:[%s1 + $0x9e8] sm:$0xff]
    %v343 = vld [vmem:[%s1 + $0x9f0] sm:$0xff]
    %v344 = vld [vmem:[%s1 + $0x9f8] sm:$0xff]
    %v345 = vld [vmem:[%s1 + $0xa00] sm:$0xff]
    %v346 = vld [vmem:[%s1 + $0xa08] sm:$0xff]
    %v347 = vld [vmem:[%s1 + $0xa10] sm:$0xff]
    %v348 = vld [vmem:[%s1 + $0xa18] sm:$0xff]
    %v349 = vld [vmem:[%s1 + $0xa20] sm:$0xff]
    %v350 = vld [vmem:[%s1 + $0xa28] sm:$0xff]
    %v351 = vld [vmem:[%s1 + $0xa30] sm:$0xff]
    %v352 = vld [vmem:[%s1 + $0xa38] sm:$0xff]
    %v353 = vld [vmem:[%s1 + $0xa40] sm:$0xff]
    %v354 = vld [vmem:[%s1 + $0xa48] sm:$0xff]
    %v355 = vld [vmem:[%s1 + $0xa50] sm:$0xff]
    %v356 = vld [vmem:[%s1 + $0xa58] sm:$0xff]
    %v357 = vld [vmem:[%s1 + $0xa60] sm:$0xff]
    %v358 = vld [vmem:[%s1 + $0xa68] sm:$0xff]
    %v359 = vld [vmem:[%s1 + $0xa70] sm:$0xff]
    %v360 = vld [vmem:[%s1 + $0xa78] sm:$0xff]
    %v361 = vld [vmem:[%s1 + $0xa80] sm:$0xff]
    %v362 = vld [vmem:[%s1 + $0xa88] sm:$0xff]
    %v363 = vld [vmem:[%s1 + $0xa90] sm:$0xff]
    %v364 = vld [vmem:[%s1 + $0xa98] sm:$0xff]
    %v365 = vld [vmem:[%s1 + $0xaa0] sm:$0xff]
    %v366 = vld [vmem:[%s1 + $0xaa8] sm:$0xff]
    %v367 = vld [vmem:[%s1 + $0xab0] sm:$0xff]
    %v368 = vld [vmem:[%s1 + $0xab8] sm:$0xff]
    %v369 = vld [vmem:[%s1 + $0xac0] sm:$0xff]
    %v370 = vld [vmem:[%s1 + $0xac8] sm:$0xff]
    %v371 = vld [vmem:[%s1 + $0xad0] sm:$0xff]
    %v372 = vld [vmem:[%s1 + $0xad8] sm:$0xff]
    %v373 = vld [vmem:[%s1 + $0xae0] sm:$0xff]
    %v374 = vld [vmem:[%s1 + $0xae8] sm:$0xff]
    %v375 = vld [vmem:[%s1 + $0xaf0] sm:$0xff]
    %v376 = vld [vmem:[%s1 + $0xaf8] sm:$0xff]
    %v377 = vld [vmem:[%s1 + $0xb00] sm:$0xff]
    %v378 = vld [vmem:[%s1 + $0xb08] sm:$0xff]
    %v379 = vld [vmem:[%s1 + $0xb10] sm:$0xff]
    %v380 = vld [vmem:[%s1 + $0xb18] sm:$0xff]
    %v381 = vld [vmem:[%s1 + $0xb20] sm:$0xff]
    %v382 = vld [vmem:[%s1 + $0xb28] sm:$0xff]
    %v383 = vld [vmem:[%s1 + $0xb30] sm:$0xff]
    %v384 = vld [vmem:[%s1 + $0xb38] sm:$0xff]
    %v385 = vld [vmem:[%s1 + $0xb40] sm:$0xff]
    %v386 = vld [vmem:[%s1 + $0xb48] sm:$0xff]
    %v387 = vld [vmem:[%s1 + $0xb50] sm:$0xff]
    %v388 = vld [vmem:[%s1 + $0xb58] sm:$0xff]
    %v389 = vld [vmem:[%s1 + $0xb60] sm:$0xff]
    %v390 = vld [vmem:[%s1 + $0xb68] sm:$0xff]
    %v391 = vld [vmem:[%s1 + $0xb70] sm:$0xff]
    %v392 = vld [vmem:[%s1 + $0xb78] sm:$0xff]
    %v393 = vld [vmem:[%s1 + $0xb80] sm:$0xff]
    %v394 = vld [vmem:[%s1 + $0xb88] sm:$0xff]
    %v395 = vld [vmem:[%s1 + $0xb90] sm:$0xff]
    %v396 = vld [vmem:[%s1 + $0xb98] sm:$0xff]
    %v397 = vld [vmem:[%s1 + $0xba0] sm:$0xff]
    %v398 = vld [vmem:[%s1 + $0xba8] sm:$0xff]
    %v399 = vld [vmem:[%s1 + $0xbb0] sm:$0xff]
    %v400 = vld [vmem:[%s1 + $0xbb8] sm:$0xff]
    %v401 = vld [vmem:[%s1 + $0xbc0] sm:$0xff]
    %v402 = vld [vmem:[%s1 + $0xbc8] sm:$0xff]
    %v403 = vld [vmem:[%s1 + $0xbd0] sm:$0xff]
    %v404 = vld [vmem:[%s1 + $0xbd8] sm:$0xff]
    %v405 = vld [vmem:[%s1 + $0xbe0] sm:$0xff]
    %v406 = vld [vmem:[%s1 + $0xbe8] sm:$0xff]
    %v407 = vld [vmem:[%s1 + $0xbf0] sm:$0xff]
    %v408 = vld [vmem:[%s1 + $0xbf8] sm:$0xff]
    %v409 = vld [vmem:[%s1 + $0xc00] sm:$0xff]
    %v410 = vld [vmem:[%s1 + $0xc08] sm:$0xff]
    %v411 = vld [vmem:[%s1 + $0xc10] sm:$0xff]
    %v412 = vld [vmem:[%s1 + $0xc18] sm:$0xff]
    %v413 = vld [vmem:[%s1 + $0xc20] sm:$0xff]
    %v414 = vld [vmem:[%s1 + $0xc28] sm:$0xff]
    %v415 = vld [vmem:[%s1 + $0xc30] sm:$0xff]
    %v416 = vld [vmem:[%s1 + $0xc38] sm:$0xff]
    %v417 = vld [vmem:[%s1 + $0xc40] sm:$0xff]
    %v418 = vld [vmem:[%s1 + $0xc48] sm:$0xff]
    %v419 = vld [vmem:[%s1 + $0xc50] sm:$0xff]
    %v420 = vld [vmem:[%s1 + $0xc58] sm:$0xff]
    %v421 = vld [vmem:[%s1 + $0xc60] sm:$0xff]
    %v422 = vld [vmem:[%s1 + $0xc68] sm:$0xff]
    %v423 = vld [vmem:[%s1 + $0xc70] sm:$0xff]
    %v424 = vld [vmem:[%s1 + $0xc78] sm:$0xff]
    %v425 = vld [vmem:[%s1 + $0xc80] sm:$0xff]
    %v426 = vld [vmem:[%s1 + $0xc88] sm:$0xff]
    %v427 = vld [vmem:[%s1 + $0xc90] sm:$0xff]
    %v428 = vld [vmem:[%s1 + $0xc98] sm:$0xff]
    %v429 = vld [vmem:[%s1 + $0xca0] sm:$0xff]
    %v430 = vld [vmem:[%s1 + $0xca8] sm:$0xff]
    %v431 = vld [vmem:[%s1 + $0xcb0] sm:$0xff]
    %v432 = vld [vmem:[%s1 + $0xcb8] sm:$0xff]
    %v433 = vld [vmem:[%s1 + $0xcc0] sm:$0xff]
    %v434 = vld [vmem:[%s1 + $0xcc8] sm:$0xff]
    %v435 = vld [vmem:[%s1 + $0xcd0] sm:$0xff]
    %v436 = vld [vmem:[%s1 + $0xcd8] sm:$0xff]
    %v437 = vld [vmem:[%s1 + $0xce0] sm:$0xff]
    %v438 = vld [vmem:[%s1 + $0xce8] sm:$0xff]
    %v439 = vld [vmem:[%s1 + $0xcf0] sm:$0xff]
    %v440 = vld [vmem:[%s1 + $0xcf8] sm:$0xff]
    %v441 = vld [vmem:[%s1 + $0xd00] sm:$0xff]
    %v442 = vld [vmem:[%s1 + $0xd08] sm:$0xff]
    %v443 = vld [vmem:[%s1 + $0xd10] sm:$0xff]
    %v444 = vld [vmem:[%s1 + $0xd18] sm:$0xff]
    %v445 = vld [vmem:[%s1 + $0xd20] sm:$0xff]
    %v446 = vld [vmem:[%s1 + $0xd28] sm:$0xff]
    %v447 = vld [vmem:[%s1 + $0xd30] sm:$0xff]
    %v448 = vld [vmem:[%s1 + $0xd38] sm:$0xff]
    %v449 = vld [vmem:[%s1 + $0xd40] sm:$0xff]
    %v450 = vld [vmem:[%s1 + $0xd48] sm:$0xff]
    %v451 = vld [vmem:[%s1 + $0xd50] sm:$0xff]
    %v452 = vld [vmem:[%s1 + $0xd58] sm:$0xff]
    %v453 = vld [vmem:[%s1 + $0xd60] sm:$0xff]
    %v454 = vld [vmem:[%s1 + $0xd68] sm:$0xff]
    %v455 = vld [vmem:[%s1 + $0xd70] sm:$0xff]
    %v456 = vld [vmem:[%s1 + $0xd78] sm:$0xff]
    %v457 = vld [vmem:[%s1 + $0xd80] sm:$0xff]
    %v458 = vld [vmem:[%s1 + $0xd88] sm:$0xff]
    %v459 = vld [vmem:[%s1 + $0xd90] sm:$0xff]
    %v460 = vld [vmem:[%s1 + $0xd98] sm:$0xff]
    %v461 = vld [vmem:[%s1 + $0xda0] sm:$0xff]
    %v462 = vld [vmem:[%s1 + $0xda8] sm:$0xff]
    %v463 = vld [vmem:[%s1 + $0xdb0] sm:$0xff]
    %v464 = vld [vmem:[%s1 + $0xdb8] sm:$0xff]
    %v465 = vld [vmem:[%s1 + $0xdc0] sm:$0xff]
    %v466 = vld [vmem:[%s1 + $0xdc8] sm:$0xff]
    %v467 = vld [vmem:[%s1 + $0xdd0] sm:$0xff]
    %v468 = vld [vmem:[%s1 + $0xdd8] sm:$0xff]
    %v469 = vld [vmem:[%s1 + $0xde0] sm:$0xff]
    %v470 = vld [vmem:[%s1 + $0xde8] sm:$0xff]
    %v471 = vld [vmem:[%s1 + $0xdf0] sm:$0xff]
    %v472 = vld [vmem:[%s1 + $0xdf8] sm:$0xff]
    %v473 = vld [vmem:[%s1 + $0xe00] sm:$0xff]
    %v474 = vld [vmem:[%s1 + $0xe08] sm:$0xff]
    %v475 = vld [vmem:[%s1 + $0xe10] sm:$0xff]
    %v476 = vld [vmem:[%s1 + $0xe18] sm:$0xff]
    %v477 = vld [vmem:[%s1 + $0xe20] sm:$0xff]
    %v478 = vld [vmem:[%s1 + $0xe28] sm:$0xff]
    %v479 = vld [vmem:[%s1 + $0xe30] sm:$0xff]
    %v480 = vld [vmem:[%s1 + $0xe38] sm:$0xff]
    %v481 = vld [vmem:[%s1 + $0xe40] sm:$0xff]
    %v482 = vld [vmem:[%s1 + $0xe48] sm:$0xff]
    %v483 = vld [vmem:[%s1 + $0xe50] sm:$0xff]
    %v484 = vld [vmem:[%s1 + $0xe58] sm:$0xff]
    %v485 = vld [vmem:[%s1 + $0xe60] sm:$0xff]
    %v486 = vld [vmem:[%s1 + $0xe68] sm:$0xff]
    %v487 = vld [vmem:[%s1 + $0xe70] sm:$0xff]
    %v488 = vld [vmem:[%s1 + $0xe78] sm:$0xff]
    %v489 = vld [vmem:[%s1 + $0xe80] sm:$0xff]
    %v490 = vld [vmem:[%s1 + $0xe88] sm:$0xff]
    %v491 = vld [vmem:[%s1 + $0xe90] sm:$0xff]
    %v492 = vld [vmem:[%s1 + $0xe98] sm:$0xff]
    %v493 = vld [vmem:[%s1 + $0xea0] sm:$0xff]
    %v494 = vld [vmem:[%s1 + $0xea8] sm:$0xff]
    %v495 = vld [vmem:[%s1 + $0xeb0] sm:$0xff]
    %v496 = vld [vmem:[%s1 + $0xeb8] sm:$0xff]
    %v497 = vld [vmem:[%s1 + $0xec0] sm:$0xff]
    %v498 = vld [vmem:[%s1 + $0xec8] sm:$0xff]
    %v499 = vld [vmem:[%s1 + $0xed0] sm:$0xff]
    %v500 = vld [vmem:[%s1 + $0xed8] sm:$0xff]
    %v501 = vld [vmem:[%s1 + $0xee0] sm:$0xff]
    %v502 = vld [vmem:[%s1 + $0xee8] sm:$0xff]
    %v503 = vld [vmem:[%s1 + $0xef0] sm:$0xff]
    %v504 = vld [vmem:[%s1 + $0xef8] sm:$0xff]
    %v505 = vld [vmem:[%s1 + $0xf00] sm:$0xff]
    %v506 = vld [vmem:[%s1 + $0xf08] sm:$0xff]
    %v507 = vld [vmem:[%s1 + $0xf10] sm:$0xff]
    %v508 = vld [vmem:[%s1 + $0xf18] sm:$0xff]
    %v509 = vld [vmem:[%s1 + $0xf20] sm:$0xff]
    %v510 = vld [vmem:[%s1 + $0xf28] sm:$0xff]
    %v511 = vld [vmem:[%s1 + $0xf30] sm:$0xff]
    %v512 = vld [vmem:[%s1 + $0xf38] sm:$0xff]
    %v513 = vld [vmem:[%s1 + $0xf40] sm:$0xff]
    %v514 = vld [vmem:[%s1 + $0xf48] sm:$0xff]
    %v515 = vld [vmem:[%s1 + $0xf50] sm:$0xff]
    %v516 = vld [vmem:[%s1 + $0xf58] sm:$0xff]
    %v517 = vld [vmem:[%s1 + $0xf60] sm:$0xff]
    %v518 = vld [vmem:[%s1 + $0xf68] sm:$0xff]
    %v519 = vld [vmem:[%s1 + $0xf70] sm:$0xff]
    %v520 = vld [vmem:[%s1 + $0xf78] sm:$0xff]
    %v521 = vld [vmem:[%s1 + $0xf80] sm:$0xff]
    %v522 = vld [vmem:[%s1 + $0xf88] sm:$0xff]
    %v523 = vld [vmem:[%s1 + $0xf90] sm:$0xff]
    %v524 = vld [vmem:[%s1 + $0xf98] sm:$0xff]
    %v525 = vld [vmem:[%s1 + $0xfa0] sm:$0xff]
    %v526 = vld [vmem:[%s1 + $0xfa8] sm:$0xff]
    %v527 = vld [vmem:[%s1 + $0xfb0] sm:$0xff]
    %v528 = vld [vmem:[%s1 + $0xfb8] sm:$0xff]
    %v529 = vld [vmem:[%s1 + $0xfc0] sm:$0xff]
    %v530 = vld [vmem:[%s1 + $0xfc8] sm:$0xff]
    %v531 = vld [vmem:[%s1 + $0xfd0] sm:$0xff]
    %v532 = vld [vmem:[%s1 + $0xfd8] sm:$0xff]
    %v533 = vld [vmem:[%s1 + $0xfe0] sm:$0xff]
    %v534 = vld [vmem:[%s1 + $0xfe8] sm:$0xff]
    %v535 = vld [vmem:[%s1 + $0xff0] sm:$0xff]
    %v536 = vld [vmem:[%s1 + $0xff8] sm:$0xff]
    %v537 = vld [vmem:[%s2] sm:$0xff]
    %v538 = vld [vmem:[%s2 + $0x8] sm:$0xff]
    %v541 = vlaneseq
    %v542 = vshrl.u32 %v541, 7
    %v543 = vsub.s32 0, %v542
    %v544 = vrot.slane %v537, %v543
    %v545 = vlaneseq
    %v546 = vshrl.u32 %v545, 7
    %v547 = vsub.s32 1, %v546
    %v548 = vrot.slane %v537, %v547
    %v549 = vlaneseq
    %v550 = vshrl.u32 %v549, 7
    %v551 = vsub.s32 2, %v550
    %v552 = vrot.slane %v537, %v551
    %v553 = vlaneseq
    %v554 = vshrl.u32 %v553, 7
    %v555 = vsub.s32 3, %v554
    %v556 = vrot.slane %v537, %v555
    %v557 = vlaneseq
    %v558 = vshrl.u32 %v557, 7
    %v559 = vsub.s32 4, %v558
    %v560 = vrot.slane %v537, %v559
    %v561 = vlaneseq
    %v562 = vshrl.u32 %v561, 7
    %v563 = vsub.s32 5, %v562
    %v564 = vrot.slane %v537, %v563
    %v565 = vlaneseq
    %v566 = vshrl.u32 %v565, 7
    %v567 = vsub.s32 6, %v566
    %v568 = vrot.slane %v537, %v567
    %v569 = vlaneseq
    %v570 = vshrl.u32 %v569, 7
    %v571 = vsub.s32 7, %v570
    %v572 = vrot.slane %v537, %v571
    %v573 = vlaneseq
    %v574 = vshrl.u32 %v573, 7
    %v575 = vsub.s32 0, %v574
    %v576 = vrot.slane %v538, %v575
    %v577 = vlaneseq
    %v578 = vshrl.u32 %v577, 7
    %v579 = vsub.s32 1, %v578
    %v580 = vrot.slane %v538, %v579
    %v581 = vlaneseq
    %v582 = vshrl.u32 %v581, 7
    %v583 = vsub.s32 2, %v582
    %v584 = vrot.slane %v538, %v583
    %v585 = vlaneseq
    %v586 = vshrl.u32 %v585, 7
    %v587 = vsub.s32 3, %v586
    %v588 = vrot.slane %v538, %v587
    %v589 = vlaneseq
    %v590 = vshrl.u32 %v589, 7
    %v591 = vsub.s32 4, %v590
    %v592 = vrot.slane %v538, %v591
    %v593 = vlaneseq
    %v594 = vshrl.u32 %v593, 7
    %v595 = vsub.s32 5, %v594
    %v596 = vrot.slane %v538, %v595
    %v597 = vlaneseq
    %v598 = vshrl.u32 %v597, 7
    %v599 = vsub.s32 6, %v598
    %v600 = vrot.slane %v538, %v599
    %v601 = vlaneseq
    %v602 = vshrl.u32 %v601, 7
    %v603 = vsub.s32 7, %v602
    %v604 = vrot.slane %v538, %v603
    %v625 = vunpack.c.l.b16 %v21
    %v626 = vunpack.c.h.b16 %v21
    %v627 = vunpack.c.l.b16 %v22
    %v628 = vunpack.c.h.b16 %v22
    %v629 = vunpack.c.l.b16 %v23
    %v630 = vunpack.c.h.b16 %v23
    %v631 = vunpack.c.l.b16 %v24
    %v632 = vunpack.c.h.b16 %v24
    %v633 = vpack.c.b16 %v629, %v625
    %v634 = vpack.c.b16 %v630, %v626
    %v635 = vpack.c.b16 %v631, %v627
    %v636 = vpack.c.b16 %v632, %v628
    %v1153 = vunpack.c.l.b16 %v25
    %v1154 = vunpack.c.h.b16 %v25
    %v1155 = vunpack.c.l.b16 %v26
    %v1156 = vunpack.c.h.b16 %v26
    %v1157 = vunpack.c.l.b16 %v27
    %v1158 = vunpack.c.h.b16 %v27
    %v1159 = vunpack.c.l.b16 %v28
    %v1160 = vunpack.c.h.b16 %v28
    %v1161 = vunpack.c.l.b16 %v29
    %v1162 = vunpack.c.h.b16 %v29
    %v1163 = vunpack.c.l.b16 %v30
    %v1164 = vunpack.c.h.b16 %v30
    %v1165 = vunpack.c.l.b16 %v31
    %v1166 = vunpack.c.h.b16 %v31
    %v1167 = vunpack.c.l.b16 %v32
    %v1168 = vunpack.c.h.b16 %v32
    %v1169 = vunpack.c.l.b16 %v33
    %v1170 = vunpack.c.h.b16 %v33
    %v1171 = vunpack.c.l.b16 %v34
    %v1172 = vunpack.c.h.b16 %v34
    %v1173 = vunpack.c.l.b16 %v35
    %v1174 = vunpack.c.h.b16 %v35
    %v1175 = vunpack.c.l.b16 %v36
    %v1176 = vunpack.c.h.b16 %v36
    %v1177 = vunpack.c.l.b16 %v37
    %v1178 = vunpack.c.h.b16 %v37
    %v1179 = vunpack.c.l.b16 %v38
    %v1180 = vunpack.c.h.b16 %v38
    %v1181 = vunpack.c.l.b16 %v39
    %v1182 = vunpack.c.h.b16 %v39
    %v1183 = vunpack.c.l.b16 %v40
    %v1184 = vunpack.c.h.b16 %v40
    %v1185 = vunpack.c.l.b16 %v41
    %v1186 = vunpack.c.h.b16 %v41
    %v1187 = vunpack.c.l.b16 %v42
    %v1188 = vunpack.c.h.b16 %v42
    %v1189 = vunpack.c.l.b16 %v43
    %v1190 = vunpack.c.h.b16 %v43
    %v1191 = vunpack.c.l.b16 %v44
    %v1192 = vunpack.c.h.b16 %v44
    %v1193 = vunpack.c.l.b16 %v45
    %v1194 = vunpack.c.h.b16 %v45
    %v1195 = vunpack.c.l.b16 %v46
    %v1196 = vunpack.c.h.b16 %v46
    %v1197 = vunpack.c.l.b16 %v47
    %v1198 = vunpack.c.h.b16 %v47
    %v1199 = vunpack.c.l.b16 %v48
    %v1200 = vunpack.c.h.b16 %v48
    %v1201 = vunpack.c.l.b16 %v49
    %v1202 = vunpack.c.h.b16 %v49
    %v1203 = vunpack.c.l.b16 %v50
    %v1204 = vunpack.c.h.b16 %v50
    %v1205 = vunpack.c.l.b16 %v51
    %v1206 = vunpack.c.h.b16 %v51
    %v1207 = vunpack.c.l.b16 %v52
    %v1208 = vunpack.c.h.b16 %v52
    %v1209 = vunpack.c.l.b16 %v53
    %v1210 = vunpack.c.h.b16 %v53
    %v1211 = vunpack.c.l.b16 %v54
    %v1212 = vunpack.c.h.b16 %v54
    %v1213 = vunpack.c.l.b16 %v55
    %v1214 = vunpack.c.h.b16 %v55
    %v1215 = vunpack.c.l.b16 %v56
    %v1216 = vunpack.c.h.b16 %v56
    %v1217 = vunpack.c.l.b16 %v57
    %v1218 = vunpack.c.h.b16 %v57
    %v1219 = vunpack.c.l.b16 %v58
    %v1220 = vunpack.c.h.b16 %v58
    %v1221 = vunpack.c.l.b16 %v59
    %v1222 = vunpack.c.h.b16 %v59
    %v1223 = vunpack.c.l.b16 %v60
    %v1224 = vunpack.c.h.b16 %v60
    %v1225 = vunpack.c.l.b16 %v61
    %v1226 = vunpack.c.h.b16 %v61
    %v1227 = vunpack.c.l.b16 %v62
    %v1228 = vunpack.c.h.b16 %v62
    %v1229 = vunpack.c.l.b16 %v63
    %v1230 = vunpack.c.h.b16 %v63
    %v1231 = vunpack.c.l.b16 %v64
    %v1232 = vunpack.c.h.b16 %v64
    %v1233 = vunpack.c.l.b16 %v65
    %v1234 = vunpack.c.h.b16 %v65
    %v1235 = vunpack.c.l.b16 %v66
    %v1236 = vunpack.c.h.b16 %v66
    %v1237 = vunpack.c.l.b16 %v67
    %v1238 = vunpack.c.h.b16 %v67
    %v1239 = vunpack.c.l.b16 %v68
    %v1240 = vunpack.c.h.b16 %v68
    %v1241 = vunpack.c.l.b16 %v69
    %v1242 = vunpack.c.h.b16 %v69
    %v1243 = vunpack.c.l.b16 %v70
    %v1244 = vunpack.c.h.b16 %v70
    %v1245 = vunpack.c.l.b16 %v71
    %v1246 = vunpack.c.h.b16 %v71
    %v1247 = vunpack.c.l.b16 %v72
    %v1248 = vunpack.c.h.b16 %v72
    %v1249 = vunpack.c.l.b16 %v73
    %v1250 = vunpack.c.h.b16 %v73
    %v1251 = vunpack.c.l.b16 %v74
    %v1252 = vunpack.c.h.b16 %v74
    %v1253 = vunpack.c.l.b16 %v75
    %v1254 = vunpack.c.h.b16 %v75
    %v1255 = vunpack.c.l.b16 %v76
    %v1256 = vunpack.c.h.b16 %v76
    %v1257 = vunpack.c.l.b16 %v77
    %v1258 = vunpack.c.h.b16 %v77
    %v1259 = vunpack.c.l.b16 %v78
    %v1260 = vunpack.c.h.b16 %v78
    %v1261 = vunpack.c.l.b16 %v79
    %v1262 = vunpack.c.h.b16 %v79
    %v1263 = vunpack.c.l.b16 %v80
    %v1264 = vunpack.c.h.b16 %v80
    %v1265 = vunpack.c.l.b16 %v81
    %v1266 = vunpack.c.h.b16 %v81
    %v1267 = vunpack.c.l.b16 %v82
    %v1268 = vunpack.c.h.b16 %v82
    %v1269 = vunpack.c.l.b16 %v83
    %v1270 = vunpack.c.h.b16 %v83
    %v1271 = vunpack.c.l.b16 %v84
    %v1272 = vunpack.c.h.b16 %v84
    %v1273 = vunpack.c.l.b16 %v85
    %v1274 = vunpack.c.h.b16 %v85
    %v1275 = vunpack.c.l.b16 %v86
    %v1276 = vunpack.c.h.b16 %v86
    %v1277 = vunpack.c.l.b16 %v87
    %v1278 = vunpack.c.h.b16 %v87
    %v1279 = vunpack.c.l.b16 %v88
    %v1280 = vunpack.c.h.b16 %v88
    %v1281 = vunpack.c.l.b16 %v89
    %v1282 = vunpack.c.h.b16 %v89
    %v1283 = vunpack.c.l.b16 %v90
    %v1284 = vunpack.c.h.b16 %v90
    %v1285 = vunpack.c.l.b16 %v91
    %v1286 = vunpack.c.h.b16 %v91
    %v1287 = vunpack.c.l.b16 %v92
    %v1288 = vunpack.c.h.b16 %v92
    %v1289 = vunpack.c.l.b16 %v93
    %v1290 = vunpack.c.h.b16 %v93
    %v1291 = vunpack.c.l.b16 %v94
    %v1292 = vunpack.c.h.b16 %v94
    %v1293 = vunpack.c.l.b16 %v95
    %v1294 = vunpack.c.h.b16 %v95
    %v1295 = vunpack.c.l.b16 %v96
    %v1296 = vunpack.c.h.b16 %v96
    %v1297 = vunpack.c.l.b16 %v97
    %v1298 = vunpack.c.h.b16 %v97
    %v1299 = vunpack.c.l.b16 %v98
    %v1300 = vunpack.c.h.b16 %v98
    %v1301 = vunpack.c.l.b16 %v99
    %v1302 = vunpack.c.h.b16 %v99
    %v1303 = vunpack.c.l.b16 %v100
    %v1304 = vunpack.c.h.b16 %v100
    %v1305 = vunpack.c.l.b16 %v101
    %v1306 = vunpack.c.h.b16 %v101
    %v1307 = vunpack.c.l.b16 %v102
    %v1308 = vunpack.c.h.b16 %v102
    %v1309 = vunpack.c.l.b16 %v103
    %v1310 = vunpack.c.h.b16 %v103
    %v1311 = vunpack.c.l.b16 %v104
    %v1312 = vunpack.c.h.b16 %v104
    %v1313 = vunpack.c.l.b16 %v105
    %v1314 = vunpack.c.h.b16 %v105
    %v1315 = vunpack.c.l.b16 %v106
    %v1316 = vunpack.c.h.b16 %v106
    %v1317 = vunpack.c.l.b16 %v107
    %v1318 = vunpack.c.h.b16 %v107
    %v1319 = vunpack.c.l.b16 %v108
    %v1320 = vunpack.c.h.b16 %v108
    %v1321 = vunpack.c.l.b16 %v109
    %v1322 = vunpack.c.h.b16 %v109
    %v1323 = vunpack.c.l.b16 %v110
    %v1324 = vunpack.c.h.b16 %v110
    %v1325 = vunpack.c.l.b16 %v111
    %v1326 = vunpack.c.h.b16 %v111
    %v1327 = vunpack.c.l.b16 %v112
    %v1328 = vunpack.c.h.b16 %v112
    %v1329 = vunpack.c.l.b16 %v113
    %v1330 = vunpack.c.h.b16 %v113
    %v1331 = vunpack.c.l.b16 %v114
    %v1332 = vunpack.c.h.b16 %v114
    %v1333 = vunpack.c.l.b16 %v115
    %v1334 = vunpack.c.h.b16 %v115
    %v1335 = vunpack.c.l.b16 %v116
    %v1336 = vunpack.c.h.b16 %v116
    %v1337 = vunpack.c.l.b16 %v117
    %v1338 = vunpack.c.h.b16 %v117
    %v1339 = vunpack.c.l.b16 %v118
    %v1340 = vunpack.c.h.b16 %v118
    %v1341 = vunpack.c.l.b16 %v119
    %v1342 = vunpack.c.h.b16 %v119
    %v1343 = vunpack.c.l.b16 %v120
    %v1344 = vunpack.c.h.b16 %v120
    %v1345 = vunpack.c.l.b16 %v121
    %v1346 = vunpack.c.h.b16 %v121
    %v1347 = vunpack.c.l.b16 %v122
    %v1348 = vunpack.c.h.b16 %v122
    %v1349 = vunpack.c.l.b16 %v123
    %v1350 = vunpack.c.h.b16 %v123
    %v1351 = vunpack.c.l.b16 %v124
    %v1352 = vunpack.c.h.b16 %v124
    %v1353 = vunpack.c.l.b16 %v125
    %v1354 = vunpack.c.h.b16 %v125
    %v1355 = vunpack.c.l.b16 %v126
    %v1356 = vunpack.c.h.b16 %v126
    %v1357 = vunpack.c.l.b16 %v127
    %v1358 = vunpack.c.h.b16 %v127
    %v1359 = vunpack.c.l.b16 %v128
    %v1360 = vunpack.c.h.b16 %v128
    %v1361 = vunpack.c.l.b16 %v129
    %v1362 = vunpack.c.h.b16 %v129
    %v1363 = vunpack.c.l.b16 %v130
    %v1364 = vunpack.c.h.b16 %v130
    %v1365 = vunpack.c.l.b16 %v131
    %v1366 = vunpack.c.h.b16 %v131
    %v1367 = vunpack.c.l.b16 %v132
    %v1368 = vunpack.c.h.b16 %v132
    %v1369 = vunpack.c.l.b16 %v133
    %v1370 = vunpack.c.h.b16 %v133
    %v1371 = vunpack.c.l.b16 %v134
    %v1372 = vunpack.c.h.b16 %v134
    %v1373 = vunpack.c.l.b16 %v135
    %v1374 = vunpack.c.h.b16 %v135
    %v1375 = vunpack.c.l.b16 %v136
    %v1376 = vunpack.c.h.b16 %v136
    %v1377 = vunpack.c.l.b16 %v137
    %v1378 = vunpack.c.h.b16 %v137
    %v1379 = vunpack.c.l.b16 %v138
    %v1380 = vunpack.c.h.b16 %v138
    %v1381 = vunpack.c.l.b16 %v139
    %v1382 = vunpack.c.h.b16 %v139
    %v1383 = vunpack.c.l.b16 %v140
    %v1384 = vunpack.c.h.b16 %v140
    %v1385 = vunpack.c.l.b16 %v141
    %v1386 = vunpack.c.h.b16 %v141
    %v1387 = vunpack.c.l.b16 %v142
    %v1388 = vunpack.c.h.b16 %v142
    %v1389 = vunpack.c.l.b16 %v143
    %v1390 = vunpack.c.h.b16 %v143
    %v1391 = vunpack.c.l.b16 %v144
    %v1392 = vunpack.c.h.b16 %v144
    %v1393 = vunpack.c.l.b16 %v145
    %v1394 = vunpack.c.h.b16 %v145
    %v1395 = vunpack.c.l.b16 %v146
    %v1396 = vunpack.c.h.b16 %v146
    %v1397 = vunpack.c.l.b16 %v147
    %v1398 = vunpack.c.h.b16 %v147
    %v1399 = vunpack.c.l.b16 %v148
    %v1400 = vunpack.c.h.b16 %v148
    %v1401 = vunpack.c.l.b16 %v149
    %v1402 = vunpack.c.h.b16 %v149
    %v1403 = vunpack.c.l.b16 %v150
    %v1404 = vunpack.c.h.b16 %v150
    %v1405 = vunpack.c.l.b16 %v151
    %v1406 = vunpack.c.h.b16 %v151
    %v1407 = vunpack.c.l.b16 %v152
    %v1408 = vunpack.c.h.b16 %v152
    %v1409 = vunpack.c.l.b16 %v153
    %v1410 = vunpack.c.h.b16 %v153
    %v1411 = vunpack.c.l.b16 %v154
    %v1412 = vunpack.c.h.b16 %v154
    %v1413 = vunpack.c.l.b16 %v155
    %v1414 = vunpack.c.h.b16 %v155
    %v1415 = vunpack.c.l.b16 %v156
    %v1416 = vunpack.c.h.b16 %v156
    %v1417 = vunpack.c.l.b16 %v157
    %v1418 = vunpack.c.h.b16 %v157
    %v1419 = vunpack.c.l.b16 %v158
    %v1420 = vunpack.c.h.b16 %v158
    %v1421 = vunpack.c.l.b16 %v159
    %v1422 = vunpack.c.h.b16 %v159
    %v1423 = vunpack.c.l.b16 %v160
    %v1424 = vunpack.c.h.b16 %v160
    %v1425 = vunpack.c.l.b16 %v161
    %v1426 = vunpack.c.h.b16 %v161
    %v1427 = vunpack.c.l.b16 %v162
    %v1428 = vunpack.c.h.b16 %v162
    %v1429 = vunpack.c.l.b16 %v163
    %v1430 = vunpack.c.h.b16 %v163
    %v1431 = vunpack.c.l.b16 %v164
    %v1432 = vunpack.c.h.b16 %v164
    %v1433 = vunpack.c.l.b16 %v165
    %v1434 = vunpack.c.h.b16 %v165
    %v1435 = vunpack.c.l.b16 %v166
    %v1436 = vunpack.c.h.b16 %v166
    %v1437 = vunpack.c.l.b16 %v167
    %v1438 = vunpack.c.h.b16 %v167
    %v1439 = vunpack.c.l.b16 %v168
    %v1440 = vunpack.c.h.b16 %v168
    %v1441 = vunpack.c.l.b16 %v169
    %v1442 = vunpack.c.h.b16 %v169
    %v1443 = vunpack.c.l.b16 %v170
    %v1444 = vunpack.c.h.b16 %v170
    %v1445 = vunpack.c.l.b16 %v171
    %v1446 = vunpack.c.h.b16 %v171
    %v1447 = vunpack.c.l.b16 %v172
    %v1448 = vunpack.c.h.b16 %v172
    %v1449 = vunpack.c.l.b16 %v173
    %v1450 = vunpack.c.h.b16 %v173
    %v1451 = vunpack.c.l.b16 %v174
    %v1452 = vunpack.c.h.b16 %v174
    %v1453 = vunpack.c.l.b16 %v175
    %v1454 = vunpack.c.h.b16 %v175
    %v1455 = vunpack.c.l.b16 %v176
    %v1456 = vunpack.c.h.b16 %v176
    %v1457 = vunpack.c.l.b16 %v177
    %v1458 = vunpack.c.h.b16 %v177
    %v1459 = vunpack.c.l.b16 %v178
    %v1460 = vunpack.c.h.b16 %v178
    %v1461 = vunpack.c.l.b16 %v179
    %v1462 = vunpack.c.h.b16 %v179
    %v1463 = vunpack.c.l.b16 %v180
    %v1464 = vunpack.c.h.b16 %v180
    %v1465 = vunpack.c.l.b16 %v181
    %v1466 = vunpack.c.h.b16 %v181
    %v1467 = vunpack.c.l.b16 %v182
    %v1468 = vunpack.c.h.b16 %v182
    %v1469 = vunpack.c.l.b16 %v183
    %v1470 = vunpack.c.h.b16 %v183
    %v1471 = vunpack.c.l.b16 %v184
    %v1472 = vunpack.c.h.b16 %v184
    %v1473 = vunpack.c.l.b16 %v185
    %v1474 = vunpack.c.h.b16 %v185
    %v1475 = vunpack.c.l.b16 %v186
    %v1476 = vunpack.c.h.b16 %v186
    %v1477 = vunpack.c.l.b16 %v187
    %v1478 = vunpack.c.h.b16 %v187
    %v1479 = vunpack.c.l.b16 %v188
    %v1480 = vunpack.c.h.b16 %v188
    %v1481 = vunpack.c.l.b16 %v189
    %v1482 = vunpack.c.h.b16 %v189
    %v1483 = vunpack.c.l.b16 %v190
    %v1484 = vunpack.c.h.b16 %v190
    %v1485 = vunpack.c.l.b16 %v191
    %v1486 = vunpack.c.h.b16 %v191
    %v1487 = vunpack.c.l.b16 %v192
    %v1488 = vunpack.c.h.b16 %v192
    %v1489 = vunpack.c.l.b16 %v193
    %v1490 = vunpack.c.h.b16 %v193
    %v1491 = vunpack.c.l.b16 %v194
    %v1492 = vunpack.c.h.b16 %v194
    %v1493 = vunpack.c.l.b16 %v195
    %v1494 = vunpack.c.h.b16 %v195
    %v1495 = vunpack.c.l.b16 %v196
    %v1496 = vunpack.c.h.b16 %v196
    %v1497 = vunpack.c.l.b16 %v197
    %v1498 = vunpack.c.h.b16 %v197
    %v1499 = vunpack.c.l.b16 %v198
    %v1500 = vunpack.c.h.b16 %v198
    %v1501 = vunpack.c.l.b16 %v199
    %v1502 = vunpack.c.h.b16 %v199
    %v1503 = vunpack.c.l.b16 %v200
    %v1504 = vunpack.c.h.b16 %v200
    %v1505 = vunpack.c.l.b16 %v201
    %v1506 = vunpack.c.h.b16 %v201
    %v1507 = vunpack.c.l.b16 %v202
    %v1508 = vunpack.c.h.b16 %v202
    %v1509 = vunpack.c.l.b16 %v203
    %v1510 = vunpack.c.h.b16 %v203
    %v1511 = vunpack.c.l.b16 %v204
    %v1512 = vunpack.c.h.b16 %v204
    %v1513 = vunpack.c.l.b16 %v205
    %v1514 = vunpack.c.h.b16 %v205
    %v1515 = vunpack.c.l.b16 %v206
    %v1516 = vunpack.c.h.b16 %v206
    %v1517 = vunpack.c.l.b16 %v207
    %v1518 = vunpack.c.h.b16 %v207
    %v1519 = vunpack.c.l.b16 %v208
    %v1520 = vunpack.c.h.b16 %v208
    %v1521 = vunpack.c.l.b16 %v209
    %v1522 = vunpack.c.h.b16 %v209
    %v1523 = vunpack.c.l.b16 %v210
    %v1524 = vunpack.c.h.b16 %v210
    %v1525 = vunpack.c.l.b16 %v211
    %v1526 = vunpack.c.h.b16 %v211
    %v1527 = vunpack.c.l.b16 %v212
    %v1528 = vunpack.c.h.b16 %v212
    %v1529 = vunpack.c.l.b16 %v213
    %v1530 = vunpack.c.h.b16 %v213
    %v1531 = vunpack.c.l.b16 %v214
    %v1532 = vunpack.c.h.b16 %v214
    %v1533 = vunpack.c.l.b16 %v215
    %v1534 = vunpack.c.h.b16 %v215
    %v1535 = vunpack.c.l.b16 %v216
    %v1536 = vunpack.c.h.b16 %v216
    %v1537 = vunpack.c.l.b16 %v217
    %v1538 = vunpack.c.h.b16 %v217
    %v1539 = vunpack.c.l.b16 %v218
    %v1540 = vunpack.c.h.b16 %v218
    %v1541 = vunpack.c.l.b16 %v219
    %v1542 = vunpack.c.h.b16 %v219
    %v1543 = vunpack.c.l.b16 %v220
    %v1544 = vunpack.c.h.b16 %v220
    %v1545 = vunpack.c.l.b16 %v221
    %v1546 = vunpack.c.h.b16 %v221
    %v1547 = vunpack.c.l.b16 %v222
    %v1548 = vunpack.c.h.b16 %v222
    %v1549 = vunpack.c.l.b16 %v223
    %v1550 = vunpack.c.h.b16 %v223
    %v1551 = vunpack.c.l.b16 %v224
    %v1552 = vunpack.c.h.b16 %v224
    %v1553 = vunpack.c.l.b16 %v225
    %v1554 = vunpack.c.h.b16 %v225
    %v1555 = vunpack.c.l.b16 %v226
    %v1556 = vunpack.c.h.b16 %v226
    %v1557 = vunpack.c.l.b16 %v227
    %v1558 = vunpack.c.h.b16 %v227
    %v1559 = vunpack.c.l.b16 %v228
    %v1560 = vunpack.c.h.b16 %v228
    %v1561 = vunpack.c.l.b16 %v229
    %v1562 = vunpack.c.h.b16 %v229
    %v1563 = vunpack.c.l.b16 %v230
    %v1564 = vunpack.c.h.b16 %v230
    %v1565 = vunpack.c.l.b16 %v231
    %v1566 = vunpack.c.h.b16 %v231
    %v1567 = vunpack.c.l.b16 %v232
    %v1568 = vunpack.c.h.b16 %v232
    %v1569 = vunpack.c.l.b16 %v233
    %v1570 = vunpack.c.h.b16 %v233
    %v1571 = vunpack.c.l.b16 %v234
    %v1572 = vunpack.c.h.b16 %v234
    %v1573 = vunpack.c.l.b16 %v235
    %v1574 = vunpack.c.h.b16 %v235
    %v1575 = vunpack.c.l.b16 %v236
    %v1576 = vunpack.c.h.b16 %v236
    %v1577 = vunpack.c.l.b16 %v237
    %v1578 = vunpack.c.h.b16 %v237
    %v1579 = vunpack.c.l.b16 %v238
    %v1580 = vunpack.c.h.b16 %v238
    %v1581 = vunpack.c.l.b16 %v239
    %v1582 = vunpack.c.h.b16 %v239
    %v1583 = vunpack.c.l.b16 %v240
    %v1584 = vunpack.c.h.b16 %v240
    %v1585 = vunpack.c.l.b16 %v241
    %v1586 = vunpack.c.h.b16 %v241
    %v1587 = vunpack.c.l.b16 %v242
    %v1588 = vunpack.c.h.b16 %v242
    %v1589 = vunpack.c.l.b16 %v243
    %v1590 = vunpack.c.h.b16 %v243
    %v1591 = vunpack.c.l.b16 %v244
    %v1592 = vunpack.c.h.b16 %v244
    %v1593 = vunpack.c.l.b16 %v245
    %v1594 = vunpack.c.h.b16 %v245
    %v1595 = vunpack.c.l.b16 %v246
    %v1596 = vunpack.c.h.b16 %v246
    %v1597 = vunpack.c.l.b16 %v247
    %v1598 = vunpack.c.h.b16 %v247
    %v1599 = vunpack.c.l.b16 %v248
    %v1600 = vunpack.c.h.b16 %v248
    %v1601 = vunpack.c.l.b16 %v249
    %v1602 = vunpack.c.h.b16 %v249
    %v1603 = vunpack.c.l.b16 %v250
    %v1604 = vunpack.c.h.b16 %v250
    %v1605 = vunpack.c.l.b16 %v251
    %v1606 = vunpack.c.h.b16 %v251
    %v1607 = vunpack.c.l.b16 %v252
    %v1608 = vunpack.c.h.b16 %v252
    %v1609 = vunpack.c.l.b16 %v253
    %v1610 = vunpack.c.h.b16 %v253
    %v1611 = vunpack.c.l.b16 %v254
    %v1612 = vunpack.c.h.b16 %v254
    %v1613 = vunpack.c.l.b16 %v255
    %v1614 = vunpack.c.h.b16 %v255
    %v1615 = vunpack.c.l.b16 %v256
    %v1616 = vunpack.c.h.b16 %v256
    %v1617 = vunpack.c.l.b16 %v257
    %v1618 = vunpack.c.h.b16 %v257
    %v1619 = vunpack.c.l.b16 %v258
    %v1620 = vunpack.c.h.b16 %v258
    %v1621 = vunpack.c.l.b16 %v259
    %v1622 = vunpack.c.h.b16 %v259
    %v1623 = vunpack.c.l.b16 %v260
    %v1624 = vunpack.c.h.b16 %v260
    %v1625 = vunpack.c.l.b16 %v261
    %v1626 = vunpack.c.h.b16 %v261
    %v1627 = vunpack.c.l.b16 %v262
    %v1628 = vunpack.c.h.b16 %v262
    %v1629 = vunpack.c.l.b16 %v263
    %v1630 = vunpack.c.h.b16 %v263
    %v1631 = vunpack.c.l.b16 %v264
    %v1632 = vunpack.c.h.b16 %v264
    %v1633 = vunpack.c.l.b16 %v265
    %v1634 = vunpack.c.h.b16 %v265
    %v1635 = vunpack.c.l.b16 %v266
    %v1636 = vunpack.c.h.b16 %v266
    %v1637 = vunpack.c.l.b16 %v267
    %v1638 = vunpack.c.h.b16 %v267
    %v1639 = vunpack.c.l.b16 %v268
    %v1640 = vunpack.c.h.b16 %v268
    %v1641 = vunpack.c.l.b16 %v269
    %v1642 = vunpack.c.h.b16 %v269
    %v1643 = vunpack.c.l.b16 %v270
    %v1644 = vunpack.c.h.b16 %v270
    %v1645 = vunpack.c.l.b16 %v271
    %v1646 = vunpack.c.h.b16 %v271
    %v1647 = vunpack.c.l.b16 %v272
    %v1648 = vunpack.c.h.b16 %v272
    %v1649 = vunpack.c.l.b16 %v273
    %v1650 = vunpack.c.h.b16 %v273
    %v1651 = vunpack.c.l.b16 %v274
    %v1652 = vunpack.c.h.b16 %v274
    %v1653 = vunpack.c.l.b16 %v275
    %v1654 = vunpack.c.h.b16 %v275
    %v1655 = vunpack.c.l.b16 %v276
    %v1656 = vunpack.c.h.b16 %v276
    %v1657 = vunpack.c.l.b16 %v277
    %v1658 = vunpack.c.h.b16 %v277
    %v1659 = vunpack.c.l.b16 %v278
    %v1660 = vunpack.c.h.b16 %v278
    %v1661 = vunpack.c.l.b16 %v279
    %v1662 = vunpack.c.h.b16 %v279
    %v1663 = vunpack.c.l.b16 %v280
    %v1664 = vunpack.c.h.b16 %v280
    %v1665 = vunpack.c.l.b16 %v281
    %v1666 = vunpack.c.h.b16 %v281
    %v1667 = vunpack.c.l.b16 %v282
    %v1668 = vunpack.c.h.b16 %v282
    %v1669 = vunpack.c.l.b16 %v283
    %v1670 = vunpack.c.h.b16 %v283
    %v1671 = vunpack.c.l.b16 %v284
    %v1672 = vunpack.c.h.b16 %v284
    %v1673 = vunpack.c.l.b16 %v285
    %v1674 = vunpack.c.h.b16 %v285
    %v1675 = vunpack.c.l.b16 %v286
    %v1676 = vunpack.c.h.b16 %v286
    %v1677 = vunpack.c.l.b16 %v287
    %v1678 = vunpack.c.h.b16 %v287
    %v1679 = vunpack.c.l.b16 %v288
    %v1680 = vunpack.c.h.b16 %v288
    %v1681 = vunpack.c.l.b16 %v289
    %v1682 = vunpack.c.h.b16 %v289
    %v1683 = vunpack.c.l.b16 %v290
    %v1684 = vunpack.c.h.b16 %v290
    %v1685 = vunpack.c.l.b16 %v291
    %v1686 = vunpack.c.h.b16 %v291
    %v1687 = vunpack.c.l.b16 %v292
    %v1688 = vunpack.c.h.b16 %v292
    %v1689 = vunpack.c.l.b16 %v293
    %v1690 = vunpack.c.h.b16 %v293
    %v1691 = vunpack.c.l.b16 %v294
    %v1692 = vunpack.c.h.b16 %v294
    %v1693 = vunpack.c.l.b16 %v295
    %v1694 = vunpack.c.h.b16 %v295
    %v1695 = vunpack.c.l.b16 %v296
    %v1696 = vunpack.c.h.b16 %v296
    %v1697 = vunpack.c.l.b16 %v297
    %v1698 = vunpack.c.h.b16 %v297
    %v1699 = vunpack.c.l.b16 %v298
    %v1700 = vunpack.c.h.b16 %v298
    %v1701 = vunpack.c.l.b16 %v299
    %v1702 = vunpack.c.h.b16 %v299
    %v1703 = vunpack.c.l.b16 %v300
    %v1704 = vunpack.c.h.b16 %v300
    %v1705 = vunpack.c.l.b16 %v301
    %v1706 = vunpack.c.h.b16 %v301
    %v1707 = vunpack.c.l.b16 %v302
    %v1708 = vunpack.c.h.b16 %v302
    %v1709 = vunpack.c.l.b16 %v303
    %v1710 = vunpack.c.h.b16 %v303
    %v1711 = vunpack.c.l.b16 %v304
    %v1712 = vunpack.c.h.b16 %v304
    %v1713 = vunpack.c.l.b16 %v305
    %v1714 = vunpack.c.h.b16 %v305
    %v1715 = vunpack.c.l.b16 %v306
    %v1716 = vunpack.c.h.b16 %v306
    %v1717 = vunpack.c.l.b16 %v307
    %v1718 = vunpack.c.h.b16 %v307
    %v1719 = vunpack.c.l.b16 %v308
    %v1720 = vunpack.c.h.b16 %v308
    %v1721 = vunpack.c.l.b16 %v309
    %v1722 = vunpack.c.h.b16 %v309
    %v1723 = vunpack.c.l.b16 %v310
    %v1724 = vunpack.c.h.b16 %v310
    %v1725 = vunpack.c.l.b16 %v311
    %v1726 = vunpack.c.h.b16 %v311
    %v1727 = vunpack.c.l.b16 %v312
    %v1728 = vunpack.c.h.b16 %v312
    %v1729 = vunpack.c.l.b16 %v313
    %v1730 = vunpack.c.h.b16 %v313
    %v1731 = vunpack.c.l.b16 %v314
    %v1732 = vunpack.c.h.b16 %v314
    %v1733 = vunpack.c.l.b16 %v315
    %v1734 = vunpack.c.h.b16 %v315
    %v1735 = vunpack.c.l.b16 %v316
    %v1736 = vunpack.c.h.b16 %v316
    %v1737 = vunpack.c.l.b16 %v317
    %v1738 = vunpack.c.h.b16 %v317
    %v1739 = vunpack.c.l.b16 %v318
    %v1740 = vunpack.c.h.b16 %v318
    %v1741 = vunpack.c.l.b16 %v319
    %v1742 = vunpack.c.h.b16 %v319
    %v1743 = vunpack.c.l.b16 %v320
    %v1744 = vunpack.c.h.b16 %v320
    %v1745 = vunpack.c.l.b16 %v321
    %v1746 = vunpack.c.h.b16 %v321
    %v1747 = vunpack.c.l.b16 %v322
    %v1748 = vunpack.c.h.b16 %v322
    %v1749 = vunpack.c.l.b16 %v323
    %v1750 = vunpack.c.h.b16 %v323
    %v1751 = vunpack.c.l.b16 %v324
    %v1752 = vunpack.c.h.b16 %v324
    %v1753 = vunpack.c.l.b16 %v325
    %v1754 = vunpack.c.h.b16 %v325
    %v1755 = vunpack.c.l.b16 %v326
    %v1756 = vunpack.c.h.b16 %v326
    %v1757 = vunpack.c.l.b16 %v327
    %v1758 = vunpack.c.h.b16 %v327
    %v1759 = vunpack.c.l.b16 %v328
    %v1760 = vunpack.c.h.b16 %v328
    %v1761 = vunpack.c.l.b16 %v329
    %v1762 = vunpack.c.h.b16 %v329
    %v1763 = vunpack.c.l.b16 %v330
    %v1764 = vunpack.c.h.b16 %v330
    %v1765 = vunpack.c.l.b16 %v331
    %v1766 = vunpack.c.h.b16 %v331
    %v1767 = vunpack.c.l.b16 %v332
    %v1768 = vunpack.c.h.b16 %v332
    %v1769 = vunpack.c.l.b16 %v333
    %v1770 = vunpack.c.h.b16 %v333
    %v1771 = vunpack.c.l.b16 %v334
    %v1772 = vunpack.c.h.b16 %v334
    %v1773 = vunpack.c.l.b16 %v335
    %v1774 = vunpack.c.h.b16 %v335
    %v1775 = vunpack.c.l.b16 %v336
    %v1776 = vunpack.c.h.b16 %v336
    %v1777 = vunpack.c.l.b16 %v337
    %v1778 = vunpack.c.h.b16 %v337
    %v1779 = vunpack.c.l.b16 %v338
    %v1780 = vunpack.c.h.b16 %v338
    %v1781 = vunpack.c.l.b16 %v339
    %v1782 = vunpack.c.h.b16 %v339
    %v1783 = vunpack.c.l.b16 %v340
    %v1784 = vunpack.c.h.b16 %v340
    %v1785 = vunpack.c.l.b16 %v341
    %v1786 = vunpack.c.h.b16 %v341
    %v1787 = vunpack.c.l.b16 %v342
    %v1788 = vunpack.c.h.b16 %v342
    %v1789 = vunpack.c.l.b16 %v343
    %v1790 = vunpack.c.h.b16 %v343
    %v1791 = vunpack.c.l.b16 %v344
    %v1792 = vunpack.c.h.b16 %v344
    %v1793 = vunpack.c.l.b16 %v345
    %v1794 = vunpack.c.h.b16 %v345
    %v1795 = vunpack.c.l.b16 %v346
    %v1796 = vunpack.c.h.b16 %v346
    %v1797 = vunpack.c.l.b16 %v347
    %v1798 = vunpack.c.h.b16 %v347
    %v1799 = vunpack.c.l.b16 %v348
    %v1800 = vunpack.c.h.b16 %v348
    %v1801 = vunpack.c.l.b16 %v349
    %v1802 = vunpack.c.h.b16 %v349
    %v1803 = vunpack.c.l.b16 %v350
    %v1804 = vunpack.c.h.b16 %v350
    %v1805 = vunpack.c.l.b16 %v351
    %v1806 = vunpack.c.h.b16 %v351
    %v1807 = vunpack.c.l.b16 %v352
    %v1808 = vunpack.c.h.b16 %v352
    %v1809 = vunpack.c.l.b16 %v353
    %v1810 = vunpack.c.h.b16 %v353
    %v1811 = vunpack.c.l.b16 %v354
    %v1812 = vunpack.c.h.b16 %v354
    %v1813 = vunpack.c.l.b16 %v355
    %v1814 = vunpack.c.h.b16 %v355
    %v1815 = vunpack.c.l.b16 %v356
    %v1816 = vunpack.c.h.b16 %v356
    %v1817 = vunpack.c.l.b16 %v357
    %v1818 = vunpack.c.h.b16 %v357
    %v1819 = vunpack.c.l.b16 %v358
    %v1820 = vunpack.c.h.b16 %v358
    %v1821 = vunpack.c.l.b16 %v359
    %v1822 = vunpack.c.h.b16 %v359
    %v1823 = vunpack.c.l.b16 %v360
    %v1824 = vunpack.c.h.b16 %v360
    %v1825 = vunpack.c.l.b16 %v361
    %v1826 = vunpack.c.h.b16 %v361
    %v1827 = vunpack.c.l.b16 %v362
    %v1828 = vunpack.c.h.b16 %v362
    %v1829 = vunpack.c.l.b16 %v363
    %v1830 = vunpack.c.h.b16 %v363
    %v1831 = vunpack.c.l.b16 %v364
    %v1832 = vunpack.c.h.b16 %v364
    %v1833 = vunpack.c.l.b16 %v365
    %v1834 = vunpack.c.h.b16 %v365
    %v1835 = vunpack.c.l.b16 %v366
    %v1836 = vunpack.c.h.b16 %v366
    %v1837 = vunpack.c.l.b16 %v367
    %v1838 = vunpack.c.h.b16 %v367
    %v1839 = vunpack.c.l.b16 %v368
    %v1840 = vunpack.c.h.b16 %v368
    %v1841 = vunpack.c.l.b16 %v369
    %v1842 = vunpack.c.h.b16 %v369
    %v1843 = vunpack.c.l.b16 %v370
    %v1844 = vunpack.c.h.b16 %v370
    %v1845 = vunpack.c.l.b16 %v371
    %v1846 = vunpack.c.h.b16 %v371
    %v1847 = vunpack.c.l.b16 %v372
    %v1848 = vunpack.c.h.b16 %v372
    %v1849 = vunpack.c.l.b16 %v373
    %v1850 = vunpack.c.h.b16 %v373
    %v1851 = vunpack.c.l.b16 %v374
    %v1852 = vunpack.c.h.b16 %v374
    %v1853 = vunpack.c.l.b16 %v375
    %v1854 = vunpack.c.h.b16 %v375
    %v1855 = vunpack.c.l.b16 %v376
    %v1856 = vunpack.c.h.b16 %v376
    %v1857 = vunpack.c.l.b16 %v377
    %v1858 = vunpack.c.h.b16 %v377
    %v1859 = vunpack.c.l.b16 %v378
    %v1860 = vunpack.c.h.b16 %v378
    %v1861 = vunpack.c.l.b16 %v379
    %v1862 = vunpack.c.h.b16 %v379
    %v1863 = vunpack.c.l.b16 %v380
    %v1864 = vunpack.c.h.b16 %v380
    %v1865 = vunpack.c.l.b16 %v381
    %v1866 = vunpack.c.h.b16 %v381
    %v1867 = vunpack.c.l.b16 %v382
    %v1868 = vunpack.c.h.b16 %v382
    %v1869 = vunpack.c.l.b16 %v383
    %v1870 = vunpack.c.h.b16 %v383
    %v1871 = vunpack.c.l.b16 %v384
    %v1872 = vunpack.c.h.b16 %v384
    %v1873 = vunpack.c.l.b16 %v385
    %v1874 = vunpack.c.h.b16 %v385
    %v1875 = vunpack.c.l.b16 %v386
    %v1876 = vunpack.c.h.b16 %v386
    %v1877 = vunpack.c.l.b16 %v387
    %v1878 = vunpack.c.h.b16 %v387
    %v1879 = vunpack.c.l.b16 %v388
    %v1880 = vunpack.c.h.b16 %v388
    %v1881 = vunpack.c.l.b16 %v389
    %v1882 = vunpack.c.h.b16 %v389
    %v1883 = vunpack.c.l.b16 %v390
    %v1884 = vunpack.c.h.b16 %v390
    %v1885 = vunpack.c.l.b16 %v391
    %v1886 = vunpack.c.h.b16 %v391
    %v1887 = vunpack.c.l.b16 %v392
    %v1888 = vunpack.c.h.b16 %v392
    %v1889 = vunpack.c.l.b16 %v393
    %v1890 = vunpack.c.h.b16 %v393
    %v1891 = vunpack.c.l.b16 %v394
    %v1892 = vunpack.c.h.b16 %v394
    %v1893 = vunpack.c.l.b16 %v395
    %v1894 = vunpack.c.h.b16 %v395
    %v1895 = vunpack.c.l.b16 %v396
    %v1896 = vunpack.c.h.b16 %v396
    %v1897 = vunpack.c.l.b16 %v397
    %v1898 = vunpack.c.h.b16 %v397
    %v1899 = vunpack.c.l.b16 %v398
    %v1900 = vunpack.c.h.b16 %v398
    %v1901 = vunpack.c.l.b16 %v399
    %v1902 = vunpack.c.h.b16 %v399
    %v1903 = vunpack.c.l.b16 %v400
    %v1904 = vunpack.c.h.b16 %v400
    %v1905 = vunpack.c.l.b16 %v401
    %v1906 = vunpack.c.h.b16 %v401
    %v1907 = vunpack.c.l.b16 %v402
    %v1908 = vunpack.c.h.b16 %v402
    %v1909 = vunpack.c.l.b16 %v403
    %v1910 = vunpack.c.h.b16 %v403
    %v1911 = vunpack.c.l.b16 %v404
    %v1912 = vunpack.c.h.b16 %v404
    %v1913 = vunpack.c.l.b16 %v405
    %v1914 = vunpack.c.h.b16 %v405
    %v1915 = vunpack.c.l.b16 %v406
    %v1916 = vunpack.c.h.b16 %v406
    %v1917 = vunpack.c.l.b16 %v407
    %v1918 = vunpack.c.h.b16 %v407
    %v1919 = vunpack.c.l.b16 %v408
    %v1920 = vunpack.c.h.b16 %v408
    %v1921 = vunpack.c.l.b16 %v409
    %v1922 = vunpack.c.h.b16 %v409
    %v1923 = vunpack.c.l.b16 %v410
    %v1924 = vunpack.c.h.b16 %v410
    %v1925 = vunpack.c.l.b16 %v411
    %v1926 = vunpack.c.h.b16 %v411
    %v1927 = vunpack.c.l.b16 %v412
    %v1928 = vunpack.c.h.b16 %v412
    %v1929 = vunpack.c.l.b16 %v413
    %v1930 = vunpack.c.h.b16 %v413
    %v1931 = vunpack.c.l.b16 %v414
    %v1932 = vunpack.c.h.b16 %v414
    %v1933 = vunpack.c.l.b16 %v415
    %v1934 = vunpack.c.h.b16 %v415
    %v1935 = vunpack.c.l.b16 %v416
    %v1936 = vunpack.c.h.b16 %v416
    %v1937 = vunpack.c.l.b16 %v417
    %v1938 = vunpack.c.h.b16 %v417
    %v1939 = vunpack.c.l.b16 %v418
    %v1940 = vunpack.c.h.b16 %v418
    %v1941 = vunpack.c.l.b16 %v419
    %v1942 = vunpack.c.h.b16 %v419
    %v1943 = vunpack.c.l.b16 %v420
    %v1944 = vunpack.c.h.b16 %v420
    %v1945 = vunpack.c.l.b16 %v421
    %v1946 = vunpack.c.h.b16 %v421
    %v1947 = vunpack.c.l.b16 %v422
    %v1948 = vunpack.c.h.b16 %v422
    %v1949 = vunpack.c.l.b16 %v423
    %v1950 = vunpack.c.h.b16 %v423
    %v1951 = vunpack.c.l.b16 %v424
    %v1952 = vunpack.c.h.b16 %v424
    %v1953 = vunpack.c.l.b16 %v425
    %v1954 = vunpack.c.h.b16 %v425
    %v1955 = vunpack.c.l.b16 %v426
    %v1956 = vunpack.c.h.b16 %v426
    %v1957 = vunpack.c.l.b16 %v427
    %v1958 = vunpack.c.h.b16 %v427
    %v1959 = vunpack.c.l.b16 %v428
    %v1960 = vunpack.c.h.b16 %v428
    %v1961 = vunpack.c.l.b16 %v429
    %v1962 = vunpack.c.h.b16 %v429
    %v1963 = vunpack.c.l.b16 %v430
    %v1964 = vunpack.c.h.b16 %v430
    %v1965 = vunpack.c.l.b16 %v431
    %v1966 = vunpack.c.h.b16 %v431
    %v1967 = vunpack.c.l.b16 %v432
    %v1968 = vunpack.c.h.b16 %v432
    %v1969 = vunpack.c.l.b16 %v433
    %v1970 = vunpack.c.h.b16 %v433
    %v1971 = vunpack.c.l.b16 %v434
    %v1972 = vunpack.c.h.b16 %v434
    %v1973 = vunpack.c.l.b16 %v435
    %v1974 = vunpack.c.h.b16 %v435
    %v1975 = vunpack.c.l.b16 %v436
    %v1976 = vunpack.c.h.b16 %v436
    %v1977 = vunpack.c.l.b16 %v437
    %v1978 = vunpack.c.h.b16 %v437
    %v1979 = vunpack.c.l.b16 %v438
    %v1980 = vunpack.c.h.b16 %v438
    %v1981 = vunpack.c.l.b16 %v439
    %v1982 = vunpack.c.h.b16 %v439
    %v1983 = vunpack.c.l.b16 %v440
    %v1984 = vunpack.c.h.b16 %v440
    %v1985 = vunpack.c.l.b16 %v441
    %v1986 = vunpack.c.h.b16 %v441
    %v1987 = vunpack.c.l.b16 %v442
    %v1988 = vunpack.c.h.b16 %v442
    %v1989 = vunpack.c.l.b16 %v443
    %v1990 = vunpack.c.h.b16 %v443
    %v1991 = vunpack.c.l.b16 %v444
    %v1992 = vunpack.c.h.b16 %v444
    %v1993 = vunpack.c.l.b16 %v445
    %v1994 = vunpack.c.h.b16 %v445
    %v1995 = vunpack.c.l.b16 %v446
    %v1996 = vunpack.c.h.b16 %v446
    %v1997 = vunpack.c.l.b16 %v447
    %v1998 = vunpack.c.h.b16 %v447
    %v1999 = vunpack.c.l.b16 %v448
    %v2000 = vunpack.c.h.b16 %v448
    %v2001 = vunpack.c.l.b16 %v449
    %v2002 = vunpack.c.h.b16 %v449
    %v2003 = vunpack.c.l.b16 %v450
    %v2004 = vunpack.c.h.b16 %v450
    %v2005 = vunpack.c.l.b16 %v451
    %v2006 = vunpack.c.h.b16 %v451
    %v2007 = vunpack.c.l.b16 %v452
    %v2008 = vunpack.c.h.b16 %v452
    %v2009 = vunpack.c.l.b16 %v453
    %v2010 = vunpack.c.h.b16 %v453
    %v2011 = vunpack.c.l.b16 %v454
    %v2012 = vunpack.c.h.b16 %v454
    %v2013 = vunpack.c.l.b16 %v455
    %v2014 = vunpack.c.h.b16 %v455
    %v2015 = vunpack.c.l.b16 %v456
    %v2016 = vunpack.c.h.b16 %v456
    %v2017 = vunpack.c.l.b16 %v457
    %v2018 = vunpack.c.h.b16 %v457
    %v2019 = vunpack.c.l.b16 %v458
    %v2020 = vunpack.c.h.b16 %v458
    %v2021 = vunpack.c.l.b16 %v459
    %v2022 = vunpack.c.h.b16 %v459
    %v2023 = vunpack.c.l.b16 %v460
    %v2024 = vunpack.c.h.b16 %v460
    %v2025 = vunpack.c.l.b16 %v461
    %v2026 = vunpack.c.h.b16 %v461
    %v2027 = vunpack.c.l.b16 %v462
    %v2028 = vunpack.c.h.b16 %v462
    %v2029 = vunpack.c.l.b16 %v463
    %v2030 = vunpack.c.h.b16 %v463
    %v2031 = vunpack.c.l.b16 %v464
    %v2032 = vunpack.c.h.b16 %v464
    %v2033 = vunpack.c.l.b16 %v465
    %v2034 = vunpack.c.h.b16 %v465
    %v2035 = vunpack.c.l.b16 %v466
    %v2036 = vunpack.c.h.b16 %v466
    %v2037 = vunpack.c.l.b16 %v467
    %v2038 = vunpack.c.h.b16 %v467
    %v2039 = vunpack.c.l.b16 %v468
    %v2040 = vunpack.c.h.b16 %v468
    %v2041 = vunpack.c.l.b16 %v469
    %v2042 = vunpack.c.h.b16 %v469
    %v2043 = vunpack.c.l.b16 %v470
    %v2044 = vunpack.c.h.b16 %v470
    %v2045 = vunpack.c.l.b16 %v471
    %v2046 = vunpack.c.h.b16 %v471
    %v2047 = vunpack.c.l.b16 %v472
    %v2048 = vunpack.c.h.b16 %v472
    %v2049 = vunpack.c.l.b16 %v473
    %v2050 = vunpack.c.h.b16 %v473
    %v2051 = vunpack.c.l.b16 %v474
    %v2052 = vunpack.c.h.b16 %v474
    %v2053 = vunpack.c.l.b16 %v475
    %v2054 = vunpack.c.h.b16 %v475
    %v2055 = vunpack.c.l.b16 %v476
    %v2056 = vunpack.c.h.b16 %v476
    %v2057 = vunpack.c.l.b16 %v477
    %v2058 = vunpack.c.h.b16 %v477
    %v2059 = vunpack.c.l.b16 %v478
    %v2060 = vunpack.c.h.b16 %v478
    %v2061 = vunpack.c.l.b16 %v479
    %v2062 = vunpack.c.h.b16 %v479
    %v2063 = vunpack.c.l.b16 %v480
    %v2064 = vunpack.c.h.b16 %v480
    %v2065 = vunpack.c.l.b16 %v481
    %v2066 = vunpack.c.h.b16 %v481
    %v2067 = vunpack.c.l.b16 %v482
    %v2068 = vunpack.c.h.b16 %v482
    %v2069 = vunpack.c.l.b16 %v483
    %v2070 = vunpack.c.h.b16 %v483
    %v2071 = vunpack.c.l.b16 %v484
    %v2072 = vunpack.c.h.b16 %v484
    %v2073 = vunpack.c.l.b16 %v485
    %v2074 = vunpack.c.h.b16 %v485
    %v2075 = vunpack.c.l.b16 %v486
    %v2076 = vunpack.c.h.b16 %v486
    %v2077 = vunpack.c.l.b16 %v487
    %v2078 = vunpack.c.h.b16 %v487
    %v2079 = vunpack.c.l.b16 %v488
    %v2080 = vunpack.c.h.b16 %v488
    %v2081 = vunpack.c.l.b16 %v489
    %v2082 = vunpack.c.h.b16 %v489
    %v2083 = vunpack.c.l.b16 %v490
    %v2084 = vunpack.c.h.b16 %v490
    %v2085 = vunpack.c.l.b16 %v491
    %v2086 = vunpack.c.h.b16 %v491
    %v2087 = vunpack.c.l.b16 %v492
    %v2088 = vunpack.c.h.b16 %v492
    %v2089 = vunpack.c.l.b16 %v493
    %v2090 = vunpack.c.h.b16 %v493
    %v2091 = vunpack.c.l.b16 %v494
    %v2092 = vunpack.c.h.b16 %v494
    %v2093 = vunpack.c.l.b16 %v495
    %v2094 = vunpack.c.h.b16 %v495
    %v2095 = vunpack.c.l.b16 %v496
    %v2096 = vunpack.c.h.b16 %v496
    %v2097 = vunpack.c.l.b16 %v497
    %v2098 = vunpack.c.h.b16 %v497
    %v2099 = vunpack.c.l.b16 %v498
    %v2100 = vunpack.c.h.b16 %v498
    %v2101 = vunpack.c.l.b16 %v499
    %v2102 = vunpack.c.h.b16 %v499
    %v2103 = vunpack.c.l.b16 %v500
    %v2104 = vunpack.c.h.b16 %v500
    %v2105 = vunpack.c.l.b16 %v501
    %v2106 = vunpack.c.h.b16 %v501
    %v2107 = vunpack.c.l.b16 %v502
    %v2108 = vunpack.c.h.b16 %v502
    %v2109 = vunpack.c.l.b16 %v503
    %v2110 = vunpack.c.h.b16 %v503
    %v2111 = vunpack.c.l.b16 %v504
    %v2112 = vunpack.c.h.b16 %v504
    %v2113 = vunpack.c.l.b16 %v505
    %v2114 = vunpack.c.h.b16 %v505
    %v2115 = vunpack.c.l.b16 %v506
    %v2116 = vunpack.c.h.b16 %v506
    %v2117 = vunpack.c.l.b16 %v507
    %v2118 = vunpack.c.h.b16 %v507
    %v2119 = vunpack.c.l.b16 %v508
    %v2120 = vunpack.c.h.b16 %v508
    %v2121 = vunpack.c.l.b16 %v509
    %v2122 = vunpack.c.h.b16 %v509
    %v2123 = vunpack.c.l.b16 %v510
    %v2124 = vunpack.c.h.b16 %v510
    %v2125 = vunpack.c.l.b16 %v511
    %v2126 = vunpack.c.h.b16 %v511
    %v2127 = vunpack.c.l.b16 %v512
    %v2128 = vunpack.c.h.b16 %v512
    %v2129 = vunpack.c.l.b16 %v513
    %v2130 = vunpack.c.h.b16 %v513
    %v2131 = vunpack.c.l.b16 %v514
    %v2132 = vunpack.c.h.b16 %v514
    %v2133 = vunpack.c.l.b16 %v515
    %v2134 = vunpack.c.h.b16 %v515
    %v2135 = vunpack.c.l.b16 %v516
    %v2136 = vunpack.c.h.b16 %v516
    %v2137 = vunpack.c.l.b16 %v517
    %v2138 = vunpack.c.h.b16 %v517
    %v2139 = vunpack.c.l.b16 %v518
    %v2140 = vunpack.c.h.b16 %v518
    %v2141 = vunpack.c.l.b16 %v519
    %v2142 = vunpack.c.h.b16 %v519
    %v2143 = vunpack.c.l.b16 %v520
    %v2144 = vunpack.c.h.b16 %v520
    %v2145 = vunpack.c.l.b16 %v521
    %v2146 = vunpack.c.h.b16 %v521
    %v2147 = vunpack.c.l.b16 %v522
    %v2148 = vunpack.c.h.b16 %v522
    %v2149 = vunpack.c.l.b16 %v523
    %v2150 = vunpack.c.h.b16 %v523
    %v2151 = vunpack.c.l.b16 %v524
    %v2152 = vunpack.c.h.b16 %v524
    %v2153 = vunpack.c.l.b16 %v525
    %v2154 = vunpack.c.h.b16 %v525
    %v2155 = vunpack.c.l.b16 %v526
    %v2156 = vunpack.c.h.b16 %v526
    %v2157 = vunpack.c.l.b16 %v527
    %v2158 = vunpack.c.h.b16 %v527
    %v2159 = vunpack.c.l.b16 %v528
    %v2160 = vunpack.c.h.b16 %v528
    %v2161 = vunpack.c.l.b16 %v529
    %v2162 = vunpack.c.h.b16 %v529
    %v2163 = vunpack.c.l.b16 %v530
    %v2164 = vunpack.c.h.b16 %v530
    %v2165 = vunpack.c.l.b16 %v531
    %v2166 = vunpack.c.h.b16 %v531
    %v2167 = vunpack.c.l.b16 %v532
    %v2168 = vunpack.c.h.b16 %v532
    %v2169 = vunpack.c.l.b16 %v533
    %v2170 = vunpack.c.h.b16 %v533
    %v2171 = vunpack.c.l.b16 %v534
    %v2172 = vunpack.c.h.b16 %v534
    %v2173 = vunpack.c.l.b16 %v535
    %v2174 = vunpack.c.h.b16 %v535
    %v2175 = vunpack.c.l.b16 %v536
    %v2176 = vunpack.c.h.b16 %v536
    %v2177 = vpack.c.b16 %v1169, %v1153
    %v2178 = vpack.c.b16 %v1170, %v1154
    %v2179 = vpack.c.b16 %v1171, %v1155
    %v2180 = vpack.c.b16 %v1172, %v1156
    %v2181 = vpack.c.b16 %v1173, %v1157
    %v2182 = vpack.c.b16 %v1174, %v1158
    %v2183 = vpack.c.b16 %v1175, %v1159
    %v2184 = vpack.c.b16 %v1176, %v1160
    %v2185 = vpack.c.b16 %v1177, %v1161
    %v2186 = vpack.c.b16 %v1178, %v1162
    %v2187 = vpack.c.b16 %v1179, %v1163
    %v2188 = vpack.c.b16 %v1180, %v1164
    %v2189 = vpack.c.b16 %v1181, %v1165
    %v2190 = vpack.c.b16 %v1182, %v1166
    %v2191 = vpack.c.b16 %v1183, %v1167
    %v2192 = vpack.c.b16 %v1184, %v1168
    %v2193 = vpack.c.b16 %v1201, %v1185
    %v2194 = vpack.c.b16 %v1202, %v1186
    %v2195 = vpack.c.b16 %v1203, %v1187
    %v2196 = vpack.c.b16 %v1204, %v1188
    %v2197 = vpack.c.b16 %v1205, %v1189
    %v2198 = vpack.c.b16 %v1206, %v1190
    %v2199 = vpack.c.b16 %v1207, %v1191
    %v2200 = vpack.c.b16 %v1208, %v1192
    %v2201 = vpack.c.b16 %v1209, %v1193
    %v2202 = vpack.c.b16 %v1210, %v1194
    %v2203 = vpack.c.b16 %v1211, %v1195
    %v2204 = vpack.c.b16 %v1212, %v1196
    %v2205 = vpack.c.b16 %v1213, %v1197
    %v2206 = vpack.c.b16 %v1214, %v1198
    %v2207 = vpack.c.b16 %v1215, %v1199
    %v2208 = vpack.c.b16 %v1216, %v1200
    %v2209 = vpack.c.b16 %v1233, %v1217
    %v2210 = vpack.c.b16 %v1234, %v1218
    %v2211 = vpack.c.b16 %v1235, %v1219
    %v2212 = vpack.c.b16 %v1236, %v1220
    %v2213 = vpack.c.b16 %v1237, %v1221
    %v2214 = vpack.c.b16 %v1238, %v1222
    %v2215 = vpack.c.b16 %v1239, %v1223
    %v2216 = vpack.c.b16 %v1240, %v1224
    %v2217 = vpack.c.b16 %v1241, %v1225
    %v2218 = vpack.c.b16 %v1242, %v1226
    %v2219 = vpack.c.b16 %v1243, %v1227
    %v2220 = vpack.c.b16 %v1244, %v1228
    %v2221 = vpack.c.b16 %v1245, %v1229
    %v2222 = vpack.c.b16 %v1246, %v1230
    %v2223 = vpack.c.b16 %v1247, %v1231
    %v2224 = vpack.c.b16 %v1248, %v1232
    %v2225 = vpack.c.b16 %v1265, %v1249
    %v2226 = vpack.c.b16 %v1266, %v1250
    %v2227 = vpack.c.b16 %v1267, %v1251
    %v2228 = vpack.c.b16 %v1268, %v1252
    %v2229 = vpack.c.b16 %v1269, %v1253
    %v2230 = vpack.c.b16 %v1270, %v1254
    %v2231 = vpack.c.b16 %v1271, %v1255
    %v2232 = vpack.c.b16 %v1272, %v1256
    %v2233 = vpack.c.b16 %v1273, %v1257
    %v2234 = vpack.c.b16 %v1274, %v1258
    %v2235 = vpack.c.b16 %v1275, %v1259
    %v2236 = vpack.c.b16 %v1276, %v1260
    %v2237 = vpack.c.b16 %v1277, %v1261
    %v2238 = vpack.c.b16 %v1278, %v1262
    %v2239 = vpack.c.b16 %v1279, %v1263
    %v2240 = vpack.c.b16 %v1280, %v1264
    %v2241 = vpack.c.b16 %v1297, %v1281
    %v2242 = vpack.c.b16 %v1298, %v1282
    %v2243 = vpack.c.b16 %v1299, %v1283
    %v2244 = vpack.c.b16 %v1300, %v1284
    %v2245 = vpack.c.b16 %v1301, %v1285
    %v2246 = vpack.c.b16 %v1302, %v1286
    %v2247 = vpack.c.b16 %v1303, %v1287
    %v2248 = vpack.c.b16 %v1304, %v1288
    %v2249 = vpack.c.b16 %v1305, %v1289
    %v2250 = vpack.c.b16 %v1306, %v1290
    %v2251 = vpack.c.b16 %v1307, %v1291
    %v2252 = vpack.c.b16 %v1308, %v1292
    %v2253 = vpack.c.b16 %v1309, %v1293
    %v2254 = vpack.c.b16 %v1310, %v1294
    %v2255 = vpack.c.b16 %v1311, %v1295
    %v2256 = vpack.c.b16 %v1312, %v1296
    %v2257 = vpack.c.b16 %v1329, %v1313
    %v2258 = vpack.c.b16 %v1330, %v1314
    %v2259 = vpack.c.b16 %v1331, %v1315
    %v2260 = vpack.c.b16 %v1332, %v1316
    %v2261 = vpack.c.b16 %v1333, %v1317
    %v2262 = vpack.c.b16 %v1334, %v1318
    %v2263 = vpack.c.b16 %v1335, %v1319
    %v2264 = vpack.c.b16 %v1336, %v1320
    %v2265 = vpack.c.b16 %v1337, %v1321
    %v2266 = vpack.c.b16 %v1338, %v1322
    %v2267 = vpack.c.b16 %v1339, %v1323
    %v2268 = vpack.c.b16 %v1340, %v1324
    %v2269 = vpack.c.b16 %v1341, %v1325
    %v2270 = vpack.c.b16 %v1342, %v1326
    %v2271 = vpack.c.b16 %v1343, %v1327
    %v2272 = vpack.c.b16 %v1344, %v1328
    %v2273 = vpack.c.b16 %v1361, %v1345
    %v2274 = vpack.c.b16 %v1362, %v1346
    %v2275 = vpack.c.b16 %v1363, %v1347
    %v2276 = vpack.c.b16 %v1364, %v1348
    %v2277 = vpack.c.b16 %v1365, %v1349
    %v2278 = vpack.c.b16 %v1366, %v1350
    %v2279 = vpack.c.b16 %v1367, %v1351
    %v2280 = vpack.c.b16 %v1368, %v1352
    %v2281 = vpack.c.b16 %v1369, %v1353
    %v2282 = vpack.c.b16 %v1370, %v1354
    %v2283 = vpack.c.b16 %v1371, %v1355
    %v2284 = vpack.c.b16 %v1372, %v1356
    %v2285 = vpack.c.b16 %v1373, %v1357
    %v2286 = vpack.c.b16 %v1374, %v1358
    %v2287 = vpack.c.b16 %v1375, %v1359
    %v2288 = vpack.c.b16 %v1376, %v1360
    %v2289 = vpack.c.b16 %v1393, %v1377
    %v2290 = vpack.c.b16 %v1394, %v1378
    %v2291 = vpack.c.b16 %v1395, %v1379
    %v2292 = vpack.c.b16 %v1396, %v1380
    %v2293 = vpack.c.b16 %v1397, %v1381
    %v2294 = vpack.c.b16 %v1398, %v1382
    %v2295 = vpack.c.b16 %v1399, %v1383
    %v2296 = vpack.c.b16 %v1400, %v1384
    %v2297 = vpack.c.b16 %v1401, %v1385
    %v2298 = vpack.c.b16 %v1402, %v1386
    %v2299 = vpack.c.b16 %v1403, %v1387
    %v2300 = vpack.c.b16 %v1404, %v1388
    %v2301 = vpack.c.b16 %v1405, %v1389
    %v2302 = vpack.c.b16 %v1406, %v1390
    %v2303 = vpack.c.b16 %v1407, %v1391
    %v2304 = vpack.c.b16 %v1408, %v1392
    %v2305 = vpack.c.b16 %v1425, %v1409
    %v2306 = vpack.c.b16 %v1426, %v1410
    %v2307 = vpack.c.b16 %v1427, %v1411
    %v2308 = vpack.c.b16 %v1428, %v1412
    %v2309 = vpack.c.b16 %v1429, %v1413
    %v2310 = vpack.c.b16 %v1430, %v1414
    %v2311 = vpack.c.b16 %v1431, %v1415
    %v2312 = vpack.c.b16 %v1432, %v1416
    %v2313 = vpack.c.b16 %v1433, %v1417
    %v2314 = vpack.c.b16 %v1434, %v1418
    %v2315 = vpack.c.b16 %v1435, %v1419
    %v2316 = vpack.c.b16 %v1436, %v1420
    %v2317 = vpack.c.b16 %v1437, %v1421
    %v2318 = vpack.c.b16 %v1438, %v1422
    %v2319 = vpack.c.b16 %v1439, %v1423
    %v2320 = vpack.c.b16 %v1440, %v1424
    %v2321 = vpack.c.b16 %v1457, %v1441
    %v2322 = vpack.c.b16 %v1458, %v1442
    %v2323 = vpack.c.b16 %v1459, %v1443
    %v2324 = vpack.c.b16 %v1460, %v1444
    %v2325 = vpack.c.b16 %v1461, %v1445
    %v2326 = vpack.c.b16 %v1462, %v1446
    %v2327 = vpack.c.b16 %v1463, %v1447
    %v2328 = vpack.c.b16 %v1464, %v1448
    %v2329 = vpack.c.b16 %v1465, %v1449
    %v2330 = vpack.c.b16 %v1466, %v1450
    %v2331 = vpack.c.b16 %v1467, %v1451
    %v2332 = vpack.c.b16 %v1468, %v1452
    %v2333 = vpack.c.b16 %v1469, %v1453
    %v2334 = vpack.c.b16 %v1470, %v1454
    %v2335 = vpack.c.b16 %v1471, %v1455
    %v2336 = vpack.c.b16 %v1472, %v1456
    %v2337 = vpack.c.b16 %v1489, %v1473
    %v2338 = vpack.c.b16 %v1490, %v1474
    %v2339 = vpack.c.b16 %v1491, %v1475
    %v2340 = vpack.c.b16 %v1492, %v1476
    %v2341 = vpack.c.b16 %v1493, %v1477
    %v2342 = vpack.c.b16 %v1494, %v1478
    %v2343 = vpack.c.b16 %v1495, %v1479
    %v2344 = vpack.c.b16 %v1496, %v1480
    %v2345 = vpack.c.b16 %v1497, %v1481
    %v2346 = vpack.c.b16 %v1498, %v1482
    %v2347 = vpack.c.b16 %v1499, %v1483
    %v2348 = vpack.c.b16 %v1500, %v1484
    %v2349 = vpack.c.b16 %v1501, %v1485
    %v2350 = vpack.c.b16 %v1502, %v1486
    %v2351 = vpack.c.b16 %v1503, %v1487
    %v2352 = vpack.c.b16 %v1504, %v1488
    %v2353 = vpack.c.b16 %v1521, %v1505
    %v2354 = vpack.c.b16 %v1522, %v1506
    %v2355 = vpack.c.b16 %v1523, %v1507
    %v2356 = vpack.c.b16 %v1524, %v1508
    %v2357 = vpack.c.b16 %v1525, %v1509
    %v2358 = vpack.c.b16 %v1526, %v1510
    %v2359 = vpack.c.b16 %v1527, %v1511
    %v2360 = vpack.c.b16 %v1528, %v1512
    %v2361 = vpack.c.b16 %v1529, %v1513
    %v2362 = vpack.c.b16 %v1530, %v1514
    %v2363 = vpack.c.b16 %v1531, %v1515
    %v2364 = vpack.c.b16 %v1532, %v1516
    %v2365 = vpack.c.b16 %v1533, %v1517
    %v2366 = vpack.c.b16 %v1534, %v1518
    %v2367 = vpack.c.b16 %v1535, %v1519
    %v2368 = vpack.c.b16 %v1536, %v1520
    %v2369 = vpack.c.b16 %v1553, %v1537
    %v2370 = vpack.c.b16 %v1554, %v1538
    %v2371 = vpack.c.b16 %v1555, %v1539
    %v2372 = vpack.c.b16 %v1556, %v1540
    %v2373 = vpack.c.b16 %v1557, %v1541
    %v2374 = vpack.c.b16 %v1558, %v1542
    %v2375 = vpack.c.b16 %v1559, %v1543
    %v2376 = vpack.c.b16 %v1560, %v1544
    %v2377 = vpack.c.b16 %v1561, %v1545
    %v2378 = vpack.c.b16 %v1562, %v1546
    %v2379 = vpack.c.b16 %v1563, %v1547
    %v2380 = vpack.c.b16 %v1564, %v1548
    %v2381 = vpack.c.b16 %v1565, %v1549
    %v2382 = vpack.c.b16 %v1566, %v1550
    %v2383 = vpack.c.b16 %v1567, %v1551
    %v2384 = vpack.c.b16 %v1568, %v1552
    %v2385 = vpack.c.b16 %v1585, %v1569
    %v2386 = vpack.c.b16 %v1586, %v1570
    %v2387 = vpack.c.b16 %v1587, %v1571
    %v2388 = vpack.c.b16 %v1588, %v1572
    %v2389 = vpack.c.b16 %v1589, %v1573
    %v2390 = vpack.c.b16 %v1590, %v1574
    %v2391 = vpack.c.b16 %v1591, %v1575
    %v2392 = vpack.c.b16 %v1592, %v1576
    %v2393 = vpack.c.b16 %v1593, %v1577
    %v2394 = vpack.c.b16 %v1594, %v1578
    %v2395 = vpack.c.b16 %v1595, %v1579
    %v2396 = vpack.c.b16 %v1596, %v1580
    %v2397 = vpack.c.b16 %v1597, %v1581
    %v2398 = vpack.c.b16 %v1598, %v1582
    %v2399 = vpack.c.b16 %v1599, %v1583
    %v2400 = vpack.c.b16 %v1600, %v1584
    %v2401 = vpack.c.b16 %v1617, %v1601
    %v2402 = vpack.c.b16 %v1618, %v1602
    %v2403 = vpack.c.b16 %v1619, %v1603
    %v2404 = vpack.c.b16 %v1620, %v1604
    %v2405 = vpack.c.b16 %v1621, %v1605
    %v2406 = vpack.c.b16 %v1622, %v1606
    %v2407 = vpack.c.b16 %v1623, %v1607
    %v2408 = vpack.c.b16 %v1624, %v1608
    %v2409 = vpack.c.b16 %v1625, %v1609
    %v2410 = vpack.c.b16 %v1626, %v1610
    %v2411 = vpack.c.b16 %v1627, %v1611
    %v2412 = vpack.c.b16 %v1628, %v1612
    %v2413 = vpack.c.b16 %v1629, %v1613
    %v2414 = vpack.c.b16 %v1630, %v1614
    %v2415 = vpack.c.b16 %v1631, %v1615
    %v2416 = vpack.c.b16 %v1632, %v1616
    %v2417 = vpack.c.b16 %v1649, %v1633
    %v2418 = vpack.c.b16 %v1650, %v1634
    %v2419 = vpack.c.b16 %v1651, %v1635
    %v2420 = vpack.c.b16 %v1652, %v1636
    %v2421 = vpack.c.b16 %v1653, %v1637
    %v2422 = vpack.c.b16 %v1654, %v1638
    %v2423 = vpack.c.b16 %v1655, %v1639
    %v2424 = vpack.c.b16 %v1656, %v1640
    %v2425 = vpack.c.b16 %v1657, %v1641
    %v2426 = vpack.c.b16 %v1658, %v1642
    %v2427 = vpack.c.b16 %v1659, %v1643
    %v2428 = vpack.c.b16 %v1660, %v1644
    %v2429 = vpack.c.b16 %v1661, %v1645
    %v2430 = vpack.c.b16 %v1662, %v1646
    %v2431 = vpack.c.b16 %v1663, %v1647
    %v2432 = vpack.c.b16 %v1664, %v1648
    %v2433 = vpack.c.b16 %v1681, %v1665
    %v2434 = vpack.c.b16 %v1682, %v1666
    %v2435 = vpack.c.b16 %v1683, %v1667
    %v2436 = vpack.c.b16 %v1684, %v1668
    %v2437 = vpack.c.b16 %v1685, %v1669
    %v2438 = vpack.c.b16 %v1686, %v1670
    %v2439 = vpack.c.b16 %v1687, %v1671
    %v2440 = vpack.c.b16 %v1688, %v1672
    %v2441 = vpack.c.b16 %v1689, %v1673
    %v2442 = vpack.c.b16 %v1690, %v1674
    %v2443 = vpack.c.b16 %v1691, %v1675
    %v2444 = vpack.c.b16 %v1692, %v1676
    %v2445 = vpack.c.b16 %v1693, %v1677
    %v2446 = vpack.c.b16 %v1694, %v1678
    %v2447 = vpack.c.b16 %v1695, %v1679
    %v2448 = vpack.c.b16 %v1696, %v1680
    %v2449 = vpack.c.b16 %v1713, %v1697
    %v2450 = vpack.c.b16 %v1714, %v1698
    %v2451 = vpack.c.b16 %v1715, %v1699
    %v2452 = vpack.c.b16 %v1716, %v1700
    %v2453 = vpack.c.b16 %v1717, %v1701
    %v2454 = vpack.c.b16 %v1718, %v1702
    %v2455 = vpack.c.b16 %v1719, %v1703
    %v2456 = vpack.c.b16 %v1720, %v1704
    %v2457 = vpack.c.b16 %v1721, %v1705
    %v2458 = vpack.c.b16 %v1722, %v1706
    %v2459 = vpack.c.b16 %v1723, %v1707
    %v2460 = vpack.c.b16 %v1724, %v1708
    %v2461 = vpack.c.b16 %v1725, %v1709
    %v2462 = vpack.c.b16 %v1726, %v1710
    %v2463 = vpack.c.b16 %v1727, %v1711
    %v2464 = vpack.c.b16 %v1728, %v1712
    %v2465 = vpack.c.b16 %v1745, %v1729
    %v2466 = vpack.c.b16 %v1746, %v1730
    %v2467 = vpack.c.b16 %v1747, %v1731
    %v2468 = vpack.c.b16 %v1748, %v1732
    %v2469 = vpack.c.b16 %v1749, %v1733
    %v2470 = vpack.c.b16 %v1750, %v1734
    %v2471 = vpack.c.b16 %v1751, %v1735
    %v2472 = vpack.c.b16 %v1752, %v1736
    %v2473 = vpack.c.b16 %v1753, %v1737
    %v2474 = vpack.c.b16 %v1754, %v1738
    %v2475 = vpack.c.b16 %v1755, %v1739
    %v2476 = vpack.c.b16 %v1756, %v1740
    %v2477 = vpack.c.b16 %v1757, %v1741
    %v2478 = vpack.c.b16 %v1758, %v1742
    %v2479 = vpack.c.b16 %v1759, %v1743
    %v2480 = vpack.c.b16 %v1760, %v1744
    %v2481 = vpack.c.b16 %v1777, %v1761
    %v2482 = vpack.c.b16 %v1778, %v1762
    %v2483 = vpack.c.b16 %v1779, %v1763
    %v2484 = vpack.c.b16 %v1780, %v1764
    %v2485 = vpack.c.b16 %v1781, %v1765
    %v2486 = vpack.c.b16 %v1782, %v1766
    %v2487 = vpack.c.b16 %v1783, %v1767
    %v2488 = vpack.c.b16 %v1784, %v1768
    %v2489 = vpack.c.b16 %v1785, %v1769
    %v2490 = vpack.c.b16 %v1786, %v1770
    %v2491 = vpack.c.b16 %v1787, %v1771
    %v2492 = vpack.c.b16 %v1788, %v1772
    %v2493 = vpack.c.b16 %v1789, %v1773
    %v2494 = vpack.c.b16 %v1790, %v1774
    %v2495 = vpack.c.b16 %v1791, %v1775
    %v2496 = vpack.c.b16 %v1792, %v1776
    %v2497 = vpack.c.b16 %v1809, %v1793
    %v2498 = vpack.c.b16 %v1810, %v1794
    %v2499 = vpack.c.b16 %v1811, %v1795
    %v2500 = vpack.c.b16 %v1812, %v1796
    %v2501 = vpack.c.b16 %v1813, %v1797
    %v2502 = vpack.c.b16 %v1814, %v1798
    %v2503 = vpack.c.b16 %v1815, %v1799
    %v2504 = vpack.c.b16 %v1816, %v1800
    %v2505 = vpack.c.b16 %v1817, %v1801
    %v2506 = vpack.c.b16 %v1818, %v1802
    %v2507 = vpack.c.b16 %v1819, %v1803
    %v2508 = vpack.c.b16 %v1820, %v1804
    %v2509 = vpack.c.b16 %v1821, %v1805
    %v2510 = vpack.c.b16 %v1822, %v1806
    %v2511 = vpack.c.b16 %v1823, %v1807
    %v2512 = vpack.c.b16 %v1824, %v1808
    %v2513 = vpack.c.b16 %v1841, %v1825
    %v2514 = vpack.c.b16 %v1842, %v1826
    %v2515 = vpack.c.b16 %v1843, %v1827
    %v2516 = vpack.c.b16 %v1844, %v1828
    %v2517 = vpack.c.b16 %v1845, %v1829
    %v2518 = vpack.c.b16 %v1846, %v1830
    %v2519 = vpack.c.b16 %v1847, %v1831
    %v2520 = vpack.c.b16 %v1848, %v1832
    %v2521 = vpack.c.b16 %v1849, %v1833
    %v2522 = vpack.c.b16 %v1850, %v1834
    %v2523 = vpack.c.b16 %v1851, %v1835
    %v2524 = vpack.c.b16 %v1852, %v1836
    %v2525 = vpack.c.b16 %v1853, %v1837
    %v2526 = vpack.c.b16 %v1854, %v1838
    %v2527 = vpack.c.b16 %v1855, %v1839
    %v2528 = vpack.c.b16 %v1856, %v1840
    %v2529 = vpack.c.b16 %v1873, %v1857
    %v2530 = vpack.c.b16 %v1874, %v1858
    %v2531 = vpack.c.b16 %v1875, %v1859
    %v2532 = vpack.c.b16 %v1876, %v1860
    %v2533 = vpack.c.b16 %v1877, %v1861
    %v2534 = vpack.c.b16 %v1878, %v1862
    %v2535 = vpack.c.b16 %v1879, %v1863
    %v2536 = vpack.c.b16 %v1880, %v1864
    %v2537 = vpack.c.b16 %v1881, %v1865
    %v2538 = vpack.c.b16 %v1882, %v1866
    %v2539 = vpack.c.b16 %v1883, %v1867
    %v2540 = vpack.c.b16 %v1884, %v1868
    %v2541 = vpack.c.b16 %v1885, %v1869
    %v2542 = vpack.c.b16 %v1886, %v1870
    %v2543 = vpack.c.b16 %v1887, %v1871
    %v2544 = vpack.c.b16 %v1888, %v1872
    %v2545 = vpack.c.b16 %v1905, %v1889
    %v2546 = vpack.c.b16 %v1906, %v1890
    %v2547 = vpack.c.b16 %v1907, %v1891
    %v2548 = vpack.c.b16 %v1908, %v1892
    %v2549 = vpack.c.b16 %v1909, %v1893
    %v2550 = vpack.c.b16 %v1910, %v1894
    %v2551 = vpack.c.b16 %v1911, %v1895
    %v2552 = vpack.c.b16 %v1912, %v1896
    %v2553 = vpack.c.b16 %v1913, %v1897
    %v2554 = vpack.c.b16 %v1914, %v1898
    %v2555 = vpack.c.b16 %v1915, %v1899
    %v2556 = vpack.c.b16 %v1916, %v1900
    %v2557 = vpack.c.b16 %v1917, %v1901
    %v2558 = vpack.c.b16 %v1918, %v1902
    %v2559 = vpack.c.b16 %v1919, %v1903
    %v2560 = vpack.c.b16 %v1920, %v1904
    %v2561 = vpack.c.b16 %v1937, %v1921
    %v2562 = vpack.c.b16 %v1938, %v1922
    %v2563 = vpack.c.b16 %v1939, %v1923
    %v2564 = vpack.c.b16 %v1940, %v1924
    %v2565 = vpack.c.b16 %v1941, %v1925
    %v2566 = vpack.c.b16 %v1942, %v1926
    %v2567 = vpack.c.b16 %v1943, %v1927
    %v2568 = vpack.c.b16 %v1944, %v1928
    %v2569 = vpack.c.b16 %v1945, %v1929
    %v2570 = vpack.c.b16 %v1946, %v1930
    %v2571 = vpack.c.b16 %v1947, %v1931
    %v2572 = vpack.c.b16 %v1948, %v1932
    %v2573 = vpack.c.b16 %v1949, %v1933
    %v2574 = vpack.c.b16 %v1950, %v1934
    %v2575 = vpack.c.b16 %v1951, %v1935
    %v2576 = vpack.c.b16 %v1952, %v1936
    %v2577 = vpack.c.b16 %v1969, %v1953
    %v2578 = vpack.c.b16 %v1970, %v1954
    %v2579 = vpack.c.b16 %v1971, %v1955
    %v2580 = vpack.c.b16 %v1972, %v1956
    %v2581 = vpack.c.b16 %v1973, %v1957
    %v2582 = vpack.c.b16 %v1974, %v1958
    %v2583 = vpack.c.b16 %v1975, %v1959
    %v2584 = vpack.c.b16 %v1976, %v1960
    %v2585 = vpack.c.b16 %v1977, %v1961
    %v2586 = vpack.c.b16 %v1978, %v1962
    %v2587 = vpack.c.b16 %v1979, %v1963
    %v2588 = vpack.c.b16 %v1980, %v1964
    %v2589 = vpack.c.b16 %v1981, %v1965
    %v2590 = vpack.c.b16 %v1982, %v1966
    %v2591 = vpack.c.b16 %v1983, %v1967
    %v2592 = vpack.c.b16 %v1984, %v1968
    %v2593 = vpack.c.b16 %v2001, %v1985
    %v2594 = vpack.c.b16 %v2002, %v1986
    %v2595 = vpack.c.b16 %v2003, %v1987
    %v2596 = vpack.c.b16 %v2004, %v1988
    %v2597 = vpack.c.b16 %v2005, %v1989
    %v2598 = vpack.c.b16 %v2006, %v1990
    %v2599 = vpack.c.b16 %v2007, %v1991
    %v2600 = vpack.c.b16 %v2008, %v1992
    %v2601 = vpack.c.b16 %v2009, %v1993
    %v2602 = vpack.c.b16 %v2010, %v1994
    %v2603 = vpack.c.b16 %v2011, %v1995
    %v2604 = vpack.c.b16 %v2012, %v1996
    %v2605 = vpack.c.b16 %v2013, %v1997
    %v2606 = vpack.c.b16 %v2014, %v1998
    %v2607 = vpack.c.b16 %v2015, %v1999
    %v2608 = vpack.c.b16 %v2016, %v2000
    %v2609 = vpack.c.b16 %v2033, %v2017
    %v2610 = vpack.c.b16 %v2034, %v2018
    %v2611 = vpack.c.b16 %v2035, %v2019
    %v2612 = vpack.c.b16 %v2036, %v2020
    %v2613 = vpack.c.b16 %v2037, %v2021
    %v2614 = vpack.c.b16 %v2038, %v2022
    %v2615 = vpack.c.b16 %v2039, %v2023
    %v2616 = vpack.c.b16 %v2040, %v2024
    %v2617 = vpack.c.b16 %v2041, %v2025
    %v2618 = vpack.c.b16 %v2042, %v2026
    %v2619 = vpack.c.b16 %v2043, %v2027
    %v2620 = vpack.c.b16 %v2044, %v2028
    %v2621 = vpack.c.b16 %v2045, %v2029
    %v2622 = vpack.c.b16 %v2046, %v2030
    %v2623 = vpack.c.b16 %v2047, %v2031
    %v2624 = vpack.c.b16 %v2048, %v2032
    %v2625 = vpack.c.b16 %v2065, %v2049
    %v2626 = vpack.c.b16 %v2066, %v2050
    %v2627 = vpack.c.b16 %v2067, %v2051
    %v2628 = vpack.c.b16 %v2068, %v2052
    %v2629 = vpack.c.b16 %v2069, %v2053
    %v2630 = vpack.c.b16 %v2070, %v2054
    %v2631 = vpack.c.b16 %v2071, %v2055
    %v2632 = vpack.c.b16 %v2072, %v2056
    %v2633 = vpack.c.b16 %v2073, %v2057
    %v2634 = vpack.c.b16 %v2074, %v2058
    %v2635 = vpack.c.b16 %v2075, %v2059
    %v2636 = vpack.c.b16 %v2076, %v2060
    %v2637 = vpack.c.b16 %v2077, %v2061
    %v2638 = vpack.c.b16 %v2078, %v2062
    %v2639 = vpack.c.b16 %v2079, %v2063
    %v2640 = vpack.c.b16 %v2080, %v2064
    %v2641 = vpack.c.b16 %v2097, %v2081
    %v2642 = vpack.c.b16 %v2098, %v2082
    %v2643 = vpack.c.b16 %v2099, %v2083
    %v2644 = vpack.c.b16 %v2100, %v2084
    %v2645 = vpack.c.b16 %v2101, %v2085
    %v2646 = vpack.c.b16 %v2102, %v2086
    %v2647 = vpack.c.b16 %v2103, %v2087
    %v2648 = vpack.c.b16 %v2104, %v2088
    %v2649 = vpack.c.b16 %v2105, %v2089
    %v2650 = vpack.c.b16 %v2106, %v2090
    %v2651 = vpack.c.b16 %v2107, %v2091
    %v2652 = vpack.c.b16 %v2108, %v2092
    %v2653 = vpack.c.b16 %v2109, %v2093
    %v2654 = vpack.c.b16 %v2110, %v2094
    %v2655 = vpack.c.b16 %v2111, %v2095
    %v2656 = vpack.c.b16 %v2112, %v2096
    %v2657 = vpack.c.b16 %v2129, %v2113
    %v2658 = vpack.c.b16 %v2130, %v2114
    %v2659 = vpack.c.b16 %v2131, %v2115
    %v2660 = vpack.c.b16 %v2132, %v2116
    %v2661 = vpack.c.b16 %v2133, %v2117
    %v2662 = vpack.c.b16 %v2134, %v2118
    %v2663 = vpack.c.b16 %v2135, %v2119
    %v2664 = vpack.c.b16 %v2136, %v2120
    %v2665 = vpack.c.b16 %v2137, %v2121
    %v2666 = vpack.c.b16 %v2138, %v2122
    %v2667 = vpack.c.b16 %v2139, %v2123
    %v2668 = vpack.c.b16 %v2140, %v2124
    %v2669 = vpack.c.b16 %v2141, %v2125
    %v2670 = vpack.c.b16 %v2142, %v2126
    %v2671 = vpack.c.b16 %v2143, %v2127
    %v2672 = vpack.c.b16 %v2144, %v2128
    %v2673 = vpack.c.b16 %v2161, %v2145
    %v2674 = vpack.c.b16 %v2162, %v2146
    %v2675 = vpack.c.b16 %v2163, %v2147
    %v2676 = vpack.c.b16 %v2164, %v2148
    %v2677 = vpack.c.b16 %v2165, %v2149
    %v2678 = vpack.c.b16 %v2166, %v2150
    %v2679 = vpack.c.b16 %v2167, %v2151
    %v2680 = vpack.c.b16 %v2168, %v2152
    %v2681 = vpack.c.b16 %v2169, %v2153
    %v2682 = vpack.c.b16 %v2170, %v2154
    %v2683 = vpack.c.b16 %v2171, %v2155
    %v2684 = vpack.c.b16 %v2172, %v2156
    %v2685 = vpack.c.b16 %v2173, %v2157
    %v2686 = vpack.c.b16 %v2174, %v2158
    %v2687 = vpack.c.b16 %v2175, %v2159
    %v2688 = vpack.c.b16 %v2176, %v2160
    %3201 = vmatprep.subr.bf16.mxu0 %v2178
    %3202 = vmatpush1.bf16.msra.mxu0 %v2177
    %3203 = vmatprep.subr.bf16.mxu0 %v2194
    %3204 = vmatpush1.bf16.msra.mxu0 %v2193
    %3205 = vmatprep.subr.bf16.mxu0 %v2210
    %3206 = vmatpush1.bf16.msra.mxu0 %v2209
    %3207 = vmatprep.subr.bf16.mxu0 %v2226
    %3208 = vmatpush1.bf16.msra.mxu0 %v2225
    %3209 = vmatprep.subr.bf16.mxu0 %v2242
    %3210 = vmatpush1.bf16.msra.mxu0 %v2241
    %3211 = vmatprep.subr.bf16.mxu0 %v2258
    %3212 = vmatpush1.bf16.msra.mxu0 %v2257
    %3213 = vmatprep.subr.bf16.mxu0 %v2274
    %3214 = vmatpush1.bf16.msra.mxu0 %v2273
    %3215 = vmatprep.subr.bf16.mxu0 %v2290
    %3216 = vmatpush1.bf16.msra.mxu0 %v2289
    %3217 = vmatprep.subr.bf16.mxu0 %v2306
    %3218 = vmatpush1.bf16.msra.mxu0 %v2305
    %3219 = vmatprep.subr.bf16.mxu0 %v2322
    %3220 = vmatpush1.bf16.msra.mxu0 %v2321
    %3221 = vmatprep.subr.bf16.mxu0 %v2338
    %3222 = vmatpush1.bf16.msra.mxu0 %v2337
    %3223 = vmatprep.subr.bf16.mxu0 %v2354
    %3224 = vmatpush1.bf16.msra.mxu0 %v2353
    %3225 = vmatprep.subr.bf16.mxu0 %v2370
    %3226 = vmatpush1.bf16.msra.mxu0 %v2369
    %3227 = vmatprep.subr.bf16.mxu0 %v2386
    %3228 = vmatpush1.bf16.msra.mxu0 %v2385
    %3229 = vmatprep.subr.bf16.mxu0 %v2402
    %3230 = vmatpush1.bf16.msra.mxu0 %v2401
    %3231 = vmatprep.subr.bf16.mxu0 %v2418
    %3232 = vmatpush1.bf16.msra.mxu0 %v2417
    %3233 = vmatprep.mubr.bf16.mxu0 %v634
    %3234 = vmatmul.mubr.bf16.gmra.mrb[0].mxu0 %v633
    %v3235 = vpop.f32.mrb[0].mxu0
    %v3236 = vadd.f32 %v544, %v3235
    %v3237 = vpop.f32.mrb[0].mxu0
    %v3238 = vadd.f32 %v548, %v3237
    %v3239 = vpop.f32.mrb[0].mxu0
    %v3240 = vadd.f32 %v544, %v3239
    %v3241 = vpop.f32.mrb[0].mxu0
    %v3242 = vadd.f32 %v548, %v3241
    %3243 = vdwg.mxu0
    %3244 = vmatprep.subr.bf16.mxu0 %v2434
    %3245 = vmatpush1.bf16.msra.mxu0 %v2433
    %3246 = vmatprep.subr.bf16.mxu0 %v2450
    %3247 = vmatpush1.bf16.msra.mxu0 %v2449
    %3248 = vmatprep.subr.bf16.mxu0 %v2466
    %3249 = vmatpush1.bf16.msra.mxu0 %v2465
    %3250 = vmatprep.subr.bf16.mxu0 %v2482
    %3251 = vmatpush1.bf16.msra.mxu0 %v2481
    %3252 = vmatprep.subr.bf16.mxu0 %v2498
    %3253 = vmatpush1.bf16.msra.mxu0 %v2497
    %3254 = vmatprep.subr.bf16.mxu0 %v2514
    %3255 = vmatpush1.bf16.msra.mxu0 %v2513
    %3256 = vmatprep.subr.bf16.mxu0 %v2530
    %3257 = vmatpush1.bf16.msra.mxu0 %v2529
    %3258 = vmatprep.subr.bf16.mxu0 %v2546
    %3259 = vmatpush1.bf16.msra.mxu0 %v2545
    %3260 = vmatprep.subr.bf16.mxu0 %v2562
    %3261 = vmatpush1.bf16.msra.mxu0 %v2561
    %3262 = vmatprep.subr.bf16.mxu0 %v2578
    %3263 = vmatpush1.bf16.msra.mxu0 %v2577
    %3264 = vmatprep.subr.bf16.mxu0 %v2594
    %3265 = vmatpush1.bf16.msra.mxu0 %v2593
    %3266 = vmatprep.subr.bf16.mxu0 %v2610
    %3267 = vmatpush1.bf16.msra.mxu0 %v2609
    %3268 = vmatprep.subr.bf16.mxu0 %v2626
    %3269 = vmatpush1.bf16.msra.mxu0 %v2625
    %3270 = vmatprep.subr.bf16.mxu0 %v2642
    %3271 = vmatpush1.bf16.msra.mxu0 %v2641
    %3272 = vmatprep.subr.bf16.mxu0 %v2658
    %3273 = vmatpush1.bf16.msra.mxu0 %v2657
    %3274 = vmatprep.subr.bf16.mxu0 %v2674
    %3275 = vmatpush1.bf16.msra.mxu0 %v2673
    %3276 = vmatprep.mubr.bf16.mxu0 %v636
    %3277 = vmatmul.mubr.bf16.gmra.mrb[0].mxu0 %v635
    %v3278 = vpop.f32.mrb[0].mxu0
    %v3279 = vadd.f32 %v3236, %v3278
    %v3280 = vpop.f32.mrb[0].mxu0
    %v3281 = vadd.f32 %v3238, %v3280
    %v3282 = vpop.f32.mrb[0].mxu0
    %v3283 = vadd.f32 %v3240, %v3282
    %v3284 = vpop.f32.mrb[0].mxu0
    %v3285 = vadd.f32 %v3242, %v3284
    %3286 = vdwg.mxu0
    %3287 = vmatprep.subr.bf16.mxu0 %v2180
    %3288 = vmatpush1.bf16.msra.mxu0 %v2179
    %3289 = vmatprep.subr.bf16.mxu0 %v2196
    %3290 = vmatpush1.bf16.msra.mxu0 %v2195
    %3291 = vmatprep.subr.bf16.mxu0 %v2212
    %3292 = vmatpush1.bf16.msra.mxu0 %v2211
    %3293 = vmatprep.subr.bf16.mxu0 %v2228
    %3294 = vmatpush1.bf16.msra.mxu0 %v2227
    %3295 = vmatprep.subr.bf16.mxu0 %v2244
    %3296 = vmatpush1.bf16.msra.mxu0 %v2243
    %3297 = vmatprep.subr.bf16.mxu0 %v2260
    %3298 = vmatpush1.bf16.msra.mxu0 %v2259
    %3299 = vmatprep.subr.bf16.mxu0 %v2276
    %3300 = vmatpush1.bf16.msra.mxu0 %v2275
    %3301 = vmatprep.subr.bf16.mxu0 %v2292
    %3302 = vmatpush1.bf16.msra.mxu0 %v2291
    %3303 = vmatprep.subr.bf16.mxu0 %v2308
    %3304 = vmatpush1.bf16.msra.mxu0 %v2307
    %3305 = vmatprep.subr.bf16.mxu0 %v2324
    %3306 = vmatpush1.bf16.msra.mxu0 %v2323
    %3307 = vmatprep.subr.bf16.mxu0 %v2340
    %3308 = vmatpush1.bf16.msra.mxu0 %v2339
    %3309 = vmatprep.subr.bf16.mxu0 %v2356
    %3310 = vmatpush1.bf16.msra.mxu0 %v2355
    %3311 = vmatprep.subr.bf16.mxu0 %v2372
    %3312 = vmatpush1.bf16.msra.mxu0 %v2371
    %3313 = vmatprep.subr.bf16.mxu0 %v2388
    %3314 = vmatpush1.bf16.msra.mxu0 %v2387
    %3315 = vmatprep.subr.bf16.mxu0 %v2404
    %3316 = vmatpush1.bf16.msra.mxu0 %v2403
    %3317 = vmatprep.subr.bf16.mxu0 %v2420
    %3318 = vmatpush1.bf16.msra.mxu0 %v2419
    %3319 = vmatprep.mubr.bf16.mxu0 %v634
    %3320 = vmatmul.mubr.bf16.gmra.mrb[0].mxu0 %v633
    %v3321 = vpop.f32.mrb[0].mxu0
    %v3322 = vadd.f32 %v552, %v3321
    %v3323 = vpop.f32.mrb[0].mxu0
    %v3324 = vadd.f32 %v556, %v3323
    %v3325 = vpop.f32.mrb[0].mxu0
    %v3326 = vadd.f32 %v552, %v3325
    %v3327 = vpop.f32.mrb[0].mxu0
    %v3328 = vadd.f32 %v556, %v3327
    %3329 = vdwg.mxu0
    %3330 = vmatprep.subr.bf16.mxu0 %v2436
    %3331 = vmatpush1.bf16.msra.mxu0 %v2435
    %3332 = vmatprep.subr.bf16.mxu0 %v2452
    %3333 = vmatpush1.bf16.msra.mxu0 %v2451
    %3334 = vmatprep.subr.bf16.mxu0 %v2468
    %3335 = vmatpush1.bf16.msra.mxu0 %v2467
    %3336 = vmatprep.subr.bf16.mxu0 %v2484
    %3337 = vmatpush1.bf16.msra.mxu0 %v2483
    %3338 = vmatprep.subr.bf16.mxu0 %v2500
    %3339 = vmatpush1.bf16.msra.mxu0 %v2499
    %3340 = vmatprep.subr.bf16.mxu0 %v2516
    %3341 = vmatpush1.bf16.msra.mxu0 %v2515
    %3342 = vmatprep.subr.bf16.mxu0 %v2532
    %3343 = vmatpush1.bf16.msra.mxu0 %v2531
    %3344 = vmatprep.subr.bf16.mxu0 %v2548
    %3345 = vmatpush1.bf16.msra.mxu0 %v2547
    %3346 = vmatprep.subr.bf16.mxu0 %v2564
    %3347 = vmatpush1.bf16.msra.mxu0 %v2563
    %3348 = vmatprep.subr.bf16.mxu0 %v2580
    %3349 = vmatpush1.bf16.msra.mxu0 %v2579
    %3350 = vmatprep.subr.bf16.mxu0 %v2596
    %3351 = vmatpush1.bf16.msra.mxu0 %v2595
    %3352 = vmatprep.subr.bf16.mxu0 %v2612
    %3353 = vmatpush1.bf16.msra.mxu0 %v2611
    %3354 = vmatprep.subr.bf16.mxu0 %v2628
    %3355 = vmatpush1.bf16.msra.mxu0 %v2627
    %3356 = vmatprep.subr.bf16.mxu0 %v2644
    %3357 = vmatpush1.bf16.msra.mxu0 %v2643
    %3358 = vmatprep.subr.bf16.mxu0 %v2660
    %3359 = vmatpush1.bf16.msra.mxu0 %v2659
    %3360 = vmatprep.subr.bf16.mxu0 %v2676
    %3361 = vmatpush1.bf16.msra.mxu0 %v2675
    %3362 = vmatprep.mubr.bf16.mxu0 %v636
    %3363 = vmatmul.mubr.bf16.gmra.mrb[0].mxu0 %v635
    %v3364 = vpop.f32.mrb[0].mxu0
    %v3365 = vadd.f32 %v3322, %v3364
    %v3366 = vpop.f32.mrb[0].mxu0
    %v3367 = vadd.f32 %v3324, %v3366
    %v3368 = vpop.f32.mrb[0].mxu0
    %v3369 = vadd.f32 %v3326, %v3368
    %v3370 = vpop.f32.mrb[0].mxu0
    %v3371 = vadd.f32 %v3328, %v3370
    %3372 = vdwg.mxu0
    %3373 = vmatprep.subr.bf16.mxu0 %v2182
    %3374 = vmatpush1.bf16.msra.mxu0 %v2181
    %3375 = vmatprep.subr.bf16.mxu0 %v2198
    %3376 = vmatpush1.bf16.msra.mxu0 %v2197
    %3377 = vmatprep.subr.bf16.mxu0 %v2214
    %3378 = vmatpush1.bf16.msra.mxu0 %v2213
    %3379 = vmatprep.subr.bf16.mxu0 %v2230
    %3380 = vmatpush1.bf16.msra.mxu0 %v2229
    %3381 = vmatprep.subr.bf16.mxu0 %v2246
    %3382 = vmatpush1.bf16.msra.mxu0 %v2245
    %3383 = vmatprep.subr.bf16.mxu0 %v2262
    %3384 = vmatpush1.bf16.msra.mxu0 %v2261
    %3385 = vmatprep.subr.bf16.mxu0 %v2278
    %3386 = vmatpush1.bf16.msra.mxu0 %v2277
    %3387 = vmatprep.subr.bf16.mxu0 %v2294
    %3388 = vmatpush1.bf16.msra.mxu0 %v2293
    %3389 = vmatprep.subr.bf16.mxu0 %v2310
    %3390 = vmatpush1.bf16.msra.mxu0 %v2309
    %3391 = vmatprep.subr.bf16.mxu0 %v2326
    %3392 = vmatpush1.bf16.msra.mxu0 %v2325
    %3393 = vmatprep.subr.bf16.mxu0 %v2342
    %3394 = vmatpush1.bf16.msra.mxu0 %v2341
    %3395 = vmatprep.subr.bf16.mxu0 %v2358
    %3396 = vmatpush1.bf16.msra.mxu0 %v2357
    %3397 = vmatprep.subr.bf16.mxu0 %v2374
    %3398 = vmatpush1.bf16.msra.mxu0 %v2373
    %3399 = vmatprep.subr.bf16.mxu0 %v2390
    %3400 = vmatpush1.bf16.msra.mxu0 %v2389
    %3401 = vmatprep.subr.bf16.mxu0 %v2406
    %3402 = vmatpush1.bf16.msra.mxu0 %v2405
    %3403 = vmatprep.subr.bf16.mxu0 %v2422
    %3404 = vmatpush1.bf16.msra.mxu0 %v2421
    %3405 = vmatprep.mubr.bf16.mxu0 %v634
    %3406 = vmatmul.mubr.bf16.gmra.mrb[0].mxu0 %v633
    %v3407 = vpop.f32.mrb[0].mxu0
    %v3408 = vadd.f32 %v560, %v3407
    %v3409 = vpop.f32.mrb[0].mxu0
    %v3410 = vadd.f32 %v564, %v3409
    %v3411 = vpop.f32.mrb[0].mxu0
    %v3412 = vadd.f32 %v560, %v3411
    %v3413 = vpop.f32.mrb[0].mxu0
    %v3414 = vadd.f32 %v564, %v3413
    %3415 = vdwg.mxu0
    %3416 = vmatprep.subr.bf16.mxu0 %v2438
    %3417 = vmatpush1.bf16.msra.mxu0 %v2437
    %3418 = vmatprep.subr.bf16.mxu0 %v2454
    %3419 = vmatpush1.bf16.msra.mxu0 %v2453
    %3420 = vmatprep.subr.bf16.mxu0 %v2470
    %3421 = vmatpush1.bf16.msra.mxu0 %v2469
    %3422 = vmatprep.subr.bf16.mxu0 %v2486
    %3423 = vmatpush1.bf16.msra.mxu0 %v2485
    %3424 = vmatprep.subr.bf16.mxu0 %v2502
    %3425 = vmatpush1.bf16.msra.mxu0 %v2501
    %3426 = vmatprep.subr.bf16.mxu0 %v2518
    %3427 = vmatpush1.bf16.msra.mxu0 %v2517
    %3428 = vmatprep.subr.bf16.mxu0 %v2534
    %3429 = vmatpush1.bf16.msra.mxu0 %v2533
    %3430 = vmatprep.subr.bf16.mxu0 %v2550
    %3431 = vmatpush1.bf16.msra.mxu0 %v2549
    %3432 = vmatprep.subr.bf16.mxu0 %v2566
    %3433 = vmatpush1.bf16.msra.mxu0 %v2565
    %3434 = vmatprep.subr.bf16.mxu0 %v2582
    %3435 = vmatpush1.bf16.msra.mxu0 %v2581
    %3436 = vmatprep.subr.bf16.mxu0 %v2598
    %3437 = vmatpush1.bf16.msra.mxu0 %v2597
    %3438 = vmatprep.subr.bf16.mxu0 %v2614
    %3439 = vmatpush1.bf16.msra.mxu0 %v2613
    %3440 = vmatprep.subr.bf16.mxu0 %v2630
    %3441 = vmatpush1.bf16.msra.mxu0 %v2629
    %3442 = vmatprep.subr.bf16.mxu0 %v2646
    %3443 = vmatpush1.bf16.msra.mxu0 %v2645
    %3444 = vmatprep.subr.bf16.mxu0 %v2662
    %3445 = vmatpush1.bf16.msra.mxu0 %v2661
    %3446 = vmatprep.subr.bf16.mxu0 %v2678
    %3447 = vmatpush1.bf16.msra.mxu0 %v2677
    %3448 = vmatprep.mubr.bf16.mxu0 %v636
    %3449 = vmatmul.mubr.bf16.gmra.mrb[0].mxu0 %v635
    %v3450 = vpop.f32.mrb[0].mxu0
    %v3451 = vadd.f32 %v3408, %v3450
    %v3452 = vpop.f32.mrb[0].mxu0
    %v3453 = vadd.f32 %v3410, %v3452
    %v3454 = vpop.f32.mrb[0].mxu0
    %v3455 = vadd.f32 %v3412, %v3454
    %v3456 = vpop.f32.mrb[0].mxu0
    %v3457 = vadd.f32 %v3414, %v3456
    %3458 = vdwg.mxu0
    %3459 = vmatprep.subr.bf16.mxu0 %v2184
    %3460 = vmatpush1.bf16.msra.mxu0 %v2183
    %3461 = vmatprep.subr.bf16.mxu0 %v2200
    %3462 = vmatpush1.bf16.msra.mxu0 %v2199
    %3463 = vmatprep.subr.bf16.mxu0 %v2216
    %3464 = vmatpush1.bf16.msra.mxu0 %v2215
    %3465 = vmatprep.subr.bf16.mxu0 %v2232
    %3466 = vmatpush1.bf16.msra.mxu0 %v2231
    %3467 = vmatprep.subr.bf16.mxu0 %v2248
    %3468 = vmatpush1.bf16.msra.mxu0 %v2247
    %3469 = vmatprep.subr.bf16.mxu0 %v2264
    %3470 = vmatpush1.bf16.msra.mxu0 %v2263
    %3471 = vmatprep.subr.bf16.mxu0 %v2280
    %3472 = vmatpush1.bf16.msra.mxu0 %v2279
    %3473 = vmatprep.subr.bf16.mxu0 %v2296
    %3474 = vmatpush1.bf16.msra.mxu0 %v2295
    %3475 = vmatprep.subr.bf16.mxu0 %v2312
    %3476 = vmatpush1.bf16.msra.mxu0 %v2311
    %3477 = vmatprep.subr.bf16.mxu0 %v2328
    %3478 = vmatpush1.bf16.msra.mxu0 %v2327
    %3479 = vmatprep.subr.bf16.mxu0 %v2344
    %3480 = vmatpush1.bf16.msra.mxu0 %v2343
    %3481 = vmatprep.subr.bf16.mxu0 %v2360
    %3482 = vmatpush1.bf16.msra.mxu0 %v2359
    %3483 = vmatprep.subr.bf16.mxu0 %v2376
    %3484 = vmatpush1.bf16.msra.mxu0 %v2375
    %3485 = vmatprep.subr.bf16.mxu0 %v2392
    %3486 = vmatpush1.bf16.msra.mxu0 %v2391
    %3487 = vmatprep.subr.bf16.mxu0 %v2408
    %3488 = vmatpush1.bf16.msra.mxu0 %v2407
    %3489 = vmatprep.subr.bf16.mxu0 %v2424
    %3490 = vmatpush1.bf16.msra.mxu0 %v2423
    %3491 = vmatprep.mubr.bf16.mxu0 %v634
    %3492 = vmatmul.mubr.bf16.gmra.mrb[0].mxu0 %v633
    %v3493 = vpop.f32.mrb[0].mxu0
    %v3494 = vadd.f32 %v568, %v3493
    %v3495 = vpop.f32.mrb[0].mxu0
    %v3496 = vadd.f32 %v572, %v3495
    %v3497 = vpop.f32.mrb[0].mxu0
    %v3498 = vadd.f32 %v568, %v3497
    %v3499 = vpop.f32.mrb[0].mxu0
    %v3500 = vadd.f32 %v572, %v3499
    %3501 = vdwg.mxu0
    %3502 = vmatprep.subr.bf16.mxu0 %v2440
    %3503 = vmatpush1.bf16.msra.mxu0 %v2439
    %3504 = vmatprep.subr.bf16.mxu0 %v2456
    %3505 = vmatpush1.bf16.msra.mxu0 %v2455
    %3506 = vmatprep.subr.bf16.mxu0 %v2472
    %3507 = vmatpush1.bf16.msra.mxu0 %v2471
    %3508 = vmatprep.subr.bf16.mxu0 %v2488
    %3509 = vmatpush1.bf16.msra.mxu0 %v2487
    %3510 = vmatprep.subr.bf16.mxu0 %v2504
    %3511 = vmatpush1.bf16.msra.mxu0 %v2503
    %3512 = vmatprep.subr.bf16.mxu0 %v2520
    %3513 = vmatpush1.bf16.msra.mxu0 %v2519
    %3514 = vmatprep.subr.bf16.mxu0 %v2536
    %3515 = vmatpush1.bf16.msra.mxu0 %v2535
    %3516 = vmatprep.subr.bf16.mxu0 %v2552
    %3517 = vmatpush1.bf16.msra.mxu0 %v2551
    %3518 = vmatprep.subr.bf16.mxu0 %v2568
    %3519 = vmatpush1.bf16.msra.mxu0 %v2567
    %3520 = vmatprep.subr.bf16.mxu0 %v2584
    %3521 = vmatpush1.bf16.msra.mxu0 %v2583
    %3522 = vmatprep.subr.bf16.mxu0 %v2600
    %3523 = vmatpush1.bf16.msra.mxu0 %v2599
    %3524 = vmatprep.subr.bf16.mxu0 %v2616
    %3525 = vmatpush1.bf16.msra.mxu0 %v2615
    %3526 = vmatprep.subr.bf16.mxu0 %v2632
    %3527 = vmatpush1.bf16.msra.mxu0 %v2631
    %3528 = vmatprep.subr.bf16.mxu0 %v2648
    %3529 = vmatpush1.bf16.msra.mxu0 %v2647
    %3530 = vmatprep.subr.bf16.mxu0 %v2664
    %3531 = vmatpush1.bf16.msra.mxu0 %v2663
    %3532 = vmatprep.subr.bf16.mxu0 %v2680
    %3533 = vmatpush1.bf16.msra.mxu0 %v2679
    %3534 = vmatprep.mubr.bf16.mxu0 %v636
    %3535 = vmatmul.mubr.bf16.gmra.mrb[0].mxu0 %v635
    %v3536 = vpop.f32.mrb[0].mxu0
    %v3537 = vadd.f32 %v3494, %v3536
    %v3538 = vpop.f32.mrb[0].mxu0
    %v3539 = vadd.f32 %v3496, %v3538
    %v3540 = vpop.f32.mrb[0].mxu0
    %v3541 = vadd.f32 %v3498, %v3540
    %v3542 = vpop.f32.mrb[0].mxu0
    %v3543 = vadd.f32 %v3500, %v3542
    %3544 = vdwg.mxu0
    %3545 = vmatprep.subr.bf16.mxu0 %v2186
    %3546 = vmatpush1.bf16.msra.mxu0 %v2185
    %3547 = vmatprep.subr.bf16.mxu0 %v2202
    %3548 = vmatpush1.bf16.msra.mxu0 %v2201
    %3549 = vmatprep.subr.bf16.mxu0 %v2218
    %3550 = vmatpush1.bf16.msra.mxu0 %v2217
    %3551 = vmatprep.subr.bf16.mxu0 %v2234
    %3552 = vmatpush1.bf16.msra.mxu0 %v2233
    %3553 = vmatprep.subr.bf16.mxu0 %v2250
    %3554 = vmatpush1.bf16.msra.mxu0 %v2249
    %3555 = vmatprep.subr.bf16.mxu0 %v2266
    %3556 = vmatpush1.bf16.msra.mxu0 %v2265
    %3557 = vmatprep.subr.bf16.mxu0 %v2282
    %3558 = vmatpush1.bf16.msra.mxu0 %v2281
    %3559 = vmatprep.subr.bf16.mxu0 %v2298
    %3560 = vmatpush1.bf16.msra.mxu0 %v2297
    %3561 = vmatprep.subr.bf16.mxu0 %v2314
    %3562 = vmatpush1.bf16.msra.mxu0 %v2313
    %3563 = vmatprep.subr.bf16.mxu0 %v2330
    %3564 = vmatpush1.bf16.msra.mxu0 %v2329
    %3565 = vmatprep.subr.bf16.mxu0 %v2346
    %3566 = vmatpush1.bf16.msra.mxu0 %v2345
    %3567 = vmatprep.subr.bf16.mxu0 %v2362
    %3568 = vmatpush1.bf16.msra.mxu0 %v2361
    %3569 = vmatprep.subr.bf16.mxu0 %v2378
    %3570 = vmatpush1.bf16.msra.mxu0 %v2377
    %3571 = vmatprep.subr.bf16.mxu0 %v2394
    %3572 = vmatpush1.bf16.msra.mxu0 %v2393
    %3573 = vmatprep.subr.bf16.mxu0 %v2410
    %3574 = vmatpush1.bf16.msra.mxu0 %v2409
    %3575 = vmatprep.subr.bf16.mxu0 %v2426
    %3576 = vmatpush1.bf16.msra.mxu0 %v2425
    %3577 = vmatprep.mubr.bf16.mxu0 %v634
    %3578 = vmatmul.mubr.bf16.gmra.mrb[0].mxu0 %v633
    %v3579 = vpop.f32.mrb[0].mxu0
    %v3580 = vadd.f32 %v576, %v3579
    %v3581 = vpop.f32.mrb[0].mxu0
    %v3582 = vadd.f32 %v580, %v3581
    %v3583 = vpop.f32.mrb[0].mxu0
    %v3584 = vadd.f32 %v576, %v3583
    %v3585 = vpop.f32.mrb[0].mxu0
    %v3586 = vadd.f32 %v580, %v3585
    %3587 = vdwg.mxu0
    %3588 = vmatprep.subr.bf16.mxu0 %v2442
    %3589 = vmatpush1.bf16.msra.mxu0 %v2441
    %3590 = vmatprep.subr.bf16.mxu0 %v2458
    %3591 = vmatpush1.bf16.msra.mxu0 %v2457
    %3592 = vmatprep.subr.bf16.mxu0 %v2474
    %3593 = vmatpush1.bf16.msra.mxu0 %v2473
    %3594 = vmatprep.subr.bf16.mxu0 %v2490
    %3595 = vmatpush1.bf16.msra.mxu0 %v2489
    %3596 = vmatprep.subr.bf16.mxu0 %v2506
    %3597 = vmatpush1.bf16.msra.mxu0 %v2505
    %3598 = vmatprep.subr.bf16.mxu0 %v2522
    %3599 = vmatpush1.bf16.msra.mxu0 %v2521
    %3600 = vmatprep.subr.bf16.mxu0 %v2538
    %3601 = vmatpush1.bf16.msra.mxu0 %v2537
    %3602 = vmatprep.subr.bf16.mxu0 %v2554
    %3603 = vmatpush1.bf16.msra.mxu0 %v2553
    %3604 = vmatprep.subr.bf16.mxu0 %v2570
    %3605 = vmatpush1.bf16.msra.mxu0 %v2569
    %3606 = vmatprep.subr.bf16.mxu0 %v2586
    %3607 = vmatpush1.bf16.msra.mxu0 %v2585
    %3608 = vmatprep.subr.bf16.mxu0 %v2602
    %3609 = vmatpush1.bf16.msra.mxu0 %v2601
    %3610 = vmatprep.subr.bf16.mxu0 %v2618
    %3611 = vmatpush1.bf16.msra.mxu0 %v2617
    %3612 = vmatprep.subr.bf16.mxu0 %v2634
    %3613 = vmatpush1.bf16.msra.mxu0 %v2633
    %3614 = vmatprep.subr.bf16.mxu0 %v2650
    %3615 = vmatpush1.bf16.msra.mxu0 %v2649
    %3616 = vmatprep.subr.bf16.mxu0 %v2666
    %3617 = vmatpush1.bf16.msra.mxu0 %v2665
    %3618 = vmatprep.subr.bf16.mxu0 %v2682
    %3619 = vmatpush1.bf16.msra.mxu0 %v2681
    %3620 = vmatprep.mubr.bf16.mxu0 %v636
    %3621 = vmatmul.mubr.bf16.gmra.mrb[0].mxu0 %v635
    %v3622 = vpop.f32.mrb[0].mxu0
    %v3623 = vadd.f32 %v3580, %v3622
    %v3624 = vpop.f32.mrb[0].mxu0
    %v3625 = vadd.f32 %v3582, %v3624
    %v3626 = vpop.f32.mrb[0].mxu0
    %v3627 = vadd.f32 %v3584, %v3626
    %v3628 = vpop.f32.mrb[0].mxu0
    %v3629 = vadd.f32 %v3586, %v3628
    %3630 = vdwg.mxu0
    %3631 = vmatprep.subr.bf16.mxu0 %v2188
    %3632 = vmatpush1.bf16.msra.mxu0 %v2187
    %3633 = vmatprep.subr.bf16.mxu0 %v2204
    %3634 = vmatpush1.bf16.msra.mxu0 %v2203
    %3635 = vmatprep.subr.bf16.mxu0 %v2220
    %3636 = vmatpush1.bf16.msra.mxu0 %v2219
    %3637 = vmatprep.subr.bf16.mxu0 %v2236
    %3638 = vmatpush1.bf16.msra.mxu0 %v2235
    %3639 = vmatprep.subr.bf16.mxu0 %v2252
    %3640 = vmatpush1.bf16.msra.mxu0 %v2251
    %3641 = vmatprep.subr.bf16.mxu0 %v2268
    %3642 = vmatpush1.bf16.msra.mxu0 %v2267
    %3643 = vmatprep.subr.bf16.mxu0 %v2284
    %3644 = vmatpush1.bf16.msra.mxu0 %v2283
    %3645 = vmatprep.subr.bf16.mxu0 %v2300
    %3646 = vmatpush1.bf16.msra.mxu0 %v2299
    %3647 = vmatprep.subr.bf16.mxu0 %v2316
    %3648 = vmatpush1.bf16.msra.mxu0 %v2315
    %3649 = vmatprep.subr.bf16.mxu0 %v2332
    %3650 = vmatpush1.bf16.msra.mxu0 %v2331
    %3651 = vmatprep.subr.bf16.mxu0 %v2348
    %3652 = vmatpush1.bf16.msra.mxu0 %v2347
    %3653 = vmatprep.subr.bf16.mxu0 %v2364
    %3654 = vmatpush1.bf16.msra.mxu0 %v2363
    %3655 = vmatprep.subr.bf16.mxu0 %v2380
    %3656 = vmatpush1.bf16.msra.mxu0 %v2379
    %3657 = vmatprep.subr.bf16.mxu0 %v2396
    %3658 = vmatpush1.bf16.msra.mxu0 %v2395
    %3659 = vmatprep.subr.bf16.mxu0 %v2412
    %3660 = vmatpush1.bf16.msra.mxu0 %v2411
    %3661 = vmatprep.subr.bf16.mxu0 %v2428
    %3662 = vmatpush1.bf16.msra.mxu0 %v2427
    %3663 = vmatprep.mubr.bf16.mxu0 %v634
    %3664 = vmatmul.mubr.bf16.gmra.mrb[0].mxu0 %v633
    %v3665 = vpop.f32.mrb[0].mxu0
    %v3666 = vadd.f32 %v584, %v3665
    %v3667 = vpop.f32.mrb[0].mxu0
    %v3668 = vadd.f32 %v588, %v3667
    %v3669 = vpop.f32.mrb[0].mxu0
    %v3670 = vadd.f32 %v584, %v3669
    %v3671 = vpop.f32.mrb[0].mxu0
    %v3672 = vadd.f32 %v588, %v3671
    %3673 = vdwg.mxu0
    %3674 = vmatprep.subr.bf16.mxu0 %v2444
    %3675 = vmatpush1.bf16.msra.mxu0 %v2443
    %3676 = vmatprep.subr.bf16.mxu0 %v2460
    %3677 = vmatpush1.bf16.msra.mxu0 %v2459
    %3678 = vmatprep.subr.bf16.mxu0 %v2476
    %3679 = vmatpush1.bf16.msra.mxu0 %v2475
    %3680 = vmatprep.subr.bf16.mxu0 %v2492
    %3681 = vmatpush1.bf16.msra.mxu0 %v2491
    %3682 = vmatprep.subr.bf16.mxu0 %v2508
    %3683 = vmatpush1.bf16.msra.mxu0 %v2507
    %3684 = vmatprep.subr.bf16.mxu0 %v2524
    %3685 = vmatpush1.bf16.msra.mxu0 %v2523
    %3686 = vmatprep.subr.bf16.mxu0 %v2540
    %3687 = vmatpush1.bf16.msra.mxu0 %v2539
    %3688 = vmatprep.subr.bf16.mxu0 %v2556
    %3689 = vmatpush1.bf16.msra.mxu0 %v2555
    %3690 = vmatprep.subr.bf16.mxu0 %v2572
    %3691 = vmatpush1.bf16.msra.mxu0 %v2571
    %3692 = vmatprep.subr.bf16.mxu0 %v2588
    %3693 = vmatpush1.bf16.msra.mxu0 %v2587
    %3694 = vmatprep.subr.bf16.mxu0 %v2604
    %3695 = vmatpush1.bf16.msra.mxu0 %v2603
    %3696 = vmatprep.subr.bf16.mxu0 %v2620
    %3697 = vmatpush1.bf16.msra.mxu0 %v2619
    %3698 = vmatprep.subr.bf16.mxu0 %v2636
    %3699 = vmatpush1.bf16.msra.mxu0 %v2635
    %3700 = vmatprep.subr.bf16.mxu0 %v2652
    %3701 = vmatpush1.bf16.msra.mxu0 %v2651
    %3702 = vmatprep.subr.bf16.mxu0 %v2668
    %3703 = vmatpush1.bf16.msra.mxu0 %v2667
    %3704 = vmatprep.subr.bf16.mxu0 %v2684
    %3705 = vmatpush1.bf16.msra.mxu0 %v2683
    %3706 = vmatprep.mubr.bf16.mxu0 %v636
    %3707 = vmatmul.mubr.bf16.gmra.mrb[0].mxu0 %v635
    %v3708 = vpop.f32.mrb[0].mxu0
    %v3709 = vadd.f32 %v3666, %v3708
    %v3710 = vpop.f32.mrb[0].mxu0
    %v3711 = vadd.f32 %v3668, %v3710
    %v3712 = vpop.f32.mrb[0].mxu0
    %v3713 = vadd.f32 %v3670, %v3712
    %v3714 = vpop.f32.mrb[0].mxu0
    %v3715 = vadd.f32 %v3672, %v3714
    %3716 = vdwg.mxu0
    %3717 = vmatprep.subr.bf16.mxu0 %v2190
    %3718 = vmatpush1.bf16.msra.mxu0 %v2189
    %3719 = vmatprep.subr.bf16.mxu0 %v2206
    %3720 = vmatpush1.bf16.msra.mxu0 %v2205
    %3721 = vmatprep.subr.bf16.mxu0 %v2222
    %3722 = vmatpush1.bf16.msra.mxu0 %v2221
    %3723 = vmatprep.subr.bf16.mxu0 %v2238
    %3724 = vmatpush1.bf16.msra.mxu0 %v2237
    %3725 = vmatprep.subr.bf16.mxu0 %v2254
    %3726 = vmatpush1.bf16.msra.mxu0 %v2253
    %3727 = vmatprep.subr.bf16.mxu0 %v2270
    %3728 = vmatpush1.bf16.msra.mxu0 %v2269
    %3729 = vmatprep.subr.bf16.mxu0 %v2286
    %3730 = vmatpush1.bf16.msra.mxu0 %v2285
    %3731 = vmatprep.subr.bf16.mxu0 %v2302
    %3732 = vmatpush1.bf16.msra.mxu0 %v2301
    %3733 = vmatprep.subr.bf16.mxu0 %v2318
    %3734 = vmatpush1.bf16.msra.mxu0 %v2317
    %3735 = vmatprep.subr.bf16.mxu0 %v2334
    %3736 = vmatpush1.bf16.msra.mxu0 %v2333
    %3737 = vmatprep.subr.bf16.mxu0 %v2350
    %3738 = vmatpush1.bf16.msra.mxu0 %v2349
    %3739 = vmatprep.subr.bf16.mxu0 %v2366
    %3740 = vmatpush1.bf16.msra.mxu0 %v2365
    %3741 = vmatprep.subr.bf16.mxu0 %v2382
    %3742 = vmatpush1.bf16.msra.mxu0 %v2381
    %3743 = vmatprep.subr.bf16.mxu0 %v2398
    %3744 = vmatpush1.bf16.msra.mxu0 %v2397
    %3745 = vmatprep.subr.bf16.mxu0 %v2414
    %3746 = vmatpush1.bf16.msra.mxu0 %v2413
    %3747 = vmatprep.subr.bf16.mxu0 %v2430
    %3748 = vmatpush1.bf16.msra.mxu0 %v2429
    %3749 = vmatprep.mubr.bf16.mxu0 %v634
    %3750 = vmatmul.mubr.bf16.gmra.mrb[0].mxu0 %v633
    %v3751 = vpop.f32.mrb[0].mxu0
    %v3752 = vadd.f32 %v592, %v3751
    %v3753 = vpop.f32.mrb[0].mxu0
    %v3754 = vadd.f32 %v596, %v3753
    %v3755 = vpop.f32.mrb[0].mxu0
    %v3756 = vadd.f32 %v592, %v3755
    %v3757 = vpop.f32.mrb[0].mxu0
    %v3758 = vadd.f32 %v596, %v3757
    %3759 = vdwg.mxu0
    %3760 = vmatprep.subr.bf16.mxu0 %v2446
    %3761 = vmatpush1.bf16.msra.mxu0 %v2445
    %3762 = vmatprep.subr.bf16.mxu0 %v2462
    %3763 = vmatpush1.bf16.msra.mxu0 %v2461
    %3764 = vmatprep.subr.bf16.mxu0 %v2478
    %3765 = vmatpush1.bf16.msra.mxu0 %v2477
    %3766 = vmatprep.subr.bf16.mxu0 %v2494
    %3767 = vmatpush1.bf16.msra.mxu0 %v2493
    %3768 = vmatprep.subr.bf16.mxu0 %v2510
    %3769 = vmatpush1.bf16.msra.mxu0 %v2509
    %3770 = vmatprep.subr.bf16.mxu0 %v2526
    %3771 = vmatpush1.bf16.msra.mxu0 %v2525
    %3772 = vmatprep.subr.bf16.mxu0 %v2542
    %3773 = vmatpush1.bf16.msra.mxu0 %v2541
    %3774 = vmatprep.subr.bf16.mxu0 %v2558
    %3775 = vmatpush1.bf16.msra.mxu0 %v2557
    %3776 = vmatprep.subr.bf16.mxu0 %v2574
    %3777 = vmatpush1.bf16.msra.mxu0 %v2573
    %3778 = vmatprep.subr.bf16.mxu0 %v2590
    %3779 = vmatpush1.bf16.msra.mxu0 %v2589
    %3780 = vmatprep.subr.bf16.mxu0 %v2606
    %3781 = vmatpush1.bf16.msra.mxu0 %v2605
    %3782 = vmatprep.subr.bf16.mxu0 %v2622
    %3783 = vmatpush1.bf16.msra.mxu0 %v2621
    %3784 = vmatprep.subr.bf16.mxu0 %v2638
    %3785 = vmatpush1.bf16.msra.mxu0 %v2637
    %3786 = vmatprep.subr.bf16.mxu0 %v2654
    %3787 = vmatpush1.bf16.msra.mxu0 %v2653
    %3788 = vmatprep.subr.bf16.mxu0 %v2670
    %3789 = vmatpush1.bf16.msra.mxu0 %v2669
    %3790 = vmatprep.subr.bf16.mxu0 %v2686
    %3791 = vmatpush1.bf16.msra.mxu0 %v2685
    %3792 = vmatprep.mubr.bf16.mxu0 %v636
    %3793 = vmatmul.mubr.bf16.gmra.mrb[0].mxu0 %v635
    %v3794 = vpop.f32.mrb[0].mxu0
    %v3795 = vadd.f32 %v3752, %v3794
    %v3796 = vpop.f32.mrb[0].mxu0
    %v3797 = vadd.f32 %v3754, %v3796
    %v3798 = vpop.f32.mrb[0].mxu0
    %v3799 = vadd.f32 %v3756, %v3798
    %v3800 = vpop.f32.mrb[0].mxu0
    %v3801 = vadd.f32 %v3758, %v3800
    %3802 = vdwg.mxu0
    %3803 = vmatprep.subr.bf16.mxu0 %v2192
    %3804 = vmatpush1.bf16.msra.mxu0 %v2191
    %3805 = vmatprep.subr.bf16.mxu0 %v2208
    %3806 = vmatpush1.bf16.msra.mxu0 %v2207
    %3807 = vmatprep.subr.bf16.mxu0 %v2224
    %3808 = vmatpush1.bf16.msra.mxu0 %v2223
    %3809 = vmatprep.subr.bf16.mxu0 %v2240
    %3810 = vmatpush1.bf16.msra.mxu0 %v2239
    %3811 = vmatprep.subr.bf16.mxu0 %v2256
    %3812 = vmatpush1.bf16.msra.mxu0 %v2255
    %3813 = vmatprep.subr.bf16.mxu0 %v2272
    %3814 = vmatpush1.bf16.msra.mxu0 %v2271
    %3815 = vmatprep.subr.bf16.mxu0 %v2288
    %3816 = vmatpush1.bf16.msra.mxu0 %v2287
    %3817 = vmatprep.subr.bf16.mxu0 %v2304
    %3818 = vmatpush1.bf16.msra.mxu0 %v2303
    %3819 = vmatprep.subr.bf16.mxu0 %v2320
    %3820 = vmatpush1.bf16.msra.mxu0 %v2319
    %3821 = vmatprep.subr.bf16.mxu0 %v2336
    %3822 = vmatpush1.bf16.msra.mxu0 %v2335
    %3823 = vmatprep.subr.bf16.mxu0 %v2352
    %3824 = vmatpush1.bf16.msra.mxu0 %v2351
    %3825 = vmatprep.subr.bf16.mxu0 %v2368
    %3826 = vmatpush1.bf16.msra.mxu0 %v2367
    %3827 = vmatprep.subr.bf16.mxu0 %v2384
    %3828 = vmatpush1.bf16.msra.mxu0 %v2383
    %3829 = vmatprep.subr.bf16.mxu0 %v2400
    %3830 = vmatpush1.bf16.msra.mxu0 %v2399
    %3831 = vmatprep.subr.bf16.mxu0 %v2416
    %3832 = vmatpush1.bf16.msra.mxu0 %v2415
    %3833 = vmatprep.subr.bf16.mxu0 %v2432
    %3834 = vmatpush1.bf16.msra.mxu0 %v2431
    %3835 = vmatprep.mubr.bf16.mxu0 %v634
    %3836 = vmatmul.mubr.bf16.gmra.mrb[0].mxu0 %v633
    %v3837 = vpop.f32.mrb[0].mxu0
    %v3838 = vadd.f32 %v600, %v3837
    %v3839 = vpop.f32.mrb[0].mxu0
    %v3840 = vadd.f32 %v604, %v3839
    %v3841 = vpop.f32.mrb[0].mxu0
    %v3842 = vadd.f32 %v600, %v3841
    %v3843 = vpop.f32.mrb[0].mxu0
    %v3844 = vadd.f32 %v604, %v3843
    %3845 = vdwg.mxu0
    %3846 = vmatprep.subr.bf16.mxu0 %v2448
    %3847 = vmatpush1.bf16.msra.mxu0 %v2447
    %3848 = vmatprep.subr.bf16.mxu0 %v2464
    %3849 = vmatpush1.bf16.msra.mxu0 %v2463
    %3850 = vmatprep.subr.bf16.mxu0 %v2480
    %3851 = vmatpush1.bf16.msra.mxu0 %v2479
    %3852 = vmatprep.subr.bf16.mxu0 %v2496
    %3853 = vmatpush1.bf16.msra.mxu0 %v2495
    %3854 = vmatprep.subr.bf16.mxu0 %v2512
    %3855 = vmatpush1.bf16.msra.mxu0 %v2511
    %3856 = vmatprep.subr.bf16.mxu0 %v2528
    %3857 = vmatpush1.bf16.msra.mxu0 %v2527
    %3858 = vmatprep.subr.bf16.mxu0 %v2544
    %3859 = vmatpush1.bf16.msra.mxu0 %v2543
    %3860 = vmatprep.subr.bf16.mxu0 %v2560
    %3861 = vmatpush1.bf16.msra.mxu0 %v2559
    %3862 = vmatprep.subr.bf16.mxu0 %v2576
    %3863 = vmatpush1.bf16.msra.mxu0 %v2575
    %3864 = vmatprep.subr.bf16.mxu0 %v2592
    %3865 = vmatpush1.bf16.msra.mxu0 %v2591
    %3866 = vmatprep.subr.bf16.mxu0 %v2608
    %3867 = vmatpush1.bf16.msra.mxu0 %v2607
    %3868 = vmatprep.subr.bf16.mxu0 %v2624
    %3869 = vmatpush1.bf16.msra.mxu0 %v2623
    %3870 = vmatprep.subr.bf16.mxu0 %v2640
    %3871 = vmatpush1.bf16.msra.mxu0 %v2639
    %3872 = vmatprep.subr.bf16.mxu0 %v2656
    %3873 = vmatpush1.bf16.msra.mxu0 %v2655
    %3874 = vmatprep.subr.bf16.mxu0 %v2672
    %3875 = vmatpush1.bf16.msra.mxu0 %v2671
    %3876 = vmatprep.subr.bf16.mxu0 %v2688
    %3877 = vmatpush1.bf16.msra.mxu0 %v2687
    %3878 = vmatprep.mubr.bf16.mxu0 %v636
    %3879 = vmatmul.mubr.bf16.gmra.mrb[0].mxu0 %v635
    %v3880 = vpop.f32.mrb[0].mxu0
    %v3881 = vadd.f32 %v3838, %v3880
    %v3882 = vpop.f32.mrb[0].mxu0
    %v3883 = vadd.f32 %v3840, %v3882
    %v3884 = vpop.f32.mrb[0].mxu0
    %v3885 = vadd.f32 %v3842, %v3884
    %v3886 = vpop.f32.mrb[0].mxu0
    %v3887 = vadd.f32 %v3844, %v3886
    %3888 = vdwg.mxu0
    %v3889 = vmul.f32 %v3279, 0.5
    %v3890 = vmul.f32 %v3281, 0.5
    %v3891 = vmul.f32 %v3365, 0.5
    %v3892 = vmul.f32 %v3367, 0.5
    %v3893 = vmul.f32 %v3451, 0.5
    %v3894 = vmul.f32 %v3453, 0.5
    %v3895 = vmul.f32 %v3537, 0.5
    %v3896 = vmul.f32 %v3539, 0.5
    %v3897 = vmul.f32 %v3623, 0.5
    %v3898 = vmul.f32 %v3625, 0.5
    %v3899 = vmul.f32 %v3709, 0.5
    %v3900 = vmul.f32 %v3711, 0.5
    %v3901 = vmul.f32 %v3795, 0.5
    %v3902 = vmul.f32 %v3797, 0.5
    %v3903 = vmul.f32 %v3881, 0.5
    %v3904 = vmul.f32 %v3883, 0.5
    %v3905 = vmul.f32 %v3283, 0.5
    %v3906 = vmul.f32 %v3285, 0.5
    %v3907 = vmul.f32 %v3369, 0.5
    %v3908 = vmul.f32 %v3371, 0.5
    %v3909 = vmul.f32 %v3455, 0.5
    %v3910 = vmul.f32 %v3457, 0.5
    %v3911 = vmul.f32 %v3541, 0.5
    %v3912 = vmul.f32 %v3543, 0.5
    %v3913 = vmul.f32 %v3627, 0.5
    %v3914 = vmul.f32 %v3629, 0.5
    %v3915 = vmul.f32 %v3713, 0.5
    %v3916 = vmul.f32 %v3715, 0.5
    %v3917 = vmul.f32 %v3799, 0.5
    %v3918 = vmul.f32 %v3801, 0.5
    %v3919 = vmul.f32 %v3885, 0.5
    %v3920 = vmul.f32 %v3887, 0.5
    %v3921 = vmul.f32 %v3279, 0.70710677
    %v3922 = vmul.f32 %v3281, 0.70710677
    %v3923 = vmul.f32 %v3365, 0.70710677
    %v3924 = vmul.f32 %v3367, 0.70710677
    %v3925 = vmul.f32 %v3451, 0.70710677
    %v3926 = vmul.f32 %v3453, 0.70710677
    %v3927 = vmul.f32 %v3537, 0.70710677
    %v3928 = vmul.f32 %v3539, 0.70710677
    %v3929 = vmul.f32 %v3623, 0.70710677
    %v3930 = vmul.f32 %v3625, 0.70710677
    %v3931 = vmul.f32 %v3709, 0.70710677
    %v3932 = vmul.f32 %v3711, 0.70710677
    %v3933 = vmul.f32 %v3795, 0.70710677
    %v3934 = vmul.f32 %v3797, 0.70710677
    %v3935 = vmul.f32 %v3881, 0.70710677
    %v3936 = vmul.f32 %v3883, 0.70710677
    %v3937 = vmul.f32 %v3283, 0.70710677
    %v3938 = vmul.f32 %v3285, 0.70710677
    %v3939 = vmul.f32 %v3369, 0.70710677
    %v3940 = vmul.f32 %v3371, 0.70710677
    %v3941 = vmul.f32 %v3455, 0.70710677
    %v3942 = vmul.f32 %v3457, 0.70710677
    %v3943 = vmul.f32 %v3541, 0.70710677
    %v3944 = vmul.f32 %v3543, 0.70710677
    %v3945 = vmul.f32 %v3627, 0.70710677
    %v3946 = vmul.f32 %v3629, 0.70710677
    %v3947 = vmul.f32 %v3713, 0.70710677
    %v3948 = vmul.f32 %v3715, 0.70710677
    %v3949 = vmul.f32 %v3799, 0.70710677
    %v3950 = vmul.f32 %v3801, 0.70710677
    %v3951 = vmul.f32 %v3885, 0.70710677
    %v3952 = vmul.f32 %v3887, 0.70710677
    %v3953 = verf.f32.pop %v3921
    %v3954 = verf.f32.pop %v3922
    %v3955 = verf.f32.pop %v3923
    %v3956 = verf.f32.pop %v3924
    %v3957 = verf.f32.pop %v3925
    %v3958 = verf.f32.pop %v3926
    %v3959 = verf.f32.pop %v3927
    %v3960 = verf.f32.pop %v3928
    %v3961 = verf.f32.pop %v3929
    %v3962 = verf.f32.pop %v3930
    %v3963 = verf.f32.pop %v3931
    %v3964 = verf.f32.pop %v3932
    %v3965 = verf.f32.pop %v3933
    %v3966 = verf.f32.pop %v3934
    %v3967 = verf.f32.pop %v3935
    %v3968 = verf.f32.pop %v3936
    %v3969 = verf.f32.pop %v3937
    %v3970 = verf.f32.pop %v3938
    %v3971 = verf.f32.pop %v3939
    %v3972 = verf.f32.pop %v3940
    %v3973 = verf.f32.pop %v3941
    %v3974 = verf.f32.pop %v3942
    %v3975 = verf.f32.pop %v3943
    %v3976 = verf.f32.pop %v3944
    %v3977 = verf.f32.pop %v3945
    %v3978 = verf.f32.pop %v3946
    %v3979 = verf.f32.pop %v3947
    %v3980 = verf.f32.pop %v3948
    %v3981 = verf.f32.pop %v3949
    %v3982 = verf.f32.pop %v3950
    %v3983 = verf.f32.pop %v3951
    %v3984 = verf.f32.pop %v3952
    %v3985 = vadd.f32 %v3953, 1.0
    %v3986 = vadd.f32 %v3954, 1.0
    %v3987 = vadd.f32 %v3955, 1.0
    %v3988 = vadd.f32 %v3956, 1.0
    %v3989 = vadd.f32 %v3957, 1.0
    %v3990 = vadd.f32 %v3958, 1.0
    %v3991 = vadd.f32 %v3959, 1.0
    %v3992 = vadd.f32 %v3960, 1.0
    %v3993 = vadd.f32 %v3961, 1.0
    %v3994 = vadd.f32 %v3962, 1.0
    %v3995 = vadd.f32 %v3963, 1.0
    %v3996 = vadd.f32 %v3964, 1.0
    %v3997 = vadd.f32 %v3965, 1.0
    %v3998 = vadd.f32 %v3966, 1.0
    %v3999 = vadd.f32 %v3967, 1.0
    %v4000 = vadd.f32 %v3968, 1.0
    %v4001 = vadd.f32 %v3969, 1.0
    %v4002 = vadd.f32 %v3970, 1.0
    %v4003 = vadd.f32 %v3971, 1.0
    %v4004 = vadd.f32 %v3972, 1.0
    %v4005 = vadd.f32 %v3973, 1.0
    %v4006 = vadd.f32 %v3974, 1.0
    %v4007 = vadd.f32 %v3975, 1.0
    %v4008 = vadd.f32 %v3976, 1.0
    %v4009 = vadd.f32 %v3977, 1.0
    %v4010 = vadd.f32 %v3978, 1.0
    %v4011 = vadd.f32 %v3979, 1.0
    %v4012 = vadd.f32 %v3980, 1.0
    %v4013 = vadd.f32 %v3981, 1.0
    %v4014 = vadd.f32 %v3982, 1.0
    %v4015 = vadd.f32 %v3983, 1.0
    %v4016 = vadd.f32 %v3984, 1.0
    %v4017 = vmul.f32 %v3889, %v3985
    %v4018 = vmul.f32 %v3890, %v3986
    %v4019 = vmul.f32 %v3891, %v3987
    %v4020 = vmul.f32 %v3892, %v3988
    %v4021 = vmul.f32 %v3893, %v3989
    %v4022 = vmul.f32 %v3894, %v3990
    %v4023 = vmul.f32 %v3895, %v3991
    %v4024 = vmul.f32 %v3896, %v3992
    %v4025 = vmul.f32 %v3897, %v3993
    %v4026 = vmul.f32 %v3898, %v3994
    %v4027 = vmul.f32 %v3899, %v3995
    %v4028 = vmul.f32 %v3900, %v3996
    %v4029 = vmul.f32 %v3901, %v3997
    %v4030 = vmul.f32 %v3902, %v3998
    %v4031 = vmul.f32 %v3903, %v3999
    %v4032 = vmul.f32 %v3904, %v4000
    %v4033 = vmul.f32 %v3905, %v4001
    %v4034 = vmul.f32 %v3906, %v4002
    %v4035 = vmul.f32 %v3907, %v4003
    %v4036 = vmul.f32 %v3908, %v4004
    %v4037 = vmul.f32 %v3909, %v4005
    %v4038 = vmul.f32 %v3910, %v4006
    %v4039 = vmul.f32 %v3911, %v4007
    %v4040 = vmul.f32 %v3912, %v4008
    %v4041 = vmul.f32 %v3913, %v4009
    %v4042 = vmul.f32 %v3914, %v4010
    %v4043 = vmul.f32 %v3915, %v4011
    %v4044 = vmul.f32 %v3916, %v4012
    %v4045 = vmul.f32 %v3917, %v4013
    %v4046 = vmul.f32 %v3918, %v4014
    %v4047 = vmul.f32 %v3919, %v4015
    %v4048 = vmul.f32 %v3920, %v4016
    %v4049 = vpack.c.bf16 %v4033, %v4017
    %v4050 = vpack.c.bf16 %v4034, %v4018
    %v4051 = vpack.c.bf16 %v4035, %v4019
    %v4052 = vpack.c.bf16 %v4036, %v4020
    %v4053 = vpack.c.bf16 %v4037, %v4021
    %v4054 = vpack.c.bf16 %v4038, %v4022
    %v4055 = vpack.c.bf16 %v4039, %v4023
    %v4056 = vpack.c.bf16 %v4040, %v4024
    %v4057 = vpack.c.bf16 %v4041, %v4025
    %v4058 = vpack.c.bf16 %v4042, %v4026
    %v4059 = vpack.c.bf16 %v4043, %v4027
    %v4060 = vpack.c.bf16 %v4044, %v4028
    %v4061 = vpack.c.bf16 %v4045, %v4029
    %v4062 = vpack.c.bf16 %v4046, %v4030
    %v4063 = vpack.c.bf16 %v4047, %v4031
    %v4064 = vpack.c.bf16 %v4048, %v4032
    %v4065 = vld [vmem:[%s3] sm:$0xff]
    %v4066 = vld [vmem:[%s3 + $0x8] sm:$0xff]
    %v4067 = vld [vmem:[%s3 + $0x10] sm:$0xff]
    %v4068 = vld [vmem:[%s3 + $0x18] sm:$0xff]
    %v4069 = vld [vmem:[%s3 + $0x20] sm:$0xff]
    %v4070 = vld [vmem:[%s3 + $0x28] sm:$0xff]
    %v4071 = vld [vmem:[%s3 + $0x30] sm:$0xff]
    %v4072 = vld [vmem:[%s3 + $0x38] sm:$0xff]
    %v4073 = vld [vmem:[%s3 + $0x40] sm:$0xff]
    %v4074 = vld [vmem:[%s3 + $0x48] sm:$0xff]
    %v4075 = vld [vmem:[%s3 + $0x50] sm:$0xff]
    %v4076 = vld [vmem:[%s3 + $0x58] sm:$0xff]
    %v4077 = vld [vmem:[%s3 + $0x60] sm:$0xff]
    %v4078 = vld [vmem:[%s3 + $0x68] sm:$0xff]
    %v4079 = vld [vmem:[%s3 + $0x70] sm:$0xff]
    %v4080 = vld [vmem:[%s3 + $0x78] sm:$0xff]
    %v4081 = vld [vmem:[%s3 + $0x80] sm:$0xff]
    %v4082 = vld [vmem:[%s3 + $0x88] sm:$0xff]
    %v4083 = vld [vmem:[%s3 + $0x90] sm:$0xff]
    %v4084 = vld [vmem:[%s3 + $0x98] sm:$0xff]
    %v4085 = vld [vmem:[%s3 + $0xa0] sm:$0xff]
    %v4086 = vld [vmem:[%s3 + $0xa8] sm:$0xff]
    %v4087 = vld [vmem:[%s3 + $0xb0] sm:$0xff]
    %v4088 = vld [vmem:[%s3 + $0xb8] sm:$0xff]
    %v4089 = vld [vmem:[%s3 + $0xc0] sm:$0xff]
    %v4090 = vld [vmem:[%s3 + $0xc8] sm:$0xff]
    %v4091 = vld [vmem:[%s3 + $0xd0] sm:$0xff]
    %v4092 = vld [vmem:[%s3 + $0xd8] sm:$0xff]
    %v4093 = vld [vmem:[%s3 + $0xe0] sm:$0xff]
    %v4094 = vld [vmem:[%s3 + $0xe8] sm:$0xff]
    %v4095 = vld [vmem:[%s3 + $0xf0] sm:$0xff]
    %v4096 = vld [vmem:[%s3 + $0xf8] sm:$0xff]
    %v4097 = vld [vmem:[%s3 + $0x100] sm:$0xff]
    %v4098 = vld [vmem:[%s3 + $0x108] sm:$0xff]
    %v4099 = vld [vmem:[%s3 + $0x110] sm:$0xff]
    %v4100 = vld [vmem:[%s3 + $0x118] sm:$0xff]
    %v4101 = vld [vmem:[%s3 + $0x120] sm:$0xff]
    %v4102 = vld [vmem:[%s3 + $0x128] sm:$0xff]
    %v4103 = vld [vmem:[%s3 + $0x130] sm:$0xff]
    %v4104 = vld [vmem:[%s3 + $0x138] sm:$0xff]
    %v4105 = vld [vmem:[%s3 + $0x140] sm:$0xff]
    %v4106 = vld [vmem:[%s3 + $0x148] sm:$0xff]
    %v4107 = vld [vmem:[%s3 + $0x150] sm:$0xff]
    %v4108 = vld [vmem:[%s3 + $0x158] sm:$0xff]
    %v4109 = vld [vmem:[%s3 + $0x160] sm:$0xff]
    %v4110 = vld [vmem:[%s3 + $0x168] sm:$0xff]
    %v4111 = vld [vmem:[%s3 + $0x170] sm:$0xff]
    %v4112 = vld [vmem:[%s3 + $0x178] sm:$0xff]
    %v4113 = vld [vmem:[%s3 + $0x180] sm:$0xff]
    %v4114 = vld [vmem:[%s3 + $0x188] sm:$0xff]
    %v4115 = vld [vmem:[%s3 + $0x190] sm:$0xff]
    %v4116 = vld [vmem:[%s3 + $0x198] sm:$0xff]
    %v4117 = vld [vmem:[%s3 + $0x1a0] sm:$0xff]
    %v4118 = vld [vmem:[%s3 + $0x1a8] sm:$0xff]
    %v4119 = vld [vmem:[%s3 + $0x1b0] sm:$0xff]
    %v4120 = vld [vmem:[%s3 + $0x1b8] sm:$0xff]
    %v4121 = vld [vmem:[%s3 + $0x1c0] sm:$0xff]
    %v4122 = vld [vmem:[%s3 + $0x1c8] sm:$0xff]
    %v4123 = vld [vmem:[%s3 + $0x1d0] sm:$0xff]
    %v4124 = vld [vmem:[%s3 + $0x1d8] sm:$0xff]
    %v4125 = vld [vmem:[%s3 + $0x1e0] sm:$0xff]
    %v4126 = vld [vmem:[%s3 + $0x1e8] sm:$0xff]
    %v4127 = vld [vmem:[%s3 + $0x1f0] sm:$0xff]
    %v4128 = vld [vmem:[%s3 + $0x1f8] sm:$0xff]
    %v4129 = vld [vmem:[%s3 + $0x200] sm:$0xff]
    %v4130 = vld [vmem:[%s3 + $0x208] sm:$0xff]
    %v4131 = vld [vmem:[%s3 + $0x210] sm:$0xff]
    %v4132 = vld [vmem:[%s3 + $0x218] sm:$0xff]
    %v4133 = vld [vmem:[%s3 + $0x220] sm:$0xff]
    %v4134 = vld [vmem:[%s3 + $0x228] sm:$0xff]
    %v4135 = vld [vmem:[%s3 + $0x230] sm:$0xff]
    %v4136 = vld [vmem:[%s3 + $0x238] sm:$0xff]
    %v4137 = vld [vmem:[%s3 + $0x240] sm:$0xff]
    %v4138 = vld [vmem:[%s3 + $0x248] sm:$0xff]
    %v4139 = vld [vmem:[%s3 + $0x250] sm:$0xff]
    %v4140 = vld [vmem:[%s3 + $0x258] sm:$0xff]
    %v4141 = vld [vmem:[%s3 + $0x260] sm:$0xff]
    %v4142 = vld [vmem:[%s3 + $0x268] sm:$0xff]
    %v4143 = vld [vmem:[%s3 + $0x270] sm:$0xff]
    %v4144 = vld [vmem:[%s3 + $0x278] sm:$0xff]
    %v4145 = vld [vmem:[%s3 + $0x280] sm:$0xff]
    %v4146 = vld [vmem:[%s3 + $0x288] sm:$0xff]
    %v4147 = vld [vmem:[%s3 + $0x290] sm:$0xff]
    %v4148 = vld [vmem:[%s3 + $0x298] sm:$0xff]
    %v4149 = vld [vmem:[%s3 + $0x2a0] sm:$0xff]
    %v4150 = vld [vmem:[%s3 + $0x2a8] sm:$0xff]
    %v4151 = vld [vmem:[%s3 + $0x2b0] sm:$0xff]
    %v4152 = vld [vmem:[%s3 + $0x2b8] sm:$0xff]
    %v4153 = vld [vmem:[%s3 + $0x2c0] sm:$0xff]
    %v4154 = vld [vmem:[%s3 + $0x2c8] sm:$0xff]
    %v4155 = vld [vmem:[%s3 + $0x2d0] sm:$0xff]
    %v4156 = vld [vmem:[%s3 + $0x2d8] sm:$0xff]
    %v4157 = vld [vmem:[%s3 + $0x2e0] sm:$0xff]
    %v4158 = vld [vmem:[%s3 + $0x2e8] sm:$0xff]
    %v4159 = vld [vmem:[%s3 + $0x2f0] sm:$0xff]
    %v4160 = vld [vmem:[%s3 + $0x2f8] sm:$0xff]
    %v4161 = vld [vmem:[%s3 + $0x300] sm:$0xff]
    %v4162 = vld [vmem:[%s3 + $0x308] sm:$0xff]
    %v4163 = vld [vmem:[%s3 + $0x310] sm:$0xff]
    %v4164 = vld [vmem:[%s3 + $0x318] sm:$0xff]
    %v4165 = vld [vmem:[%s3 + $0x320] sm:$0xff]
    %v4166 = vld [vmem:[%s3 + $0x328] sm:$0xff]
    %v4167 = vld [vmem:[%s3 + $0x330] sm:$0xff]
    %v4168 = vld [vmem:[%s3 + $0x338] sm:$0xff]
    %v4169 = vld [vmem:[%s3 + $0x340] sm:$0xff]
    %v4170 = vld [vmem:[%s3 + $0x348] sm:$0xff]
    %v4171 = vld [vmem:[%s3 + $0x350] sm:$0xff]
    %v4172 = vld [vmem:[%s3 + $0x358] sm:$0xff]
    %v4173 = vld [vmem:[%s3 + $0x360] sm:$0xff]
    %v4174 = vld [vmem:[%s3 + $0x368] sm:$0xff]
    %v4175 = vld [vmem:[%s3 + $0x370] sm:$0xff]
    %v4176 = vld [vmem:[%s3 + $0x378] sm:$0xff]
    %v4177 = vld [vmem:[%s3 + $0x380] sm:$0xff]
    %v4178 = vld [vmem:[%s3 + $0x388] sm:$0xff]
    %v4179 = vld [vmem:[%s3 + $0x390] sm:$0xff]
    %v4180 = vld [vmem:[%s3 + $0x398] sm:$0xff]
    %v4181 = vld [vmem:[%s3 + $0x3a0] sm:$0xff]
    %v4182 = vld [vmem:[%s3 + $0x3a8] sm:$0xff]
    %v4183 = vld [vmem:[%s3 + $0x3b0] sm:$0xff]
    %v4184 = vld [vmem:[%s3 + $0x3b8] sm:$0xff]
    %v4185 = vld [vmem:[%s3 + $0x3c0] sm:$0xff]
    %v4186 = vld [vmem:[%s3 + $0x3c8] sm:$0xff]
    %v4187 = vld [vmem:[%s3 + $0x3d0] sm:$0xff]
    %v4188 = vld [vmem:[%s3 + $0x3d8] sm:$0xff]
    %v4189 = vld [vmem:[%s3 + $0x3e0] sm:$0xff]
    %v4190 = vld [vmem:[%s3 + $0x3e8] sm:$0xff]
    %v4191 = vld [vmem:[%s3 + $0x3f0] sm:$0xff]
    %v4192 = vld [vmem:[%s3 + $0x3f8] sm:$0xff]
    %v4193 = vld [vmem:[%s3 + $0x400] sm:$0xff]
    %v4194 = vld [vmem:[%s3 + $0x408] sm:$0xff]
    %v4195 = vld [vmem:[%s3 + $0x410] sm:$0xff]
    %v4196 = vld [vmem:[%s3 + $0x418] sm:$0xff]
    %v4197 = vld [vmem:[%s3 + $0x420] sm:$0xff]
    %v4198 = vld [vmem:[%s3 + $0x428] sm:$0xff]
    %v4199 = vld [vmem:[%s3 + $0x430] sm:$0xff]
    %v4200 = vld [vmem:[%s3 + $0x438] sm:$0xff]
    %v4201 = vld [vmem:[%s3 + $0x440] sm:$0xff]
    %v4202 = vld [vmem:[%s3 + $0x448] sm:$0xff]
    %v4203 = vld [vmem:[%s3 + $0x450] sm:$0xff]
    %v4204 = vld [vmem:[%s3 + $0x458] sm:$0xff]
    %v4205 = vld [vmem:[%s3 + $0x460] sm:$0xff]
    %v4206 = vld [vmem:[%s3 + $0x468] sm:$0xff]
    %v4207 = vld [vmem:[%s3 + $0x470] sm:$0xff]
    %v4208 = vld [vmem:[%s3 + $0x478] sm:$0xff]
    %v4209 = vld [vmem:[%s3 + $0x480] sm:$0xff]
    %v4210 = vld [vmem:[%s3 + $0x488] sm:$0xff]
    %v4211 = vld [vmem:[%s3 + $0x490] sm:$0xff]
    %v4212 = vld [vmem:[%s3 + $0x498] sm:$0xff]
    %v4213 = vld [vmem:[%s3 + $0x4a0] sm:$0xff]
    %v4214 = vld [vmem:[%s3 + $0x4a8] sm:$0xff]
    %v4215 = vld [vmem:[%s3 + $0x4b0] sm:$0xff]
    %v4216 = vld [vmem:[%s3 + $0x4b8] sm:$0xff]
    %v4217 = vld [vmem:[%s3 + $0x4c0] sm:$0xff]
    %v4218 = vld [vmem:[%s3 + $0x4c8] sm:$0xff]
    %v4219 = vld [vmem:[%s3 + $0x4d0] sm:$0xff]
    %v4220 = vld [vmem:[%s3 + $0x4d8] sm:$0xff]
    %v4221 = vld [vmem:[%s3 + $0x4e0] sm:$0xff]
    %v4222 = vld [vmem:[%s3 + $0x4e8] sm:$0xff]
    %v4223 = vld [vmem:[%s3 + $0x4f0] sm:$0xff]
    %v4224 = vld [vmem:[%s3 + $0x4f8] sm:$0xff]
    %v4225 = vld [vmem:[%s3 + $0x500] sm:$0xff]
    %v4226 = vld [vmem:[%s3 + $0x508] sm:$0xff]
    %v4227 = vld [vmem:[%s3 + $0x510] sm:$0xff]
    %v4228 = vld [vmem:[%s3 + $0x518] sm:$0xff]
    %v4229 = vld [vmem:[%s3 + $0x520] sm:$0xff]
    %v4230 = vld [vmem:[%s3 + $0x528] sm:$0xff]
    %v4231 = vld [vmem:[%s3 + $0x530] sm:$0xff]
    %v4232 = vld [vmem:[%s3 + $0x538] sm:$0xff]
    %v4233 = vld [vmem:[%s3 + $0x540] sm:$0xff]
    %v4234 = vld [vmem:[%s3 + $0x548] sm:$0xff]
    %v4235 = vld [vmem:[%s3 + $0x550] sm:$0xff]
    %v4236 = vld [vmem:[%s3 + $0x558] sm:$0xff]
    %v4237 = vld [vmem:[%s3 + $0x560] sm:$0xff]
    %v4238 = vld [vmem:[%s3 + $0x568] sm:$0xff]
    %v4239 = vld [vmem:[%s3 + $0x570] sm:$0xff]
    %v4240 = vld [vmem:[%s3 + $0x578] sm:$0xff]
    %v4241 = vld [vmem:[%s3 + $0x580] sm:$0xff]
    %v4242 = vld [vmem:[%s3 + $0x588] sm:$0xff]
    %v4243 = vld [vmem:[%s3 + $0x590] sm:$0xff]
    %v4244 = vld [vmem:[%s3 + $0x598] sm:$0xff]
    %v4245 = vld [vmem:[%s3 + $0x5a0] sm:$0xff]
    %v4246 = vld [vmem:[%s3 + $0x5a8] sm:$0xff]
    %v4247 = vld [vmem:[%s3 + $0x5b0] sm:$0xff]
    %v4248 = vld [vmem:[%s3 + $0x5b8] sm:$0xff]
    %v4249 = vld [vmem:[%s3 + $0x5c0] sm:$0xff]
    %v4250 = vld [vmem:[%s3 + $0x5c8] sm:$0xff]
    %v4251 = vld [vmem:[%s3 + $0x5d0] sm:$0xff]
    %v4252 = vld [vmem:[%s3 + $0x5d8] sm:$0xff]
    %v4253 = vld [vmem:[%s3 + $0x5e0] sm:$0xff]
    %v4254 = vld [vmem:[%s3 + $0x5e8] sm:$0xff]
    %v4255 = vld [vmem:[%s3 + $0x5f0] sm:$0xff]
    %v4256 = vld [vmem:[%s3 + $0x5f8] sm:$0xff]
    %v4257 = vld [vmem:[%s3 + $0x600] sm:$0xff]
    %v4258 = vld [vmem:[%s3 + $0x608] sm:$0xff]
    %v4259 = vld [vmem:[%s3 + $0x610] sm:$0xff]
    %v4260 = vld [vmem:[%s3 + $0x618] sm:$0xff]
    %v4261 = vld [vmem:[%s3 + $0x620] sm:$0xff]
    %v4262 = vld [vmem:[%s3 + $0x628] sm:$0xff]
    %v4263 = vld [vmem:[%s3 + $0x630] sm:$0xff]
    %v4264 = vld [vmem:[%s3 + $0x638] sm:$0xff]
    %v4265 = vld [vmem:[%s3 + $0x640] sm:$0xff]
    %v4266 = vld [vmem:[%s3 + $0x648] sm:$0xff]
    %v4267 = vld [vmem:[%s3 + $0x650] sm:$0xff]
    %v4268 = vld [vmem:[%s3 + $0x658] sm:$0xff]
    %v4269 = vld [vmem:[%s3 + $0x660] sm:$0xff]
    %v4270 = vld [vmem:[%s3 + $0x668] sm:$0xff]
    %v4271 = vld [vmem:[%s3 + $0x670] sm:$0xff]
    %v4272 = vld [vmem:[%s3 + $0x678] sm:$0xff]
    %v4273 = vld [vmem:[%s3 + $0x680] sm:$0xff]
    %v4274 = vld [vmem:[%s3 + $0x688] sm:$0xff]
    %v4275 = vld [vmem:[%s3 + $0x690] sm:$0xff]
    %v4276 = vld [vmem:[%s3 + $0x698] sm:$0xff]
    %v4277 = vld [vmem:[%s3 + $0x6a0] sm:$0xff]
    %v4278 = vld [vmem:[%s3 + $0x6a8] sm:$0xff]
    %v4279 = vld [vmem:[%s3 + $0x6b0] sm:$0xff]
    %v4280 = vld [vmem:[%s3 + $0x6b8] sm:$0xff]
    %v4281 = vld [vmem:[%s3 + $0x6c0] sm:$0xff]
    %v4282 = vld [vmem:[%s3 + $0x6c8] sm:$0xff]
    %v4283 = vld [vmem:[%s3 + $0x6d0] sm:$0xff]
    %v4284 = vld [vmem:[%s3 + $0x6d8] sm:$0xff]
    %v4285 = vld [vmem:[%s3 + $0x6e0] sm:$0xff]
    %v4286 = vld [vmem:[%s3 + $0x6e8] sm:$0xff]
    %v4287 = vld [vmem:[%s3 + $0x6f0] sm:$0xff]
    %v4288 = vld [vmem:[%s3 + $0x6f8] sm:$0xff]
    %v4289 = vld [vmem:[%s3 + $0x700] sm:$0xff]
    %v4290 = vld [vmem:[%s3 + $0x708] sm:$0xff]
    %v4291 = vld [vmem:[%s3 + $0x710] sm:$0xff]
    %v4292 = vld [vmem:[%s3 + $0x718] sm:$0xff]
    %v4293 = vld [vmem:[%s3 + $0x720] sm:$0xff]
    %v4294 = vld [vmem:[%s3 + $0x728] sm:$0xff]
    %v4295 = vld [vmem:[%s3 + $0x730] sm:$0xff]
    %v4296 = vld [vmem:[%s3 + $0x738] sm:$0xff]
    %v4297 = vld [vmem:[%s3 + $0x740] sm:$0xff]
    %v4298 = vld [vmem:[%s3 + $0x748] sm:$0xff]
    %v4299 = vld [vmem:[%s3 + $0x750] sm:$0xff]
    %v4300 = vld [vmem:[%s3 + $0x758] sm:$0xff]
    %v4301 = vld [vmem:[%s3 + $0x760] sm:$0xff]
    %v4302 = vld [vmem:[%s3 + $0x768] sm:$0xff]
    %v4303 = vld [vmem:[%s3 + $0x770] sm:$0xff]
    %v4304 = vld [vmem:[%s3 + $0x778] sm:$0xff]
    %v4305 = vld [vmem:[%s3 + $0x780] sm:$0xff]
    %v4306 = vld [vmem:[%s3 + $0x788] sm:$0xff]
    %v4307 = vld [vmem:[%s3 + $0x790] sm:$0xff]
    %v4308 = vld [vmem:[%s3 + $0x798] sm:$0xff]
    %v4309 = vld [vmem:[%s3 + $0x7a0] sm:$0xff]
    %v4310 = vld [vmem:[%s3 + $0x7a8] sm:$0xff]
    %v4311 = vld [vmem:[%s3 + $0x7b0] sm:$0xff]
    %v4312 = vld [vmem:[%s3 + $0x7b8] sm:$0xff]
    %v4313 = vld [vmem:[%s3 + $0x7c0] sm:$0xff]
    %v4314 = vld [vmem:[%s3 + $0x7c8] sm:$0xff]
    %v4315 = vld [vmem:[%s3 + $0x7d0] sm:$0xff]
    %v4316 = vld [vmem:[%s3 + $0x7d8] sm:$0xff]
    %v4317 = vld [vmem:[%s3 + $0x7e0] sm:$0xff]
    %v4318 = vld [vmem:[%s3 + $0x7e8] sm:$0xff]
    %v4319 = vld [vmem:[%s3 + $0x7f0] sm:$0xff]
    %v4320 = vld [vmem:[%s3 + $0x7f8] sm:$0xff]
    %v4321 = vld [vmem:[%s3 + $0x800] sm:$0xff]
    %v4322 = vld [vmem:[%s3 + $0x808] sm:$0xff]
    %v4323 = vld [vmem:[%s3 + $0x810] sm:$0xff]
    %v4324 = vld [vmem:[%s3 + $0x818] sm:$0xff]
    %v4325 = vld [vmem:[%s3 + $0x820] sm:$0xff]
    %v4326 = vld [vmem:[%s3 + $0x828] sm:$0xff]
    %v4327 = vld [vmem:[%s3 + $0x830] sm:$0xff]
    %v4328 = vld [vmem:[%s3 + $0x838] sm:$0xff]
    %v4329 = vld [vmem:[%s3 + $0x840] sm:$0xff]
    %v4330 = vld [vmem:[%s3 + $0x848] sm:$0xff]
    %v4331 = vld [vmem:[%s3 + $0x850] sm:$0xff]
    %v4332 = vld [vmem:[%s3 + $0x858] sm:$0xff]
    %v4333 = vld [vmem:[%s3 + $0x860] sm:$0xff]
    %v4334 = vld [vmem:[%s3 + $0x868] sm:$0xff]
    %v4335 = vld [vmem:[%s3 + $0x870] sm:$0xff]
    %v4336 = vld [vmem:[%s3 + $0x878] sm:$0xff]
    %v4337 = vld [vmem:[%s3 + $0x880] sm:$0xff]
    %v4338 = vld [vmem:[%s3 + $0x888] sm:$0xff]
    %v4339 = vld [vmem:[%s3 + $0x890] sm:$0xff]
    %v4340 = vld [vmem:[%s3 + $0x898] sm:$0xff]
    %v4341 = vld [vmem:[%s3 + $0x8a0] sm:$0xff]
    %v4342 = vld [vmem:[%s3 + $0x8a8] sm:$0xff]
    %v4343 = vld [vmem:[%s3 + $0x8b0] sm:$0xff]
    %v4344 = vld [vmem:[%s3 + $0x8b8] sm:$0xff]
    %v4345 = vld [vmem:[%s3 + $0x8c0] sm:$0xff]
    %v4346 = vld [vmem:[%s3 + $0x8c8] sm:$0xff]
    %v4347 = vld [vmem:[%s3 + $0x8d0] sm:$0xff]
    %v4348 = vld [vmem:[%s3 + $0x8d8] sm:$0xff]
    %v4349 = vld [vmem:[%s3 + $0x8e0] sm:$0xff]
    %v4350 = vld [vmem:[%s3 + $0x8e8] sm:$0xff]
    %v4351 = vld [vmem:[%s3 + $0x8f0] sm:$0xff]
    %v4352 = vld [vmem:[%s3 + $0x8f8] sm:$0xff]
    %v4353 = vld [vmem:[%s3 + $0x900] sm:$0xff]
    %v4354 = vld [vmem:[%s3 + $0x908] sm:$0xff]
    %v4355 = vld [vmem:[%s3 + $0x910] sm:$0xff]
    %v4356 = vld [vmem:[%s3 + $0x918] sm:$0xff]
    %v4357 = vld [vmem:[%s3 + $0x920] sm:$0xff]
    %v4358 = vld [vmem:[%s3 + $0x928] sm:$0xff]
    %v4359 = vld [vmem:[%s3 + $0x930] sm:$0xff]
    %v4360 = vld [vmem:[%s3 + $0x938] sm:$0xff]
    %v4361 = vld [vmem:[%s3 + $0x940] sm:$0xff]
    %v4362 = vld [vmem:[%s3 + $0x948] sm:$0xff]
    %v4363 = vld [vmem:[%s3 + $0x950] sm:$0xff]
    %v4364 = vld [vmem:[%s3 + $0x958] sm:$0xff]
    %v4365 = vld [vmem:[%s3 + $0x960] sm:$0xff]
    %v4366 = vld [vmem:[%s3 + $0x968] sm:$0xff]
    %v4367 = vld [vmem:[%s3 + $0x970] sm:$0xff]
    %v4368 = vld [vmem:[%s3 + $0x978] sm:$0xff]
    %v4369 = vld [vmem:[%s3 + $0x980] sm:$0xff]
    %v4370 = vld [vmem:[%s3 + $0x988] sm:$0xff]
    %v4371 = vld [vmem:[%s3 + $0x990] sm:$0xff]
    %v4372 = vld [vmem:[%s3 + $0x998] sm:$0xff]
    %v4373 = vld [vmem:[%s3 + $0x9a0] sm:$0xff]
    %v4374 = vld [vmem:[%s3 + $0x9a8] sm:$0xff]
    %v4375 = vld [vmem:[%s3 + $0x9b0] sm:$0xff]
    %v4376 = vld [vmem:[%s3 + $0x9b8] sm:$0xff]
    %v4377 = vld [vmem:[%s3 + $0x9c0] sm:$0xff]
    %v4378 = vld [vmem:[%s3 + $0x9c8] sm:$0xff]
    %v4379 = vld [vmem:[%s3 + $0x9d0] sm:$0xff]
    %v4380 = vld [vmem:[%s3 + $0x9d8] sm:$0xff]
    %v4381 = vld [vmem:[%s3 + $0x9e0] sm:$0xff]
    %v4382 = vld [vmem:[%s3 + $0x9e8] sm:$0xff]
    %v4383 = vld [vmem:[%s3 + $0x9f0] sm:$0xff]
    %v4384 = vld [vmem:[%s3 + $0x9f8] sm:$0xff]
    %v4385 = vld [vmem:[%s3 + $0xa00] sm:$0xff]
    %v4386 = vld [vmem:[%s3 + $0xa08] sm:$0xff]
    %v4387 = vld [vmem:[%s3 + $0xa10] sm:$0xff]
    %v4388 = vld [vmem:[%s3 + $0xa18] sm:$0xff]
    %v4389 = vld [vmem:[%s3 + $0xa20] sm:$0xff]
    %v4390 = vld [vmem:[%s3 + $0xa28] sm:$0xff]
    %v4391 = vld [vmem:[%s3 + $0xa30] sm:$0xff]
    %v4392 = vld [vmem:[%s3 + $0xa38] sm:$0xff]
    %v4393 = vld [vmem:[%s3 + $0xa40] sm:$0xff]
    %v4394 = vld [vmem:[%s3 + $0xa48] sm:$0xff]
    %v4395 = vld [vmem:[%s3 + $0xa50] sm:$0xff]
    %v4396 = vld [vmem:[%s3 + $0xa58] sm:$0xff]
    %v4397 = vld [vmem:[%s3 + $0xa60] sm:$0xff]
    %v4398 = vld [vmem:[%s3 + $0xa68] sm:$0xff]
    %v4399 = vld [vmem:[%s3 + $0xa70] sm:$0xff]
    %v4400 = vld [vmem:[%s3 + $0xa78] sm:$0xff]
    %v4401 = vld [vmem:[%s3 + $0xa80] sm:$0xff]
    %v4402 = vld [vmem:[%s3 + $0xa88] sm:$0xff]
    %v4403 = vld [vmem:[%s3 + $0xa90] sm:$0xff]
    %v4404 = vld [vmem:[%s3 + $0xa98] sm:$0xff]
    %v4405 = vld [vmem:[%s3 + $0xaa0] sm:$0xff]
    %v4406 = vld [vmem:[%s3 + $0xaa8] sm:$0xff]
    %v4407 = vld [vmem:[%s3 + $0xab0] sm:$0xff]
    %v4408 = vld [vmem:[%s3 + $0xab8] sm:$0xff]
    %v4409 = vld [vmem:[%s3 + $0xac0] sm:$0xff]
    %v4410 = vld [vmem:[%s3 + $0xac8] sm:$0xff]
    %v4411 = vld [vmem:[%s3 + $0xad0] sm:$0xff]
    %v4412 = vld [vmem:[%s3 + $0xad8] sm:$0xff]
    %v4413 = vld [vmem:[%s3 + $0xae0] sm:$0xff]
    %v4414 = vld [vmem:[%s3 + $0xae8] sm:$0xff]
    %v4415 = vld [vmem:[%s3 + $0xaf0] sm:$0xff]
    %v4416 = vld [vmem:[%s3 + $0xaf8] sm:$0xff]
    %v4417 = vld [vmem:[%s3 + $0xb00] sm:$0xff]
    %v4418 = vld [vmem:[%s3 + $0xb08] sm:$0xff]
    %v4419 = vld [vmem:[%s3 + $0xb10] sm:$0xff]
    %v4420 = vld [vmem:[%s3 + $0xb18] sm:$0xff]
    %v4421 = vld [vmem:[%s3 + $0xb20] sm:$0xff]
    %v4422 = vld [vmem:[%s3 + $0xb28] sm:$0xff]
    %v4423 = vld [vmem:[%s3 + $0xb30] sm:$0xff]
    %v4424 = vld [vmem:[%s3 + $0xb38] sm:$0xff]
    %v4425 = vld [vmem:[%s3 + $0xb40] sm:$0xff]
    %v4426 = vld [vmem:[%s3 + $0xb48] sm:$0xff]
    %v4427 = vld [vmem:[%s3 + $0xb50] sm:$0xff]
    %v4428 = vld [vmem:[%s3 + $0xb58] sm:$0xff]
    %v4429 = vld [vmem:[%s3 + $0xb60] sm:$0xff]
    %v4430 = vld [vmem:[%s3 + $0xb68] sm:$0xff]
    %v4431 = vld [vmem:[%s3 + $0xb70] sm:$0xff]
    %v4432 = vld [vmem:[%s3 + $0xb78] sm:$0xff]
    %v4433 = vld [vmem:[%s3 + $0xb80] sm:$0xff]
    %v4434 = vld [vmem:[%s3 + $0xb88] sm:$0xff]
    %v4435 = vld [vmem:[%s3 + $0xb90] sm:$0xff]
    %v4436 = vld [vmem:[%s3 + $0xb98] sm:$0xff]
    %v4437 = vld [vmem:[%s3 + $0xba0] sm:$0xff]
    %v4438 = vld [vmem:[%s3 + $0xba8] sm:$0xff]
    %v4439 = vld [vmem:[%s3 + $0xbb0] sm:$0xff]
    %v4440 = vld [vmem:[%s3 + $0xbb8] sm:$0xff]
    %v4441 = vld [vmem:[%s3 + $0xbc0] sm:$0xff]
    %v4442 = vld [vmem:[%s3 + $0xbc8] sm:$0xff]
    %v4443 = vld [vmem:[%s3 + $0xbd0] sm:$0xff]
    %v4444 = vld [vmem:[%s3 + $0xbd8] sm:$0xff]
    %v4445 = vld [vmem:[%s3 + $0xbe0] sm:$0xff]
    %v4446 = vld [vmem:[%s3 + $0xbe8] sm:$0xff]
    %v4447 = vld [vmem:[%s3 + $0xbf0] sm:$0xff]
    %v4448 = vld [vmem:[%s3 + $0xbf8] sm:$0xff]
    %v4449 = vld [vmem:[%s3 + $0xc00] sm:$0xff]
    %v4450 = vld [vmem:[%s3 + $0xc08] sm:$0xff]
    %v4451 = vld [vmem:[%s3 + $0xc10] sm:$0xff]
    %v4452 = vld [vmem:[%s3 + $0xc18] sm:$0xff]
    %v4453 = vld [vmem:[%s3 + $0xc20] sm:$0xff]
    %v4454 = vld [vmem:[%s3 + $0xc28] sm:$0xff]
    %v4455 = vld [vmem:[%s3 + $0xc30] sm:$0xff]
    %v4456 = vld [vmem:[%s3 + $0xc38] sm:$0xff]
    %v4457 = vld [vmem:[%s3 + $0xc40] sm:$0xff]
    %v4458 = vld [vmem:[%s3 + $0xc48] sm:$0xff]
    %v4459 = vld [vmem:[%s3 + $0xc50] sm:$0xff]
    %v4460 = vld [vmem:[%s3 + $0xc58] sm:$0xff]
    %v4461 = vld [vmem:[%s3 + $0xc60] sm:$0xff]
    %v4462 = vld [vmem:[%s3 + $0xc68] sm:$0xff]
    %v4463 = vld [vmem:[%s3 + $0xc70] sm:$0xff]
    %v4464 = vld [vmem:[%s3 + $0xc78] sm:$0xff]
    %v4465 = vld [vmem:[%s3 + $0xc80] sm:$0xff]
    %v4466 = vld [vmem:[%s3 + $0xc88] sm:$0xff]
    %v4467 = vld [vmem:[%s3 + $0xc90] sm:$0xff]
    %v4468 = vld [vmem:[%s3 + $0xc98] sm:$0xff]
    %v4469 = vld [vmem:[%s3 + $0xca0] sm:$0xff]
    %v4470 = vld [vmem:[%s3 + $0xca8] sm:$0xff]
    %v4471 = vld [vmem:[%s3 + $0xcb0] sm:$0xff]
    %v4472 = vld [vmem:[%s3 + $0xcb8] sm:$0xff]
    %v4473 = vld [vmem:[%s3 + $0xcc0] sm:$0xff]
    %v4474 = vld [vmem:[%s3 + $0xcc8] sm:$0xff]
    %v4475 = vld [vmem:[%s3 + $0xcd0] sm:$0xff]
    %v4476 = vld [vmem:[%s3 + $0xcd8] sm:$0xff]
    %v4477 = vld [vmem:[%s3 + $0xce0] sm:$0xff]
    %v4478 = vld [vmem:[%s3 + $0xce8] sm:$0xff]
    %v4479 = vld [vmem:[%s3 + $0xcf0] sm:$0xff]
    %v4480 = vld [vmem:[%s3 + $0xcf8] sm:$0xff]
    %v4481 = vld [vmem:[%s3 + $0xd00] sm:$0xff]
    %v4482 = vld [vmem:[%s3 + $0xd08] sm:$0xff]
    %v4483 = vld [vmem:[%s3 + $0xd10] sm:$0xff]
    %v4484 = vld [vmem:[%s3 + $0xd18] sm:$0xff]
    %v4485 = vld [vmem:[%s3 + $0xd20] sm:$0xff]
    %v4486 = vld [vmem:[%s3 + $0xd28] sm:$0xff]
    %v4487 = vld [vmem:[%s3 + $0xd30] sm:$0xff]
    %v4488 = vld [vmem:[%s3 + $0xd38] sm:$0xff]
    %v4489 = vld [vmem:[%s3 + $0xd40] sm:$0xff]
    %v4490 = vld [vmem:[%s3 + $0xd48] sm:$0xff]
    %v4491 = vld [vmem:[%s3 + $0xd50] sm:$0xff]
    %v4492 = vld [vmem:[%s3 + $0xd58] sm:$0xff]
    %v4493 = vld [vmem:[%s3 + $0xd60] sm:$0xff]
    %v4494 = vld [vmem:[%s3 + $0xd68] sm:$0xff]
    %v4495 = vld [vmem:[%s3 + $0xd70] sm:$0xff]
    %v4496 = vld [vmem:[%s3 + $0xd78] sm:$0xff]
    %v4497 = vld [vmem:[%s3 + $0xd80] sm:$0xff]
    %v4498 = vld [vmem:[%s3 + $0xd88] sm:$0xff]
    %v4499 = vld [vmem:[%s3 + $0xd90] sm:$0xff]
    %v4500 = vld [vmem:[%s3 + $0xd98] sm:$0xff]
    %v4501 = vld [vmem:[%s3 + $0xda0] sm:$0xff]
    %v4502 = vld [vmem:[%s3 + $0xda8] sm:$0xff]
    %v4503 = vld [vmem:[%s3 + $0xdb0] sm:$0xff]
    %v4504 = vld [vmem:[%s3 + $0xdb8] sm:$0xff]
    %v4505 = vld [vmem:[%s3 + $0xdc0] sm:$0xff]
    %v4506 = vld [vmem:[%s3 + $0xdc8] sm:$0xff]
    %v4507 = vld [vmem:[%s3 + $0xdd0] sm:$0xff]
    %v4508 = vld [vmem:[%s3 + $0xdd8] sm:$0xff]
    %v4509 = vld [vmem:[%s3 + $0xde0] sm:$0xff]
    %v4510 = vld [vmem:[%s3 + $0xde8] sm:$0xff]
    %v4511 = vld [vmem:[%s3 + $0xdf0] sm:$0xff]
    %v4512 = vld [vmem:[%s3 + $0xdf8] sm:$0xff]
    %v4513 = vld [vmem:[%s3 + $0xe00] sm:$0xff]
    %v4514 = vld [vmem:[%s3 + $0xe08] sm:$0xff]
    %v4515 = vld [vmem:[%s3 + $0xe10] sm:$0xff]
    %v4516 = vld [vmem:[%s3 + $0xe18] sm:$0xff]
    %v4517 = vld [vmem:[%s3 + $0xe20] sm:$0xff]
    %v4518 = vld [vmem:[%s3 + $0xe28] sm:$0xff]
    %v4519 = vld [vmem:[%s3 + $0xe30] sm:$0xff]
    %v4520 = vld [vmem:[%s3 + $0xe38] sm:$0xff]
    %v4521 = vld [vmem:[%s3 + $0xe40] sm:$0xff]
    %v4522 = vld [vmem:[%s3 + $0xe48] sm:$0xff]
    %v4523 = vld [vmem:[%s3 + $0xe50] sm:$0xff]
    %v4524 = vld [vmem:[%s3 + $0xe58] sm:$0xff]
    %v4525 = vld [vmem:[%s3 + $0xe60] sm:$0xff]
    %v4526 = vld [vmem:[%s3 + $0xe68] sm:$0xff]
    %v4527 = vld [vmem:[%s3 + $0xe70] sm:$0xff]
    %v4528 = vld [vmem:[%s3 + $0xe78] sm:$0xff]
    %v4529 = vld [vmem:[%s3 + $0xe80] sm:$0xff]
    %v4530 = vld [vmem:[%s3 + $0xe88] sm:$0xff]
    %v4531 = vld [vmem:[%s3 + $0xe90] sm:$0xff]
    %v4532 = vld [vmem:[%s3 + $0xe98] sm:$0xff]
    %v4533 = vld [vmem:[%s3 + $0xea0] sm:$0xff]
    %v4534 = vld [vmem:[%s3 + $0xea8] sm:$0xff]
    %v4535 = vld [vmem:[%s3 + $0xeb0] sm:$0xff]
    %v4536 = vld [vmem:[%s3 + $0xeb8] sm:$0xff]
    %v4537 = vld [vmem:[%s3 + $0xec0] sm:$0xff]
    %v4538 = vld [vmem:[%s3 + $0xec8] sm:$0xff]
    %v4539 = vld [vmem:[%s3 + $0xed0] sm:$0xff]
    %v4540 = vld [vmem:[%s3 + $0xed8] sm:$0xff]
    %v4541 = vld [vmem:[%s3 + $0xee0] sm:$0xff]
    %v4542 = vld [vmem:[%s3 + $0xee8] sm:$0xff]
    %v4543 = vld [vmem:[%s3 + $0xef0] sm:$0xff]
    %v4544 = vld [vmem:[%s3 + $0xef8] sm:$0xff]
    %v4545 = vld [vmem:[%s3 + $0xf00] sm:$0xff]
    %v4546 = vld [vmem:[%s3 + $0xf08] sm:$0xff]
    %v4547 = vld [vmem:[%s3 + $0xf10] sm:$0xff]
    %v4548 = vld [vmem:[%s3 + $0xf18] sm:$0xff]
    %v4549 = vld [vmem:[%s3 + $0xf20] sm:$0xff]
    %v4550 = vld [vmem:[%s3 + $0xf28] sm:$0xff]
    %v4551 = vld [vmem:[%s3 + $0xf30] sm:$0xff]
    %v4552 = vld [vmem:[%s3 + $0xf38] sm:$0xff]
    %v4553 = vld [vmem:[%s3 + $0xf40] sm:$0xff]
    %v4554 = vld [vmem:[%s3 + $0xf48] sm:$0xff]
    %v4555 = vld [vmem:[%s3 + $0xf50] sm:$0xff]
    %v4556 = vld [vmem:[%s3 + $0xf58] sm:$0xff]
    %v4557 = vld [vmem:[%s3 + $0xf60] sm:$0xff]
    %v4558 = vld [vmem:[%s3 + $0xf68] sm:$0xff]
    %v4559 = vld [vmem:[%s3 + $0xf70] sm:$0xff]
    %v4560 = vld [vmem:[%s3 + $0xf78] sm:$0xff]
    %v4561 = vld [vmem:[%s3 + $0xf80] sm:$0xff]
    %v4562 = vld [vmem:[%s3 + $0xf88] sm:$0xff]
    %v4563 = vld [vmem:[%s3 + $0xf90] sm:$0xff]
    %v4564 = vld [vmem:[%s3 + $0xf98] sm:$0xff]
    %v4565 = vld [vmem:[%s3 + $0xfa0] sm:$0xff]
    %v4566 = vld [vmem:[%s3 + $0xfa8] sm:$0xff]
    %v4567 = vld [vmem:[%s3 + $0xfb0] sm:$0xff]
    %v4568 = vld [vmem:[%s3 + $0xfb8] sm:$0xff]
    %v4569 = vld [vmem:[%s3 + $0xfc0] sm:$0xff]
    %v4570 = vld [vmem:[%s3 + $0xfc8] sm:$0xff]
    %v4571 = vld [vmem:[%s3 + $0xfd0] sm:$0xff]
    %v4572 = vld [vmem:[%s3 + $0xfd8] sm:$0xff]
    %v4573 = vld [vmem:[%s3 + $0xfe0] sm:$0xff]
    %v4574 = vld [vmem:[%s3 + $0xfe8] sm:$0xff]
    %v4575 = vld [vmem:[%s3 + $0xff0] sm:$0xff]
    %v4576 = vld [vmem:[%s3 + $0xff8] sm:$0xff]
    %v4577 = vld [vmem:[%s4] sm:$0xf]
    %v4579 = vlaneseq
    %v4580 = vshrl.u32 %v4579, 7
    %v4581 = vsub.s32 0, %v4580
    %v4582 = vrot.slane %v4577, %v4581
    %v4583 = vlaneseq
    %v4584 = vshrl.u32 %v4583, 7
    %v4585 = vsub.s32 1, %v4584
    %v4586 = vrot.slane %v4577, %v4585
    %v4587 = vlaneseq
    %v4588 = vshrl.u32 %v4587, 7
    %v4589 = vsub.s32 2, %v4588
    %v4590 = vrot.slane %v4577, %v4589
    %v4591 = vlaneseq
    %v4592 = vshrl.u32 %v4591, 7
    %v4593 = vsub.s32 3, %v4592
    %v4594 = vrot.slane %v4577, %v4593
    %v5111 = vunpack.c.l.b16 %v4065
    %v5112 = vunpack.c.h.b16 %v4065
    %v5113 = vunpack.c.l.b16 %v4066
    %v5114 = vunpack.c.h.b16 %v4066
    %v5115 = vunpack.c.l.b16 %v4067
    %v5116 = vunpack.c.h.b16 %v4067
    %v5117 = vunpack.c.l.b16 %v4068
    %v5118 = vunpack.c.h.b16 %v4068
    %v5119 = vunpack.c.l.b16 %v4069
    %v5120 = vunpack.c.h.b16 %v4069
    %v5121 = vunpack.c.l.b16 %v4070
    %v5122 = vunpack.c.h.b16 %v4070
    %v5123 = vunpack.c.l.b16 %v4071
    %v5124 = vunpack.c.h.b16 %v4071
    %v5125 = vunpack.c.l.b16 %v4072
    %v5126 = vunpack.c.h.b16 %v4072
    %v5127 = vunpack.c.l.b16 %v4073
    %v5128 = vunpack.c.h.b16 %v4073
    %v5129 = vunpack.c.l.b16 %v4074
    %v5130 = vunpack.c.h.b16 %v4074
    %v5131 = vunpack.c.l.b16 %v4075
    %v5132 = vunpack.c.h.b16 %v4075
    %v5133 = vunpack.c.l.b16 %v4076
    %v5134 = vunpack.c.h.b16 %v4076
    %v5135 = vunpack.c.l.b16 %v4077
    %v5136 = vunpack.c.h.b16 %v4077
    %v5137 = vunpack.c.l.b16 %v4078
    %v5138 = vunpack.c.h.b16 %v4078
    %v5139 = vunpack.c.l.b16 %v4079
    %v5140 = vunpack.c.h.b16 %v4079
    %v5141 = vunpack.c.l.b16 %v4080
    %v5142 = vunpack.c.h.b16 %v4080
    %v5143 = vunpack.c.l.b16 %v4081
    %v5144 = vunpack.c.h.b16 %v4081
    %v5145 = vunpack.c.l.b16 %v4082
    %v5146 = vunpack.c.h.b16 %v4082
    %v5147 = vunpack.c.l.b16 %v4083
    %v5148 = vunpack.c.h.b16 %v4083
    %v5149 = vunpack.c.l.b16 %v4084
    %v5150 = vunpack.c.h.b16 %v4084
    %v5151 = vunpack.c.l.b16 %v4085
    %v5152 = vunpack.c.h.b16 %v4085
    %v5153 = vunpack.c.l.b16 %v4086
    %v5154 = vunpack.c.h.b16 %v4086
    %v5155 = vunpack.c.l.b16 %v4087
    %v5156 = vunpack.c.h.b16 %v4087
    %v5157 = vunpack.c.l.b16 %v4088
    %v5158 = vunpack.c.h.b16 %v4088
    %v5159 = vunpack.c.l.b16 %v4089
    %v5160 = vunpack.c.h.b16 %v4089
    %v5161 = vunpack.c.l.b16 %v4090
    %v5162 = vunpack.c.h.b16 %v4090
    %v5163 = vunpack.c.l.b16 %v4091
    %v5164 = vunpack.c.h.b16 %v4091
    %v5165 = vunpack.c.l.b16 %v4092
    %v5166 = vunpack.c.h.b16 %v4092
    %v5167 = vunpack.c.l.b16 %v4093
    %v5168 = vunpack.c.h.b16 %v4093
    %v5169 = vunpack.c.l.b16 %v4094
    %v5170 = vunpack.c.h.b16 %v4094
    %v5171 = vunpack.c.l.b16 %v4095
    %v5172 = vunpack.c.h.b16 %v4095
    %v5173 = vunpack.c.l.b16 %v4096
    %v5174 = vunpack.c.h.b16 %v4096
    %v5175 = vunpack.c.l.b16 %v4097
    %v5176 = vunpack.c.h.b16 %v4097
    %v5177 = vunpack.c.l.b16 %v4098
    %v5178 = vunpack.c.h.b16 %v4098
    %v5179 = vunpack.c.l.b16 %v4099
    %v5180 = vunpack.c.h.b16 %v4099
    %v5181 = vunpack.c.l.b16 %v4100
    %v5182 = vunpack.c.h.b16 %v4100
    %v5183 = vunpack.c.l.b16 %v4101
    %v5184 = vunpack.c.h.b16 %v4101
    %v5185 = vunpack.c.l.b16 %v4102
    %v5186 = vunpack.c.h.b16 %v4102
    %v5187 = vunpack.c.l.b16 %v4103
    %v5188 = vunpack.c.h.b16 %v4103
    %v5189 = vunpack.c.l.b16 %v4104
    %v5190 = vunpack.c.h.b16 %v4104
    %v5191 = vunpack.c.l.b16 %v4105
    %v5192 = vunpack.c.h.b16 %v4105
    %v5193 = vunpack.c.l.b16 %v4106
    %v5194 = vunpack.c.h.b16 %v4106
    %v5195 = vunpack.c.l.b16 %v4107
    %v5196 = vunpack.c.h.b16 %v4107
    %v5197 = vunpack.c.l.b16 %v4108
    %v5198 = vunpack.c.h.b16 %v4108
    %v5199 = vunpack.c.l.b16 %v4109
    %v5200 = vunpack.c.h.b16 %v4109
    %v5201 = vunpack.c.l.b16 %v4110
    %v5202 = vunpack.c.h.b16 %v4110
    %v5203 = vunpack.c.l.b16 %v4111
    %v5204 = vunpack.c.h.b16 %v4111
    %v5205 = vunpack.c.l.b16 %v4112
    %v5206 = vunpack.c.h.b16 %v4112
    %v5207 = vunpack.c.l.b16 %v4113
    %v5208 = vunpack.c.h.b16 %v4113
    %v5209 = vunpack.c.l.b16 %v4114
    %v5210 = vunpack.c.h.b16 %v4114
    %v5211 = vunpack.c.l.b16 %v4115
    %v5212 = vunpack.c.h.b16 %v4115
    %v5213 = vunpack.c.l.b16 %v4116
    %v5214 = vunpack.c.h.b16 %v4116
    %v5215 = vunpack.c.l.b16 %v4117
    %v5216 = vunpack.c.h.b16 %v4117
    %v5217 = vunpack.c.l.b16 %v4118
    %v5218 = vunpack.c.h.b16 %v4118
    %v5219 = vunpack.c.l.b16 %v4119
    %v5220 = vunpack.c.h.b16 %v4119
    %v5221 = vunpack.c.l.b16 %v4120
    %v5222 = vunpack.c.h.b16 %v4120
    %v5223 = vunpack.c.l.b16 %v4121
    %v5224 = vunpack.c.h.b16 %v4121
    %v5225 = vunpack.c.l.b16 %v4122
    %v5226 = vunpack.c.h.b16 %v4122
    %v5227 = vunpack.c.l.b16 %v4123
    %v5228 = vunpack.c.h.b16 %v4123
    %v5229 = vunpack.c.l.b16 %v4124
    %v5230 = vunpack.c.h.b16 %v4124
    %v5231 = vunpack.c.l.b16 %v4125
    %v5232 = vunpack.c.h.b16 %v4125
    %v5233 = vunpack.c.l.b16 %v4126
    %v5234 = vunpack.c.h.b16 %v4126
    %v5235 = vunpack.c.l.b16 %v4127
    %v5236 = vunpack.c.h.b16 %v4127
    %v5237 = vunpack.c.l.b16 %v4128
    %v5238 = vunpack.c.h.b16 %v4128
    %v5239 = vunpack.c.l.b16 %v4129
    %v5240 = vunpack.c.h.b16 %v4129
    %v5241 = vunpack.c.l.b16 %v4130
    %v5242 = vunpack.c.h.b16 %v4130
    %v5243 = vunpack.c.l.b16 %v4131
    %v5244 = vunpack.c.h.b16 %v4131
    %v5245 = vunpack.c.l.b16 %v4132
    %v5246 = vunpack.c.h.b16 %v4132
    %v5247 = vunpack.c.l.b16 %v4133
    %v5248 = vunpack.c.h.b16 %v4133
    %v5249 = vunpack.c.l.b16 %v4134
    %v5250 = vunpack.c.h.b16 %v4134
    %v5251 = vunpack.c.l.b16 %v4135
    %v5252 = vunpack.c.h.b16 %v4135
    %v5253 = vunpack.c.l.b16 %v4136
    %v5254 = vunpack.c.h.b16 %v4136
    %v5255 = vunpack.c.l.b16 %v4137
    %v5256 = vunpack.c.h.b16 %v4137
    %v5257 = vunpack.c.l.b16 %v4138
    %v5258 = vunpack.c.h.b16 %v4138
    %v5259 = vunpack.c.l.b16 %v4139
    %v5260 = vunpack.c.h.b16 %v4139
    %v5261 = vunpack.c.l.b16 %v4140
    %v5262 = vunpack.c.h.b16 %v4140
    %v5263 = vunpack.c.l.b16 %v4141
    %v5264 = vunpack.c.h.b16 %v4141
    %v5265 = vunpack.c.l.b16 %v4142
    %v5266 = vunpack.c.h.b16 %v4142
    %v5267 = vunpack.c.l.b16 %v4143
    %v5268 = vunpack.c.h.b16 %v4143
    %v5269 = vunpack.c.l.b16 %v4144
    %v5270 = vunpack.c.h.b16 %v4144
    %v5271 = vunpack.c.l.b16 %v4145
    %v5272 = vunpack.c.h.b16 %v4145
    %v5273 = vunpack.c.l.b16 %v4146
    %v5274 = vunpack.c.h.b16 %v4146
    %v5275 = vunpack.c.l.b16 %v4147
    %v5276 = vunpack.c.h.b16 %v4147
    %v5277 = vunpack.c.l.b16 %v4148
    %v5278 = vunpack.c.h.b16 %v4148
    %v5279 = vunpack.c.l.b16 %v4149
    %v5280 = vunpack.c.h.b16 %v4149
    %v5281 = vunpack.c.l.b16 %v4150
    %v5282 = vunpack.c.h.b16 %v4150
    %v5283 = vunpack.c.l.b16 %v4151
    %v5284 = vunpack.c.h.b16 %v4151
    %v5285 = vunpack.c.l.b16 %v4152
    %v5286 = vunpack.c.h.b16 %v4152
    %v5287 = vunpack.c.l.b16 %v4153
    %v5288 = vunpack.c.h.b16 %v4153
    %v5289 = vunpack.c.l.b16 %v4154
    %v5290 = vunpack.c.h.b16 %v4154
    %v5291 = vunpack.c.l.b16 %v4155
    %v5292 = vunpack.c.h.b16 %v4155
    %v5293 = vunpack.c.l.b16 %v4156
    %v5294 = vunpack.c.h.b16 %v4156
    %v5295 = vunpack.c.l.b16 %v4157
    %v5296 = vunpack.c.h.b16 %v4157
    %v5297 = vunpack.c.l.b16 %v4158
    %v5298 = vunpack.c.h.b16 %v4158
    %v5299 = vunpack.c.l.b16 %v4159
    %v5300 = vunpack.c.h.b16 %v4159
    %v5301 = vunpack.c.l.b16 %v4160
    %v5302 = vunpack.c.h.b16 %v4160
    %v5303 = vunpack.c.l.b16 %v4161
    %v5304 = vunpack.c.h.b16 %v4161
    %v5305 = vunpack.c.l.b16 %v4162
    %v5306 = vunpack.c.h.b16 %v4162
    %v5307 = vunpack.c.l.b16 %v4163
    %v5308 = vunpack.c.h.b16 %v4163
    %v5309 = vunpack.c.l.b16 %v4164
    %v5310 = vunpack.c.h.b16 %v4164
    %v5311 = vunpack.c.l.b16 %v4165
    %v5312 = vunpack.c.h.b16 %v4165
    %v5313 = vunpack.c.l.b16 %v4166
    %v5314 = vunpack.c.h.b16 %v4166
    %v5315 = vunpack.c.l.b16 %v4167
    %v5316 = vunpack.c.h.b16 %v4167
    %v5317 = vunpack.c.l.b16 %v4168
    %v5318 = vunpack.c.h.b16 %v4168
    %v5319 = vunpack.c.l.b16 %v4169
    %v5320 = vunpack.c.h.b16 %v4169
    %v5321 = vunpack.c.l.b16 %v4170
    %v5322 = vunpack.c.h.b16 %v4170
    %v5323 = vunpack.c.l.b16 %v4171
    %v5324 = vunpack.c.h.b16 %v4171
    %v5325 = vunpack.c.l.b16 %v4172
    %v5326 = vunpack.c.h.b16 %v4172
    %v5327 = vunpack.c.l.b16 %v4173
    %v5328 = vunpack.c.h.b16 %v4173
    %v5329 = vunpack.c.l.b16 %v4174
    %v5330 = vunpack.c.h.b16 %v4174
    %v5331 = vunpack.c.l.b16 %v4175
    %v5332 = vunpack.c.h.b16 %v4175
    %v5333 = vunpack.c.l.b16 %v4176
    %v5334 = vunpack.c.h.b16 %v4176
    %v5335 = vunpack.c.l.b16 %v4177
    %v5336 = vunpack.c.h.b16 %v4177
    %v5337 = vunpack.c.l.b16 %v4178
    %v5338 = vunpack.c.h.b16 %v4178
    %v5339 = vunpack.c.l.b16 %v4179
    %v5340 = vunpack.c.h.b16 %v4179
    %v5341 = vunpack.c.l.b16 %v4180
    %v5342 = vunpack.c.h.b16 %v4180
    %v5343 = vunpack.c.l.b16 %v4181
    %v5344 = vunpack.c.h.b16 %v4181
    %v5345 = vunpack.c.l.b16 %v4182
    %v5346 = vunpack.c.h.b16 %v4182
    %v5347 = vunpack.c.l.b16 %v4183
    %v5348 = vunpack.c.h.b16 %v4183
    %v5349 = vunpack.c.l.b16 %v4184
    %v5350 = vunpack.c.h.b16 %v4184
    %v5351 = vunpack.c.l.b16 %v4185
    %v5352 = vunpack.c.h.b16 %v4185
    %v5353 = vunpack.c.l.b16 %v4186
    %v5354 = vunpack.c.h.b16 %v4186
    %v5355 = vunpack.c.l.b16 %v4187
    %v5356 = vunpack.c.h.b16 %v4187
    %v5357 = vunpack.c.l.b16 %v4188
    %v5358 = vunpack.c.h.b16 %v4188
    %v5359 = vunpack.c.l.b16 %v4189
    %v5360 = vunpack.c.h.b16 %v4189
    %v5361 = vunpack.c.l.b16 %v4190
    %v5362 = vunpack.c.h.b16 %v4190
    %v5363 = vunpack.c.l.b16 %v4191
    %v5364 = vunpack.c.h.b16 %v4191
    %v5365 = vunpack.c.l.b16 %v4192
    %v5366 = vunpack.c.h.b16 %v4192
    %v5367 = vunpack.c.l.b16 %v4193
    %v5368 = vunpack.c.h.b16 %v4193
    %v5369 = vunpack.c.l.b16 %v4194
    %v5370 = vunpack.c.h.b16 %v4194
    %v5371 = vunpack.c.l.b16 %v4195
    %v5372 = vunpack.c.h.b16 %v4195
    %v5373 = vunpack.c.l.b16 %v4196
    %v5374 = vunpack.c.h.b16 %v4196
    %v5375 = vunpack.c.l.b16 %v4197
    %v5376 = vunpack.c.h.b16 %v4197
    %v5377 = vunpack.c.l.b16 %v4198
    %v5378 = vunpack.c.h.b16 %v4198
    %v5379 = vunpack.c.l.b16 %v4199
    %v5380 = vunpack.c.h.b16 %v4199
    %v5381 = vunpack.c.l.b16 %v4200
    %v5382 = vunpack.c.h.b16 %v4200
    %v5383 = vunpack.c.l.b16 %v4201
    %v5384 = vunpack.c.h.b16 %v4201
    %v5385 = vunpack.c.l.b16 %v4202
    %v5386 = vunpack.c.h.b16 %v4202
    %v5387 = vunpack.c.l.b16 %v4203
    %v5388 = vunpack.c.h.b16 %v4203
    %v5389 = vunpack.c.l.b16 %v4204
    %v5390 = vunpack.c.h.b16 %v4204
    %v5391 = vunpack.c.l.b16 %v4205
    %v5392 = vunpack.c.h.b16 %v4205
    %v5393 = vunpack.c.l.b16 %v4206
    %v5394 = vunpack.c.h.b16 %v4206
    %v5395 = vunpack.c.l.b16 %v4207
    %v5396 = vunpack.c.h.b16 %v4207
    %v5397 = vunpack.c.l.b16 %v4208
    %v5398 = vunpack.c.h.b16 %v4208
    %v5399 = vunpack.c.l.b16 %v4209
    %v5400 = vunpack.c.h.b16 %v4209
    %v5401 = vunpack.c.l.b16 %v4210
    %v5402 = vunpack.c.h.b16 %v4210
    %v5403 = vunpack.c.l.b16 %v4211
    %v5404 = vunpack.c.h.b16 %v4211
    %v5405 = vunpack.c.l.b16 %v4212
    %v5406 = vunpack.c.h.b16 %v4212
    %v5407 = vunpack.c.l.b16 %v4213
    %v5408 = vunpack.c.h.b16 %v4213
    %v5409 = vunpack.c.l.b16 %v4214
    %v5410 = vunpack.c.h.b16 %v4214
    %v5411 = vunpack.c.l.b16 %v4215
    %v5412 = vunpack.c.h.b16 %v4215
    %v5413 = vunpack.c.l.b16 %v4216
    %v5414 = vunpack.c.h.b16 %v4216
    %v5415 = vunpack.c.l.b16 %v4217
    %v5416 = vunpack.c.h.b16 %v4217
    %v5417 = vunpack.c.l.b16 %v4218
    %v5418 = vunpack.c.h.b16 %v4218
    %v5419 = vunpack.c.l.b16 %v4219
    %v5420 = vunpack.c.h.b16 %v4219
    %v5421 = vunpack.c.l.b16 %v4220
    %v5422 = vunpack.c.h.b16 %v4220
    %v5423 = vunpack.c.l.b16 %v4221
    %v5424 = vunpack.c.h.b16 %v4221
    %v5425 = vunpack.c.l.b16 %v4222
    %v5426 = vunpack.c.h.b16 %v4222
    %v5427 = vunpack.c.l.b16 %v4223
    %v5428 = vunpack.c.h.b16 %v4223
    %v5429 = vunpack.c.l.b16 %v4224
    %v5430 = vunpack.c.h.b16 %v4224
    %v5431 = vunpack.c.l.b16 %v4225
    %v5432 = vunpack.c.h.b16 %v4225
    %v5433 = vunpack.c.l.b16 %v4226
    %v5434 = vunpack.c.h.b16 %v4226
    %v5435 = vunpack.c.l.b16 %v4227
    %v5436 = vunpack.c.h.b16 %v4227
    %v5437 = vunpack.c.l.b16 %v4228
    %v5438 = vunpack.c.h.b16 %v4228
    %v5439 = vunpack.c.l.b16 %v4229
    %v5440 = vunpack.c.h.b16 %v4229
    %v5441 = vunpack.c.l.b16 %v4230
    %v5442 = vunpack.c.h.b16 %v4230
    %v5443 = vunpack.c.l.b16 %v4231
    %v5444 = vunpack.c.h.b16 %v4231
    %v5445 = vunpack.c.l.b16 %v4232
    %v5446 = vunpack.c.h.b16 %v4232
    %v5447 = vunpack.c.l.b16 %v4233
    %v5448 = vunpack.c.h.b16 %v4233
    %v5449 = vunpack.c.l.b16 %v4234
    %v5450 = vunpack.c.h.b16 %v4234
    %v5451 = vunpack.c.l.b16 %v4235
    %v5452 = vunpack.c.h.b16 %v4235
    %v5453 = vunpack.c.l.b16 %v4236
    %v5454 = vunpack.c.h.b16 %v4236
    %v5455 = vunpack.c.l.b16 %v4237
    %v5456 = vunpack.c.h.b16 %v4237
    %v5457 = vunpack.c.l.b16 %v4238
    %v5458 = vunpack.c.h.b16 %v4238
    %v5459 = vunpack.c.l.b16 %v4239
    %v5460 = vunpack.c.h.b16 %v4239
    %v5461 = vunpack.c.l.b16 %v4240
    %v5462 = vunpack.c.h.b16 %v4240
    %v5463 = vunpack.c.l.b16 %v4241
    %v5464 = vunpack.c.h.b16 %v4241
    %v5465 = vunpack.c.l.b16 %v4242
    %v5466 = vunpack.c.h.b16 %v4242
    %v5467 = vunpack.c.l.b16 %v4243
    %v5468 = vunpack.c.h.b16 %v4243
    %v5469 = vunpack.c.l.b16 %v4244
    %v5470 = vunpack.c.h.b16 %v4244
    %v5471 = vunpack.c.l.b16 %v4245
    %v5472 = vunpack.c.h.b16 %v4245
    %v5473 = vunpack.c.l.b16 %v4246
    %v5474 = vunpack.c.h.b16 %v4246
    %v5475 = vunpack.c.l.b16 %v4247
    %v5476 = vunpack.c.h.b16 %v4247
    %v5477 = vunpack.c.l.b16 %v4248
    %v5478 = vunpack.c.h.b16 %v4248
    %v5479 = vunpack.c.l.b16 %v4249
    %v5480 = vunpack.c.h.b16 %v4249
    %v5481 = vunpack.c.l.b16 %v4250
    %v5482 = vunpack.c.h.b16 %v4250
    %v5483 = vunpack.c.l.b16 %v4251
    %v5484 = vunpack.c.h.b16 %v4251
    %v5485 = vunpack.c.l.b16 %v4252
    %v5486 = vunpack.c.h.b16 %v4252
    %v5487 = vunpack.c.l.b16 %v4253
    %v5488 = vunpack.c.h.b16 %v4253
    %v5489 = vunpack.c.l.b16 %v4254
    %v5490 = vunpack.c.h.b16 %v4254
    %v5491 = vunpack.c.l.b16 %v4255
    %v5492 = vunpack.c.h.b16 %v4255
    %v5493 = vunpack.c.l.b16 %v4256
    %v5494 = vunpack.c.h.b16 %v4256
    %v5495 = vunpack.c.l.b16 %v4257
    %v5496 = vunpack.c.h.b16 %v4257
    %v5497 = vunpack.c.l.b16 %v4258
    %v5498 = vunpack.c.h.b16 %v4258
    %v5499 = vunpack.c.l.b16 %v4259
    %v5500 = vunpack.c.h.b16 %v4259
    %v5501 = vunpack.c.l.b16 %v4260
    %v5502 = vunpack.c.h.b16 %v4260
    %v5503 = vunpack.c.l.b16 %v4261
    %v5504 = vunpack.c.h.b16 %v4261
    %v5505 = vunpack.c.l.b16 %v4262
    %v5506 = vunpack.c.h.b16 %v4262
    %v5507 = vunpack.c.l.b16 %v4263
    %v5508 = vunpack.c.h.b16 %v4263
    %v5509 = vunpack.c.l.b16 %v4264
    %v5510 = vunpack.c.h.b16 %v4264
    %v5511 = vunpack.c.l.b16 %v4265
    %v5512 = vunpack.c.h.b16 %v4265
    %v5513 = vunpack.c.l.b16 %v4266
    %v5514 = vunpack.c.h.b16 %v4266
    %v5515 = vunpack.c.l.b16 %v4267
    %v5516 = vunpack.c.h.b16 %v4267
    %v5517 = vunpack.c.l.b16 %v4268
    %v5518 = vunpack.c.h.b16 %v4268
    %v5519 = vunpack.c.l.b16 %v4269
    %v5520 = vunpack.c.h.b16 %v4269
    %v5521 = vunpack.c.l.b16 %v4270
    %v5522 = vunpack.c.h.b16 %v4270
    %v5523 = vunpack.c.l.b16 %v4271
    %v5524 = vunpack.c.h.b16 %v4271
    %v5525 = vunpack.c.l.b16 %v4272
    %v5526 = vunpack.c.h.b16 %v4272
    %v5527 = vunpack.c.l.b16 %v4273
    %v5528 = vunpack.c.h.b16 %v4273
    %v5529 = vunpack.c.l.b16 %v4274
    %v5530 = vunpack.c.h.b16 %v4274
    %v5531 = vunpack.c.l.b16 %v4275
    %v5532 = vunpack.c.h.b16 %v4275
    %v5533 = vunpack.c.l.b16 %v4276
    %v5534 = vunpack.c.h.b16 %v4276
    %v5535 = vunpack.c.l.b16 %v4277
    %v5536 = vunpack.c.h.b16 %v4277
    %v5537 = vunpack.c.l.b16 %v4278
    %v5538 = vunpack.c.h.b16 %v4278
    %v5539 = vunpack.c.l.b16 %v4279
    %v5540 = vunpack.c.h.b16 %v4279
    %v5541 = vunpack.c.l.b16 %v4280
    %v5542 = vunpack.c.h.b16 %v4280
    %v5543 = vunpack.c.l.b16 %v4281
    %v5544 = vunpack.c.h.b16 %v4281
    %v5545 = vunpack.c.l.b16 %v4282
    %v5546 = vunpack.c.h.b16 %v4282
    %v5547 = vunpack.c.l.b16 %v4283
    %v5548 = vunpack.c.h.b16 %v4283
    %v5549 = vunpack.c.l.b16 %v4284
    %v5550 = vunpack.c.h.b16 %v4284
    %v5551 = vunpack.c.l.b16 %v4285
    %v5552 = vunpack.c.h.b16 %v4285
    %v5553 = vunpack.c.l.b16 %v4286
    %v5554 = vunpack.c.h.b16 %v4286
    %v5555 = vunpack.c.l.b16 %v4287
    %v5556 = vunpack.c.h.b16 %v4287
    %v5557 = vunpack.c.l.b16 %v4288
    %v5558 = vunpack.c.h.b16 %v4288
    %v5559 = vunpack.c.l.b16 %v4289
    %v5560 = vunpack.c.h.b16 %v4289
    %v5561 = vunpack.c.l.b16 %v4290
    %v5562 = vunpack.c.h.b16 %v4290
    %v5563 = vunpack.c.l.b16 %v4291
    %v5564 = vunpack.c.h.b16 %v4291
    %v5565 = vunpack.c.l.b16 %v4292
    %v5566 = vunpack.c.h.b16 %v4292
    %v5567 = vunpack.c.l.b16 %v4293
    %v5568 = vunpack.c.h.b16 %v4293
    %v5569 = vunpack.c.l.b16 %v4294
    %v5570 = vunpack.c.h.b16 %v4294
    %v5571 = vunpack.c.l.b16 %v4295
    %v5572 = vunpack.c.h.b16 %v4295
    %v5573 = vunpack.c.l.b16 %v4296
    %v5574 = vunpack.c.h.b16 %v4296
    %v5575 = vunpack.c.l.b16 %v4297
    %v5576 = vunpack.c.h.b16 %v4297
    %v5577 = vunpack.c.l.b16 %v4298
    %v5578 = vunpack.c.h.b16 %v4298
    %v5579 = vunpack.c.l.b16 %v4299
    %v5580 = vunpack.c.h.b16 %v4299
    %v5581 = vunpack.c.l.b16 %v4300
    %v5582 = vunpack.c.h.b16 %v4300
    %v5583 = vunpack.c.l.b16 %v4301
    %v5584 = vunpack.c.h.b16 %v4301
    %v5585 = vunpack.c.l.b16 %v4302
    %v5586 = vunpack.c.h.b16 %v4302
    %v5587 = vunpack.c.l.b16 %v4303
    %v5588 = vunpack.c.h.b16 %v4303
    %v5589 = vunpack.c.l.b16 %v4304
    %v5590 = vunpack.c.h.b16 %v4304
    %v5591 = vunpack.c.l.b16 %v4305
    %v5592 = vunpack.c.h.b16 %v4305
    %v5593 = vunpack.c.l.b16 %v4306
    %v5594 = vunpack.c.h.b16 %v4306
    %v5595 = vunpack.c.l.b16 %v4307
    %v5596 = vunpack.c.h.b16 %v4307
    %v5597 = vunpack.c.l.b16 %v4308
    %v5598 = vunpack.c.h.b16 %v4308
    %v5599 = vunpack.c.l.b16 %v4309
    %v5600 = vunpack.c.h.b16 %v4309
    %v5601 = vunpack.c.l.b16 %v4310
    %v5602 = vunpack.c.h.b16 %v4310
    %v5603 = vunpack.c.l.b16 %v4311
    %v5604 = vunpack.c.h.b16 %v4311
    %v5605 = vunpack.c.l.b16 %v4312
    %v5606 = vunpack.c.h.b16 %v4312
    %v5607 = vunpack.c.l.b16 %v4313
    %v5608 = vunpack.c.h.b16 %v4313
    %v5609 = vunpack.c.l.b16 %v4314
    %v5610 = vunpack.c.h.b16 %v4314
    %v5611 = vunpack.c.l.b16 %v4315
    %v5612 = vunpack.c.h.b16 %v4315
    %v5613 = vunpack.c.l.b16 %v4316
    %v5614 = vunpack.c.h.b16 %v4316
    %v5615 = vunpack.c.l.b16 %v4317
    %v5616 = vunpack.c.h.b16 %v4317
    %v5617 = vunpack.c.l.b16 %v4318
    %v5618 = vunpack.c.h.b16 %v4318
    %v5619 = vunpack.c.l.b16 %v4319
    %v5620 = vunpack.c.h.b16 %v4319
    %v5621 = vunpack.c.l.b16 %v4320
    %v5622 = vunpack.c.h.b16 %v4320
    %v5623 = vunpack.c.l.b16 %v4321
    %v5624 = vunpack.c.h.b16 %v4321
    %v5625 = vunpack.c.l.b16 %v4322
    %v5626 = vunpack.c.h.b16 %v4322
    %v5627 = vunpack.c.l.b16 %v4323
    %v5628 = vunpack.c.h.b16 %v4323
    %v5629 = vunpack.c.l.b16 %v4324
    %v5630 = vunpack.c.h.b16 %v4324
    %v5631 = vunpack.c.l.b16 %v4325
    %v5632 = vunpack.c.h.b16 %v4325
    %v5633 = vunpack.c.l.b16 %v4326
    %v5634 = vunpack.c.h.b16 %v4326
    %v5635 = vunpack.c.l.b16 %v4327
    %v5636 = vunpack.c.h.b16 %v4327
    %v5637 = vunpack.c.l.b16 %v4328
    %v5638 = vunpack.c.h.b16 %v4328
    %v5639 = vunpack.c.l.b16 %v4329
    %v5640 = vunpack.c.h.b16 %v4329
    %v5641 = vunpack.c.l.b16 %v4330
    %v5642 = vunpack.c.h.b16 %v4330
    %v5643 = vunpack.c.l.b16 %v4331
    %v5644 = vunpack.c.h.b16 %v4331
    %v5645 = vunpack.c.l.b16 %v4332
    %v5646 = vunpack.c.h.b16 %v4332
    %v5647 = vunpack.c.l.b16 %v4333
    %v5648 = vunpack.c.h.b16 %v4333
    %v5649 = vunpack.c.l.b16 %v4334
    %v5650 = vunpack.c.h.b16 %v4334
    %v5651 = vunpack.c.l.b16 %v4335
    %v5652 = vunpack.c.h.b16 %v4335
    %v5653 = vunpack.c.l.b16 %v4336
    %v5654 = vunpack.c.h.b16 %v4336
    %v5655 = vunpack.c.l.b16 %v4337
    %v5656 = vunpack.c.h.b16 %v4337
    %v5657 = vunpack.c.l.b16 %v4338
    %v5658 = vunpack.c.h.b16 %v4338
    %v5659 = vunpack.c.l.b16 %v4339
    %v5660 = vunpack.c.h.b16 %v4339
    %v5661 = vunpack.c.l.b16 %v4340
    %v5662 = vunpack.c.h.b16 %v4340
    %v5663 = vunpack.c.l.b16 %v4341
    %v5664 = vunpack.c.h.b16 %v4341
    %v5665 = vunpack.c.l.b16 %v4342
    %v5666 = vunpack.c.h.b16 %v4342
    %v5667 = vunpack.c.l.b16 %v4343
    %v5668 = vunpack.c.h.b16 %v4343
    %v5669 = vunpack.c.l.b16 %v4344
    %v5670 = vunpack.c.h.b16 %v4344
    %v5671 = vunpack.c.l.b16 %v4345
    %v5672 = vunpack.c.h.b16 %v4345
    %v5673 = vunpack.c.l.b16 %v4346
    %v5674 = vunpack.c.h.b16 %v4346
    %v5675 = vunpack.c.l.b16 %v4347
    %v5676 = vunpack.c.h.b16 %v4347
    %v5677 = vunpack.c.l.b16 %v4348
    %v5678 = vunpack.c.h.b16 %v4348
    %v5679 = vunpack.c.l.b16 %v4349
    %v5680 = vunpack.c.h.b16 %v4349
    %v5681 = vunpack.c.l.b16 %v4350
    %v5682 = vunpack.c.h.b16 %v4350
    %v5683 = vunpack.c.l.b16 %v4351
    %v5684 = vunpack.c.h.b16 %v4351
    %v5685 = vunpack.c.l.b16 %v4352
    %v5686 = vunpack.c.h.b16 %v4352
    %v5687 = vunpack.c.l.b16 %v4353
    %v5688 = vunpack.c.h.b16 %v4353
    %v5689 = vunpack.c.l.b16 %v4354
    %v5690 = vunpack.c.h.b16 %v4354
    %v5691 = vunpack.c.l.b16 %v4355
    %v5692 = vunpack.c.h.b16 %v4355
    %v5693 = vunpack.c.l.b16 %v4356
    %v5694 = vunpack.c.h.b16 %v4356
    %v5695 = vunpack.c.l.b16 %v4357
    %v5696 = vunpack.c.h.b16 %v4357
    %v5697 = vunpack.c.l.b16 %v4358
    %v5698 = vunpack.c.h.b16 %v4358
    %v5699 = vunpack.c.l.b16 %v4359
    %v5700 = vunpack.c.h.b16 %v4359
    %v5701 = vunpack.c.l.b16 %v4360
    %v5702 = vunpack.c.h.b16 %v4360
    %v5703 = vunpack.c.l.b16 %v4361
    %v5704 = vunpack.c.h.b16 %v4361
    %v5705 = vunpack.c.l.b16 %v4362
    %v5706 = vunpack.c.h.b16 %v4362
    %v5707 = vunpack.c.l.b16 %v4363
    %v5708 = vunpack.c.h.b16 %v4363
    %v5709 = vunpack.c.l.b16 %v4364
    %v5710 = vunpack.c.h.b16 %v4364
    %v5711 = vunpack.c.l.b16 %v4365
    %v5712 = vunpack.c.h.b16 %v4365
    %v5713 = vunpack.c.l.b16 %v4366
    %v5714 = vunpack.c.h.b16 %v4366
    %v5715 = vunpack.c.l.b16 %v4367
    %v5716 = vunpack.c.h.b16 %v4367
    %v5717 = vunpack.c.l.b16 %v4368
    %v5718 = vunpack.c.h.b16 %v4368
    %v5719 = vunpack.c.l.b16 %v4369
    %v5720 = vunpack.c.h.b16 %v4369
    %v5721 = vunpack.c.l.b16 %v4370
    %v5722 = vunpack.c.h.b16 %v4370
    %v5723 = vunpack.c.l.b16 %v4371
    %v5724 = vunpack.c.h.b16 %v4371
    %v5725 = vunpack.c.l.b16 %v4372
    %v5726 = vunpack.c.h.b16 %v4372
    %v5727 = vunpack.c.l.b16 %v4373
    %v5728 = vunpack.c.h.b16 %v4373
    %v5729 = vunpack.c.l.b16 %v4374
    %v5730 = vunpack.c.h.b16 %v4374
    %v5731 = vunpack.c.l.b16 %v4375
    %v5732 = vunpack.c.h.b16 %v4375
    %v5733 = vunpack.c.l.b16 %v4376
    %v5734 = vunpack.c.h.b16 %v4376
    %v5735 = vunpack.c.l.b16 %v4377
    %v5736 = vunpack.c.h.b16 %v4377
    %v5737 = vunpack.c.l.b16 %v4378
    %v5738 = vunpack.c.h.b16 %v4378
    %v5739 = vunpack.c.l.b16 %v4379
    %v5740 = vunpack.c.h.b16 %v4379
    %v5741 = vunpack.c.l.b16 %v4380
    %v5742 = vunpack.c.h.b16 %v4380
    %v5743 = vunpack.c.l.b16 %v4381
    %v5744 = vunpack.c.h.b16 %v4381
    %v5745 = vunpack.c.l.b16 %v4382
    %v5746 = vunpack.c.h.b16 %v4382
    %v5747 = vunpack.c.l.b16 %v4383
    %v5748 = vunpack.c.h.b16 %v4383
    %v5749 = vunpack.c.l.b16 %v4384
    %v5750 = vunpack.c.h.b16 %v4384
    %v5751 = vunpack.c.l.b16 %v4385
    %v5752 = vunpack.c.h.b16 %v4385
    %v5753 = vunpack.c.l.b16 %v4386
    %v5754 = vunpack.c.h.b16 %v4386
    %v5755 = vunpack.c.l.b16 %v4387
    %v5756 = vunpack.c.h.b16 %v4387
    %v5757 = vunpack.c.l.b16 %v4388
    %v5758 = vunpack.c.h.b16 %v4388
    %v5759 = vunpack.c.l.b16 %v4389
    %v5760 = vunpack.c.h.b16 %v4389
    %v5761 = vunpack.c.l.b16 %v4390
    %v5762 = vunpack.c.h.b16 %v4390
    %v5763 = vunpack.c.l.b16 %v4391
    %v5764 = vunpack.c.h.b16 %v4391
    %v5765 = vunpack.c.l.b16 %v4392
    %v5766 = vunpack.c.h.b16 %v4392
    %v5767 = vunpack.c.l.b16 %v4393
    %v5768 = vunpack.c.h.b16 %v4393
    %v5769 = vunpack.c.l.b16 %v4394
    %v5770 = vunpack.c.h.b16 %v4394
    %v5771 = vunpack.c.l.b16 %v4395
    %v5772 = vunpack.c.h.b16 %v4395
    %v5773 = vunpack.c.l.b16 %v4396
    %v5774 = vunpack.c.h.b16 %v4396
    %v5775 = vunpack.c.l.b16 %v4397
    %v5776 = vunpack.c.h.b16 %v4397
    %v5777 = vunpack.c.l.b16 %v4398
    %v5778 = vunpack.c.h.b16 %v4398
    %v5779 = vunpack.c.l.b16 %v4399
    %v5780 = vunpack.c.h.b16 %v4399
    %v5781 = vunpack.c.l.b16 %v4400
    %v5782 = vunpack.c.h.b16 %v4400
    %v5783 = vunpack.c.l.b16 %v4401
    %v5784 = vunpack.c.h.b16 %v4401
    %v5785 = vunpack.c.l.b16 %v4402
    %v5786 = vunpack.c.h.b16 %v4402
    %v5787 = vunpack.c.l.b16 %v4403
    %v5788 = vunpack.c.h.b16 %v4403
    %v5789 = vunpack.c.l.b16 %v4404
    %v5790 = vunpack.c.h.b16 %v4404
    %v5791 = vunpack.c.l.b16 %v4405
    %v5792 = vunpack.c.h.b16 %v4405
    %v5793 = vunpack.c.l.b16 %v4406
    %v5794 = vunpack.c.h.b16 %v4406
    %v5795 = vunpack.c.l.b16 %v4407
    %v5796 = vunpack.c.h.b16 %v4407
    %v5797 = vunpack.c.l.b16 %v4408
    %v5798 = vunpack.c.h.b16 %v4408
    %v5799 = vunpack.c.l.b16 %v4409
    %v5800 = vunpack.c.h.b16 %v4409
    %v5801 = vunpack.c.l.b16 %v4410
    %v5802 = vunpack.c.h.b16 %v4410
    %v5803 = vunpack.c.l.b16 %v4411
    %v5804 = vunpack.c.h.b16 %v4411
    %v5805 = vunpack.c.l.b16 %v4412
    %v5806 = vunpack.c.h.b16 %v4412
    %v5807 = vunpack.c.l.b16 %v4413
    %v5808 = vunpack.c.h.b16 %v4413
    %v5809 = vunpack.c.l.b16 %v4414
    %v5810 = vunpack.c.h.b16 %v4414
    %v5811 = vunpack.c.l.b16 %v4415
    %v5812 = vunpack.c.h.b16 %v4415
    %v5813 = vunpack.c.l.b16 %v4416
    %v5814 = vunpack.c.h.b16 %v4416
    %v5815 = vunpack.c.l.b16 %v4417
    %v5816 = vunpack.c.h.b16 %v4417
    %v5817 = vunpack.c.l.b16 %v4418
    %v5818 = vunpack.c.h.b16 %v4418
    %v5819 = vunpack.c.l.b16 %v4419
    %v5820 = vunpack.c.h.b16 %v4419
    %v5821 = vunpack.c.l.b16 %v4420
    %v5822 = vunpack.c.h.b16 %v4420
    %v5823 = vunpack.c.l.b16 %v4421
    %v5824 = vunpack.c.h.b16 %v4421
    %v5825 = vunpack.c.l.b16 %v4422
    %v5826 = vunpack.c.h.b16 %v4422
    %v5827 = vunpack.c.l.b16 %v4423
    %v5828 = vunpack.c.h.b16 %v4423
    %v5829 = vunpack.c.l.b16 %v4424
    %v5830 = vunpack.c.h.b16 %v4424
    %v5831 = vunpack.c.l.b16 %v4425
    %v5832 = vunpack.c.h.b16 %v4425
    %v5833 = vunpack.c.l.b16 %v4426
    %v5834 = vunpack.c.h.b16 %v4426
    %v5835 = vunpack.c.l.b16 %v4427
    %v5836 = vunpack.c.h.b16 %v4427
    %v5837 = vunpack.c.l.b16 %v4428
    %v5838 = vunpack.c.h.b16 %v4428
    %v5839 = vunpack.c.l.b16 %v4429
    %v5840 = vunpack.c.h.b16 %v4429
    %v5841 = vunpack.c.l.b16 %v4430
    %v5842 = vunpack.c.h.b16 %v4430
    %v5843 = vunpack.c.l.b16 %v4431
    %v5844 = vunpack.c.h.b16 %v4431
    %v5845 = vunpack.c.l.b16 %v4432
    %v5846 = vunpack.c.h.b16 %v4432
    %v5847 = vunpack.c.l.b16 %v4433
    %v5848 = vunpack.c.h.b16 %v4433
    %v5849 = vunpack.c.l.b16 %v4434
    %v5850 = vunpack.c.h.b16 %v4434
    %v5851 = vunpack.c.l.b16 %v4435
    %v5852 = vunpack.c.h.b16 %v4435
    %v5853 = vunpack.c.l.b16 %v4436
    %v5854 = vunpack.c.h.b16 %v4436
    %v5855 = vunpack.c.l.b16 %v4437
    %v5856 = vunpack.c.h.b16 %v4437
    %v5857 = vunpack.c.l.b16 %v4438
    %v5858 = vunpack.c.h.b16 %v4438
    %v5859 = vunpack.c.l.b16 %v4439
    %v5860 = vunpack.c.h.b16 %v4439
    %v5861 = vunpack.c.l.b16 %v4440
    %v5862 = vunpack.c.h.b16 %v4440
    %v5863 = vunpack.c.l.b16 %v4441
    %v5864 = vunpack.c.h.b16 %v4441
    %v5865 = vunpack.c.l.b16 %v4442
    %v5866 = vunpack.c.h.b16 %v4442
    %v5867 = vunpack.c.l.b16 %v4443
    %v5868 = vunpack.c.h.b16 %v4443
    %v5869 = vunpack.c.l.b16 %v4444
    %v5870 = vunpack.c.h.b16 %v4444
    %v5871 = vunpack.c.l.b16 %v4445
    %v5872 = vunpack.c.h.b16 %v4445
    %v5873 = vunpack.c.l.b16 %v4446
    %v5874 = vunpack.c.h.b16 %v4446
    %v5875 = vunpack.c.l.b16 %v4447
    %v5876 = vunpack.c.h.b16 %v4447
    %v5877 = vunpack.c.l.b16 %v4448
    %v5878 = vunpack.c.h.b16 %v4448
    %v5879 = vunpack.c.l.b16 %v4449
    %v5880 = vunpack.c.h.b16 %v4449
    %v5881 = vunpack.c.l.b16 %v4450
    %v5882 = vunpack.c.h.b16 %v4450
    %v5883 = vunpack.c.l.b16 %v4451
    %v5884 = vunpack.c.h.b16 %v4451
    %v5885 = vunpack.c.l.b16 %v4452
    %v5886 = vunpack.c.h.b16 %v4452
    %v5887 = vunpack.c.l.b16 %v4453
    %v5888 = vunpack.c.h.b16 %v4453
    %v5889 = vunpack.c.l.b16 %v4454
    %v5890 = vunpack.c.h.b16 %v4454
    %v5891 = vunpack.c.l.b16 %v4455
    %v5892 = vunpack.c.h.b16 %v4455
    %v5893 = vunpack.c.l.b16 %v4456
    %v5894 = vunpack.c.h.b16 %v4456
    %v5895 = vunpack.c.l.b16 %v4457
    %v5896 = vunpack.c.h.b16 %v4457
    %v5897 = vunpack.c.l.b16 %v4458
    %v5898 = vunpack.c.h.b16 %v4458
    %v5899 = vunpack.c.l.b16 %v4459
    %v5900 = vunpack.c.h.b16 %v4459
    %v5901 = vunpack.c.l.b16 %v4460
    %v5902 = vunpack.c.h.b16 %v4460
    %v5903 = vunpack.c.l.b16 %v4461
    %v5904 = vunpack.c.h.b16 %v4461
    %v5905 = vunpack.c.l.b16 %v4462
    %v5906 = vunpack.c.h.b16 %v4462
    %v5907 = vunpack.c.l.b16 %v4463
    %v5908 = vunpack.c.h.b16 %v4463
    %v5909 = vunpack.c.l.b16 %v4464
    %v5910 = vunpack.c.h.b16 %v4464
    %v5911 = vunpack.c.l.b16 %v4465
    %v5912 = vunpack.c.h.b16 %v4465
    %v5913 = vunpack.c.l.b16 %v4466
    %v5914 = vunpack.c.h.b16 %v4466
    %v5915 = vunpack.c.l.b16 %v4467
    %v5916 = vunpack.c.h.b16 %v4467
    %v5917 = vunpack.c.l.b16 %v4468
    %v5918 = vunpack.c.h.b16 %v4468
    %v5919 = vunpack.c.l.b16 %v4469
    %v5920 = vunpack.c.h.b16 %v4469
    %v5921 = vunpack.c.l.b16 %v4470
    %v5922 = vunpack.c.h.b16 %v4470
    %v5923 = vunpack.c.l.b16 %v4471
    %v5924 = vunpack.c.h.b16 %v4471
    %v5925 = vunpack.c.l.b16 %v4472
    %v5926 = vunpack.c.h.b16 %v4472
    %v5927 = vunpack.c.l.b16 %v4473
    %v5928 = vunpack.c.h.b16 %v4473
    %v5929 = vunpack.c.l.b16 %v4474
    %v5930 = vunpack.c.h.b16 %v4474
    %v5931 = vunpack.c.l.b16 %v4475
    %v5932 = vunpack.c.h.b16 %v4475
    %v5933 = vunpack.c.l.b16 %v4476
    %v5934 = vunpack.c.h.b16 %v4476
    %v5935 = vunpack.c.l.b16 %v4477
    %v5936 = vunpack.c.h.b16 %v4477
    %v5937 = vunpack.c.l.b16 %v4478
    %v5938 = vunpack.c.h.b16 %v4478
    %v5939 = vunpack.c.l.b16 %v4479
    %v5940 = vunpack.c.h.b16 %v4479
    %v5941 = vunpack.c.l.b16 %v4480
    %v5942 = vunpack.c.h.b16 %v4480
    %v5943 = vunpack.c.l.b16 %v4481
    %v5944 = vunpack.c.h.b16 %v4481
    %v5945 = vunpack.c.l.b16 %v4482
    %v5946 = vunpack.c.h.b16 %v4482
    %v5947 = vunpack.c.l.b16 %v4483
    %v5948 = vunpack.c.h.b16 %v4483
    %v5949 = vunpack.c.l.b16 %v4484
    %v5950 = vunpack.c.h.b16 %v4484
    %v5951 = vunpack.c.l.b16 %v4485
    %v5952 = vunpack.c.h.b16 %v4485
    %v5953 = vunpack.c.l.b16 %v4486
    %v5954 = vunpack.c.h.b16 %v4486
    %v5955 = vunpack.c.l.b16 %v4487
    %v5956 = vunpack.c.h.b16 %v4487
    %v5957 = vunpack.c.l.b16 %v4488
    %v5958 = vunpack.c.h.b16 %v4488
    %v5959 = vunpack.c.l.b16 %v4489
    %v5960 = vunpack.c.h.b16 %v4489
    %v5961 = vunpack.c.l.b16 %v4490
    %v5962 = vunpack.c.h.b16 %v4490
    %v5963 = vunpack.c.l.b16 %v4491
    %v5964 = vunpack.c.h.b16 %v4491
    %v5965 = vunpack.c.l.b16 %v4492
    %v5966 = vunpack.c.h.b16 %v4492
    %v5967 = vunpack.c.l.b16 %v4493
    %v5968 = vunpack.c.h.b16 %v4493
    %v5969 = vunpack.c.l.b16 %v4494
    %v5970 = vunpack.c.h.b16 %v4494
    %v5971 = vunpack.c.l.b16 %v4495
    %v5972 = vunpack.c.h.b16 %v4495
    %v5973 = vunpack.c.l.b16 %v4496
    %v5974 = vunpack.c.h.b16 %v4496
    %v5975 = vunpack.c.l.b16 %v4497
    %v5976 = vunpack.c.h.b16 %v4497
    %v5977 = vunpack.c.l.b16 %v4498
    %v5978 = vunpack.c.h.b16 %v4498
    %v5979 = vunpack.c.l.b16 %v4499
    %v5980 = vunpack.c.h.b16 %v4499
    %v5981 = vunpack.c.l.b16 %v4500
    %v5982 = vunpack.c.h.b16 %v4500
    %v5983 = vunpack.c.l.b16 %v4501
    %v5984 = vunpack.c.h.b16 %v4501
    %v5985 = vunpack.c.l.b16 %v4502
    %v5986 = vunpack.c.h.b16 %v4502
    %v5987 = vunpack.c.l.b16 %v4503
    %v5988 = vunpack.c.h.b16 %v4503
    %v5989 = vunpack.c.l.b16 %v4504
    %v5990 = vunpack.c.h.b16 %v4504
    %v5991 = vunpack.c.l.b16 %v4505
    %v5992 = vunpack.c.h.b16 %v4505
    %v5993 = vunpack.c.l.b16 %v4506
    %v5994 = vunpack.c.h.b16 %v4506
    %v5995 = vunpack.c.l.b16 %v4507
    %v5996 = vunpack.c.h.b16 %v4507
    %v5997 = vunpack.c.l.b16 %v4508
    %v5998 = vunpack.c.h.b16 %v4508
    %v5999 = vunpack.c.l.b16 %v4509
    %v6000 = vunpack.c.h.b16 %v4509
    %v6001 = vunpack.c.l.b16 %v4510
    %v6002 = vunpack.c.h.b16 %v4510
    %v6003 = vunpack.c.l.b16 %v4511
    %v6004 = vunpack.c.h.b16 %v4511
    %v6005 = vunpack.c.l.b16 %v4512
    %v6006 = vunpack.c.h.b16 %v4512
    %v6007 = vunpack.c.l.b16 %v4513
    %v6008 = vunpack.c.h.b16 %v4513
    %v6009 = vunpack.c.l.b16 %v4514
    %v6010 = vunpack.c.h.b16 %v4514
    %v6011 = vunpack.c.l.b16 %v4515
    %v6012 = vunpack.c.h.b16 %v4515
    %v6013 = vunpack.c.l.b16 %v4516
    %v6014 = vunpack.c.h.b16 %v4516
    %v6015 = vunpack.c.l.b16 %v4517
    %v6016 = vunpack.c.h.b16 %v4517
    %v6017 = vunpack.c.l.b16 %v4518
    %v6018 = vunpack.c.h.b16 %v4518
    %v6019 = vunpack.c.l.b16 %v4519
    %v6020 = vunpack.c.h.b16 %v4519
    %v6021 = vunpack.c.l.b16 %v4520
    %v6022 = vunpack.c.h.b16 %v4520
    %v6023 = vunpack.c.l.b16 %v4521
    %v6024 = vunpack.c.h.b16 %v4521
    %v6025 = vunpack.c.l.b16 %v4522
    %v6026 = vunpack.c.h.b16 %v4522
    %v6027 = vunpack.c.l.b16 %v4523
    %v6028 = vunpack.c.h.b16 %v4523
    %v6029 = vunpack.c.l.b16 %v4524
    %v6030 = vunpack.c.h.b16 %v4524
    %v6031 = vunpack.c.l.b16 %v4525
    %v6032 = vunpack.c.h.b16 %v4525
    %v6033 = vunpack.c.l.b16 %v4526
    %v6034 = vunpack.c.h.b16 %v4526
    %v6035 = vunpack.c.l.b16 %v4527
    %v6036 = vunpack.c.h.b16 %v4527
    %v6037 = vunpack.c.l.b16 %v4528
    %v6038 = vunpack.c.h.b16 %v4528
    %v6039 = vunpack.c.l.b16 %v4529
    %v6040 = vunpack.c.h.b16 %v4529
    %v6041 = vunpack.c.l.b16 %v4530
    %v6042 = vunpack.c.h.b16 %v4530
    %v6043 = vunpack.c.l.b16 %v4531
    %v6044 = vunpack.c.h.b16 %v4531
    %v6045 = vunpack.c.l.b16 %v4532
    %v6046 = vunpack.c.h.b16 %v4532
    %v6047 = vunpack.c.l.b16 %v4533
    %v6048 = vunpack.c.h.b16 %v4533
    %v6049 = vunpack.c.l.b16 %v4534
    %v6050 = vunpack.c.h.b16 %v4534
    %v6051 = vunpack.c.l.b16 %v4535
    %v6052 = vunpack.c.h.b16 %v4535
    %v6053 = vunpack.c.l.b16 %v4536
    %v6054 = vunpack.c.h.b16 %v4536
    %v6055 = vunpack.c.l.b16 %v4537
    %v6056 = vunpack.c.h.b16 %v4537
    %v6057 = vunpack.c.l.b16 %v4538
    %v6058 = vunpack.c.h.b16 %v4538
    %v6059 = vunpack.c.l.b16 %v4539
    %v6060 = vunpack.c.h.b16 %v4539
    %v6061 = vunpack.c.l.b16 %v4540
    %v6062 = vunpack.c.h.b16 %v4540
    %v6063 = vunpack.c.l.b16 %v4541
    %v6064 = vunpack.c.h.b16 %v4541
    %v6065 = vunpack.c.l.b16 %v4542
    %v6066 = vunpack.c.h.b16 %v4542
    %v6067 = vunpack.c.l.b16 %v4543
    %v6068 = vunpack.c.h.b16 %v4543
    %v6069 = vunpack.c.l.b16 %v4544
    %v6070 = vunpack.c.h.b16 %v4544
    %v6071 = vunpack.c.l.b16 %v4545
    %v6072 = vunpack.c.h.b16 %v4545
    %v6073 = vunpack.c.l.b16 %v4546
    %v6074 = vunpack.c.h.b16 %v4546
    %v6075 = vunpack.c.l.b16 %v4547
    %v6076 = vunpack.c.h.b16 %v4547
    %v6077 = vunpack.c.l.b16 %v4548
    %v6078 = vunpack.c.h.b16 %v4548
    %v6079 = vunpack.c.l.b16 %v4549
    %v6080 = vunpack.c.h.b16 %v4549
    %v6081 = vunpack.c.l.b16 %v4550
    %v6082 = vunpack.c.h.b16 %v4550
    %v6083 = vunpack.c.l.b16 %v4551
    %v6084 = vunpack.c.h.b16 %v4551
    %v6085 = vunpack.c.l.b16 %v4552
    %v6086 = vunpack.c.h.b16 %v4552
    %v6087 = vunpack.c.l.b16 %v4553
    %v6088 = vunpack.c.h.b16 %v4553
    %v6089 = vunpack.c.l.b16 %v4554
    %v6090 = vunpack.c.h.b16 %v4554
    %v6091 = vunpack.c.l.b16 %v4555
    %v6092 = vunpack.c.h.b16 %v4555
    %v6093 = vunpack.c.l.b16 %v4556
    %v6094 = vunpack.c.h.b16 %v4556
    %v6095 = vunpack.c.l.b16 %v4557
    %v6096 = vunpack.c.h.b16 %v4557
    %v6097 = vunpack.c.l.b16 %v4558
    %v6098 = vunpack.c.h.b16 %v4558
    %v6099 = vunpack.c.l.b16 %v4559
    %v6100 = vunpack.c.h.b16 %v4559
    %v6101 = vunpack.c.l.b16 %v4560
    %v6102 = vunpack.c.h.b16 %v4560
    %v6103 = vunpack.c.l.b16 %v4561
    %v6104 = vunpack.c.h.b16 %v4561
    %v6105 = vunpack.c.l.b16 %v4562
    %v6106 = vunpack.c.h.b16 %v4562
    %v6107 = vunpack.c.l.b16 %v4563
    %v6108 = vunpack.c.h.b16 %v4563
    %v6109 = vunpack.c.l.b16 %v4564
    %v6110 = vunpack.c.h.b16 %v4564
    %v6111 = vunpack.c.l.b16 %v4565
    %v6112 = vunpack.c.h.b16 %v4565
    %v6113 = vunpack.c.l.b16 %v4566
    %v6114 = vunpack.c.h.b16 %v4566
    %v6115 = vunpack.c.l.b16 %v4567
    %v6116 = vunpack.c.h.b16 %v4567
    %v6117 = vunpack.c.l.b16 %v4568
    %v6118 = vunpack.c.h.b16 %v4568
    %v6119 = vunpack.c.l.b16 %v4569
    %v6120 = vunpack.c.h.b16 %v4569
    %v6121 = vunpack.c.l.b16 %v4570
    %v6122 = vunpack.c.h.b16 %v4570
    %v6123 = vunpack.c.l.b16 %v4571
    %v6124 = vunpack.c.h.b16 %v4571
    %v6125 = vunpack.c.l.b16 %v4572
    %v6126 = vunpack.c.h.b16 %v4572
    %v6127 = vunpack.c.l.b16 %v4573
    %v6128 = vunpack.c.h.b16 %v4573
    %v6129 = vunpack.c.l.b16 %v4574
    %v6130 = vunpack.c.h.b16 %v4574
    %v6131 = vunpack.c.l.b16 %v4575
    %v6132 = vunpack.c.h.b16 %v4575
    %v6133 = vunpack.c.l.b16 %v4576
    %v6134 = vunpack.c.h.b16 %v4576
    %v6135 = vpack.c.b16 %v5115, %v5111
    %v6136 = vpack.c.b16 %v5116, %v5112
    %v6137 = vpack.c.b16 %v5117, %v5113
    %v6138 = vpack.c.b16 %v5118, %v5114
    %v6139 = vpack.c.b16 %v5123, %v5119
    %v6140 = vpack.c.b16 %v5124, %v5120
    %v6141 = vpack.c.b16 %v5125, %v5121
    %v6142 = vpack.c.b16 %v5126, %v5122
    %v6143 = vpack.c.b16 %v5131, %v5127
    %v6144 = vpack.c.b16 %v5132, %v5128
    %v6145 = vpack.c.b16 %v5133, %v5129
    %v6146 = vpack.c.b16 %v5134, %v5130
    %v6147 = vpack.c.b16 %v5139, %v5135
    %v6148 = vpack.c.b16 %v5140, %v5136
    %v6149 = vpack.c.b16 %v5141, %v5137
    %v6150 = vpack.c.b16 %v5142, %v5138
    %v6151 = vpack.c.b16 %v5147, %v5143
    %v6152 = vpack.c.b16 %v5148, %v5144
    %v6153 = vpack.c.b16 %v5149, %v5145
    %v6154 = vpack.c.b16 %v5150, %v5146
    %v6155 = vpack.c.b16 %v5155, %v5151
    %v6156 = vpack.c.b16 %v5156, %v5152
    %v6157 = vpack.c.b16 %v5157, %v5153
    %v6158 = vpack.c.b16 %v5158, %v5154
    %v6159 = vpack.c.b16 %v5163, %v5159
    %v6160 = vpack.c.b16 %v5164, %v5160
    %v6161 = vpack.c.b16 %v5165, %v5161
    %v6162 = vpack.c.b16 %v5166, %v5162
    %v6163 = vpack.c.b16 %v5171, %v5167
    %v6164 = vpack.c.b16 %v5172, %v5168
    %v6165 = vpack.c.b16 %v5173, %v5169
    %v6166 = vpack.c.b16 %v5174, %v5170
    %v6167 = vpack.c.b16 %v5179, %v5175
    %v6168 = vpack.c.b16 %v5180, %v5176
    %v6169 = vpack.c.b16 %v5181, %v5177
    %v6170 = vpack.c.b16 %v5182, %v5178
    %v6171 = vpack.c.b16 %v5187, %v5183
    %v6172 = vpack.c.b16 %v5188, %v5184
    %v6173 = vpack.c.b16 %v5189, %v5185
    %v6174 = vpack.c.b16 %v5190, %v5186
    %v6175 = vpack.c.b16 %v5195, %v5191
    %v6176 = vpack.c.b16 %v5196, %v5192
    %v6177 = vpack.c.b16 %v5197, %v5193
    %v6178 = vpack.c.b16 %v5198, %v5194
    %v6179 = vpack.c.b16 %v5203, %v5199
    %v6180 = vpack.c.b16 %v5204, %v5200
    %v6181 = vpack.c.b16 %v5205, %v5201
    %v6182 = vpack.c.b16 %v5206, %v5202
    %v6183 = vpack.c.b16 %v5211, %v5207
    %v6184 = vpack.c.b16 %v5212, %v5208
    %v6185 = vpack.c.b16 %v5213, %v5209
    %v6186 = vpack.c.b16 %v5214, %v5210
    %v6187 = vpack.c.b16 %v5219, %v5215
    %v6188 = vpack.c.b16 %v5220, %v5216
    %v6189 = vpack.c.b16 %v5221, %v5217
    %v6190 = vpack.c.b16 %v5222, %v5218
    %v6191 = vpack.c.b16 %v5227, %v5223
    %v6192 = vpack.c.b16 %v5228, %v5224
    %v6193 = vpack.c.b16 %v5229, %v5225
    %v6194 = vpack.c.b16 %v5230, %v5226
    %v6195 = vpack.c.b16 %v5235, %v5231
    %v6196 = vpack.c.b16 %v5236, %v5232
    %v6197 = vpack.c.b16 %v5237, %v5233
    %v6198 = vpack.c.b16 %v5238, %v5234
    %v6199 = vpack.c.b16 %v5243, %v5239
    %v6200 = vpack.c.b16 %v5244, %v5240
    %v6201 = vpack.c.b16 %v5245, %v5241
    %v6202 = vpack.c.b16 %v5246, %v5242
    %v6203 = vpack.c.b16 %v5251, %v5247
    %v6204 = vpack.c.b16 %v5252, %v5248
    %v6205 = vpack.c.b16 %v5253, %v5249
    %v6206 = vpack.c.b16 %v5254, %v5250
    %v6207 = vpack.c.b16 %v5259, %v5255
    %v6208 = vpack.c.b16 %v5260, %v5256
    %v6209 = vpack.c.b16 %v5261, %v5257
    %v6210 = vpack.c.b16 %v5262, %v5258
    %v6211 = vpack.c.b16 %v5267, %v5263
    %v6212 = vpack.c.b16 %v5268, %v5264
    %v6213 = vpack.c.b16 %v5269, %v5265
    %v6214 = vpack.c.b16 %v5270, %v5266
    %v6215 = vpack.c.b16 %v5275, %v5271
    %v6216 = vpack.c.b16 %v5276, %v5272
    %v6217 = vpack.c.b16 %v5277, %v5273
    %v6218 = vpack.c.b16 %v5278, %v5274
    %v6219 = vpack.c.b16 %v5283, %v5279
    %v6220 = vpack.c.b16 %v5284, %v5280
    %v6221 = vpack.c.b16 %v5285, %v5281
    %v6222 = vpack.c.b16 %v5286, %v5282
    %v6223 = vpack.c.b16 %v5291, %v5287
    %v6224 = vpack.c.b16 %v5292, %v5288
    %v6225 = vpack.c.b16 %v5293, %v5289
    %v6226 = vpack.c.b16 %v5294, %v5290
    %v6227 = vpack.c.b16 %v5299, %v5295
    %v6228 = vpack.c.b16 %v5300, %v5296
    %v6229 = vpack.c.b16 %v5301, %v5297
    %v6230 = vpack.c.b16 %v5302, %v5298
    %v6231 = vpack.c.b16 %v5307, %v5303
    %v6232 = vpack.c.b16 %v5308, %v5304
    %v6233 = vpack.c.b16 %v5309, %v5305
    %v6234 = vpack.c.b16 %v5310, %v5306
    %v6235 = vpack.c.b16 %v5315, %v5311
    %v6236 = vpack.c.b16 %v5316, %v5312
    %v6237 = vpack.c.b16 %v5317, %v5313
    %v6238 = vpack.c.b16 %v5318, %v5314
    %v6239 = vpack.c.b16 %v5323, %v5319
    %v6240 = vpack.c.b16 %v5324, %v5320
    %v6241 = vpack.c.b16 %v5325, %v5321
    %v6242 = vpack.c.b16 %v5326, %v5322
    %v6243 = vpack.c.b16 %v5331, %v5327
    %v6244 = vpack.c.b16 %v5332, %v5328
    %v6245 = vpack.c.b16 %v5333, %v5329
    %v6246 = vpack.c.b16 %v5334, %v5330
    %v6247 = vpack.c.b16 %v5339, %v5335
    %v6248 = vpack.c.b16 %v5340, %v5336
    %v6249 = vpack.c.b16 %v5341, %v5337
    %v6250 = vpack.c.b16 %v5342, %v5338
    %v6251 = vpack.c.b16 %v5347, %v5343
    %v6252 = vpack.c.b16 %v5348, %v5344
    %v6253 = vpack.c.b16 %v5349, %v5345
    %v6254 = vpack.c.b16 %v5350, %v5346
    %v6255 = vpack.c.b16 %v5355, %v5351
    %v6256 = vpack.c.b16 %v5356, %v5352
    %v6257 = vpack.c.b16 %v5357, %v5353
    %v6258 = vpack.c.b16 %v5358, %v5354
    %v6259 = vpack.c.b16 %v5363, %v5359
    %v6260 = vpack.c.b16 %v5364, %v5360
    %v6261 = vpack.c.b16 %v5365, %v5361
    %v6262 = vpack.c.b16 %v5366, %v5362
    %v6263 = vpack.c.b16 %v5371, %v5367
    %v6264 = vpack.c.b16 %v5372, %v5368
    %v6265 = vpack.c.b16 %v5373, %v5369
    %v6266 = vpack.c.b16 %v5374, %v5370
    %v6267 = vpack.c.b16 %v5379, %v5375
    %v6268 = vpack.c.b16 %v5380, %v5376
    %v6269 = vpack.c.b16 %v5381, %v5377
    %v6270 = vpack.c.b16 %v5382, %v5378
    %v6271 = vpack.c.b16 %v5387, %v5383
    %v6272 = vpack.c.b16 %v5388, %v5384
    %v6273 = vpack.c.b16 %v5389, %v5385
    %v6274 = vpack.c.b16 %v5390, %v5386
    %v6275 = vpack.c.b16 %v5395, %v5391
    %v6276 = vpack.c.b16 %v5396, %v5392
    %v6277 = vpack.c.b16 %v5397, %v5393
    %v6278 = vpack.c.b16 %v5398, %v5394
    %v6279 = vpack.c.b16 %v5403, %v5399
    %v6280 = vpack.c.b16 %v5404, %v5400
    %v6281 = vpack.c.b16 %v5405, %v5401
    %v6282 = vpack.c.b16 %v5406, %v5402
    %v6283 = vpack.c.b16 %v5411, %v5407
    %v6284 = vpack.c.b16 %v5412, %v5408
    %v6285 = vpack.c.b16 %v5413, %v5409
    %v6286 = vpack.c.b16 %v5414, %v5410
    %v6287 = vpack.c.b16 %v5419, %v5415
    %v6288 = vpack.c.b16 %v5420, %v5416
    %v6289 = vpack.c.b16 %v5421, %v5417
    %v6290 = vpack.c.b16 %v5422, %v5418
    %v6291 = vpack.c.b16 %v5427, %v5423
    %v6292 = vpack.c.b16 %v5428, %v5424
    %v6293 = vpack.c.b16 %v5429, %v5425
    %v6294 = vpack.c.b16 %v5430, %v5426
    %v6295 = vpack.c.b16 %v5435, %v5431
    %v6296 = vpack.c.b16 %v5436, %v5432
    %v6297 = vpack.c.b16 %v5437, %v5433
    %v6298 = vpack.c.b16 %v5438, %v5434
    %v6299 = vpack.c.b16 %v5443, %v5439
    %v6300 = vpack.c.b16 %v5444, %v5440
    %v6301 = vpack.c.b16 %v5445, %v5441
    %v6302 = vpack.c.b16 %v5446, %v5442
    %v6303 = vpack.c.b16 %v5451, %v5447
    %v6304 = vpack.c.b16 %v5452, %v5448
    %v6305 = vpack.c.b16 %v5453, %v5449
    %v6306 = vpack.c.b16 %v5454, %v5450
    %v6307 = vpack.c.b16 %v5459, %v5455
    %v6308 = vpack.c.b16 %v5460, %v5456
    %v6309 = vpack.c.b16 %v5461, %v5457
    %v6310 = vpack.c.b16 %v5462, %v5458
    %v6311 = vpack.c.b16 %v5467, %v5463
    %v6312 = vpack.c.b16 %v5468, %v5464
    %v6313 = vpack.c.b16 %v5469, %v5465
    %v6314 = vpack.c.b16 %v5470, %v5466
    %v6315 = vpack.c.b16 %v5475, %v5471
    %v6316 = vpack.c.b16 %v5476, %v5472
    %v6317 = vpack.c.b16 %v5477, %v5473
    %v6318 = vpack.c.b16 %v5478, %v5474
    %v6319 = vpack.c.b16 %v5483, %v5479
    %v6320 = vpack.c.b16 %v5484, %v5480
    %v6321 = vpack.c.b16 %v5485, %v5481
    %v6322 = vpack.c.b16 %v5486, %v5482
    %v6323 = vpack.c.b16 %v5491, %v5487
    %v6324 = vpack.c.b16 %v5492, %v5488
    %v6325 = vpack.c.b16 %v5493, %v5489
    %v6326 = vpack.c.b16 %v5494, %v5490
    %v6327 = vpack.c.b16 %v5499, %v5495
    %v6328 = vpack.c.b16 %v5500, %v5496
    %v6329 = vpack.c.b16 %v5501, %v5497
    %v6330 = vpack.c.b16 %v5502, %v5498
    %v6331 = vpack.c.b16 %v5507, %v5503
    %v6332 = vpack.c.b16 %v5508, %v5504
    %v6333 = vpack.c.b16 %v5509, %v5505
    %v6334 = vpack.c.b16 %v5510, %v5506
    %v6335 = vpack.c.b16 %v5515, %v5511
    %v6336 = vpack.c.b16 %v5516, %v5512
    %v6337 = vpack.c.b16 %v5517, %v5513
    %v6338 = vpack.c.b16 %v5518, %v5514
    %v6339 = vpack.c.b16 %v5523, %v5519
    %v6340 = vpack.c.b16 %v5524, %v5520
    %v6341 = vpack.c.b16 %v5525, %v5521
    %v6342 = vpack.c.b16 %v5526, %v5522
    %v6343 = vpack.c.b16 %v5531, %v5527
    %v6344 = vpack.c.b16 %v5532, %v5528
    %v6345 = vpack.c.b16 %v5533, %v5529
    %v6346 = vpack.c.b16 %v5534, %v5530
    %v6347 = vpack.c.b16 %v5539, %v5535
    %v6348 = vpack.c.b16 %v5540, %v5536
    %v6349 = vpack.c.b16 %v5541, %v5537
    %v6350 = vpack.c.b16 %v5542, %v5538
    %v6351 = vpack.c.b16 %v5547, %v5543
    %v6352 = vpack.c.b16 %v5548, %v5544
    %v6353 = vpack.c.b16 %v5549, %v5545
    %v6354 = vpack.c.b16 %v5550, %v5546
    %v6355 = vpack.c.b16 %v5555, %v5551
    %v6356 = vpack.c.b16 %v5556, %v5552
    %v6357 = vpack.c.b16 %v5557, %v5553
    %v6358 = vpack.c.b16 %v5558, %v5554
    %v6359 = vpack.c.b16 %v5563, %v5559
    %v6360 = vpack.c.b16 %v5564, %v5560
    %v6361 = vpack.c.b16 %v5565, %v5561
    %v6362 = vpack.c.b16 %v5566, %v5562
    %v6363 = vpack.c.b16 %v5571, %v5567
    %v6364 = vpack.c.b16 %v5572, %v5568
    %v6365 = vpack.c.b16 %v5573, %v5569
    %v6366 = vpack.c.b16 %v5574, %v5570
    %v6367 = vpack.c.b16 %v5579, %v5575
    %v6368 = vpack.c.b16 %v5580, %v5576
    %v6369 = vpack.c.b16 %v5581, %v5577
    %v6370 = vpack.c.b16 %v5582, %v5578
    %v6371 = vpack.c.b16 %v5587, %v5583
    %v6372 = vpack.c.b16 %v5588, %v5584
    %v6373 = vpack.c.b16 %v5589, %v5585
    %v6374 = vpack.c.b16 %v5590, %v5586
    %v6375 = vpack.c.b16 %v5595, %v5591
    %v6376 = vpack.c.b16 %v5596, %v5592
    %v6377 = vpack.c.b16 %v5597, %v5593
    %v6378 = vpack.c.b16 %v5598, %v5594
    %v6379 = vpack.c.b16 %v5603, %v5599
    %v6380 = vpack.c.b16 %v5604, %v5600
    %v6381 = vpack.c.b16 %v5605, %v5601
    %v6382 = vpack.c.b16 %v5606, %v5602
    %v6383 = vpack.c.b16 %v5611, %v5607
    %v6384 = vpack.c.b16 %v5612, %v5608
    %v6385 = vpack.c.b16 %v5613, %v5609
    %v6386 = vpack.c.b16 %v5614, %v5610
    %v6387 = vpack.c.b16 %v5619, %v5615
    %v6388 = vpack.c.b16 %v5620, %v5616
    %v6389 = vpack.c.b16 %v5621, %v5617
    %v6390 = vpack.c.b16 %v5622, %v5618
    %v6391 = vpack.c.b16 %v5627, %v5623
    %v6392 = vpack.c.b16 %v5628, %v5624
    %v6393 = vpack.c.b16 %v5629, %v5625
    %v6394 = vpack.c.b16 %v5630, %v5626
    %v6395 = vpack.c.b16 %v5635, %v5631
    %v6396 = vpack.c.b16 %v5636, %v5632
    %v6397 = vpack.c.b16 %v5637, %v5633
    %v6398 = vpack.c.b16 %v5638, %v5634
    %v6399 = vpack.c.b16 %v5643, %v5639
    %v6400 = vpack.c.b16 %v5644, %v5640
    %v6401 = vpack.c.b16 %v5645, %v5641
    %v6402 = vpack.c.b16 %v5646, %v5642
    %v6403 = vpack.c.b16 %v5651, %v5647
    %v6404 = vpack.c.b16 %v5652, %v5648
    %v6405 = vpack.c.b16 %v5653, %v5649
    %v6406 = vpack.c.b16 %v5654, %v5650
    %v6407 = vpack.c.b16 %v5659, %v5655
    %v6408 = vpack.c.b16 %v5660, %v5656
    %v6409 = vpack.c.b16 %v5661, %v5657
    %v6410 = vpack.c.b16 %v5662, %v5658
    %v6411 = vpack.c.b16 %v5667, %v5663
    %v6412 = vpack.c.b16 %v5668, %v5664
    %v6413 = vpack.c.b16 %v5669, %v5665
    %v6414 = vpack.c.b16 %v5670, %v5666
    %v6415 = vpack.c.b16 %v5675, %v5671
    %v6416 = vpack.c.b16 %v5676, %v5672
    %v6417 = vpack.c.b16 %v5677, %v5673
    %v6418 = vpack.c.b16 %v5678, %v5674
    %v6419 = vpack.c.b16 %v5683, %v5679
    %v6420 = vpack.c.b16 %v5684, %v5680
    %v6421 = vpack.c.b16 %v5685, %v5681
    %v6422 = vpack.c.b16 %v5686, %v5682
    %v6423 = vpack.c.b16 %v5691, %v5687
    %v6424 = vpack.c.b16 %v5692, %v5688
    %v6425 = vpack.c.b16 %v5693, %v5689
    %v6426 = vpack.c.b16 %v5694, %v5690
    %v6427 = vpack.c.b16 %v5699, %v5695
    %v6428 = vpack.c.b16 %v5700, %v5696
    %v6429 = vpack.c.b16 %v5701, %v5697
    %v6430 = vpack.c.b16 %v5702, %v5698
    %v6431 = vpack.c.b16 %v5707, %v5703
    %v6432 = vpack.c.b16 %v5708, %v5704
    %v6433 = vpack.c.b16 %v5709, %v5705
    %v6434 = vpack.c.b16 %v5710, %v5706
    %v6435 = vpack.c.b16 %v5715, %v5711
    %v6436 = vpack.c.b16 %v5716, %v5712
    %v6437 = vpack.c.b16 %v5717, %v5713
    %v6438 = vpack.c.b16 %v5718, %v5714
    %v6439 = vpack.c.b16 %v5723, %v5719
    %v6440 = vpack.c.b16 %v5724, %v5720
    %v6441 = vpack.c.b16 %v5725, %v5721
    %v6442 = vpack.c.b16 %v5726, %v5722
    %v6443 = vpack.c.b16 %v5731, %v5727
    %v6444 = vpack.c.b16 %v5732, %v5728
    %v6445 = vpack.c.b16 %v5733, %v5729
    %v6446 = vpack.c.b16 %v5734, %v5730
    %v6447 = vpack.c.b16 %v5739, %v5735
    %v6448 = vpack.c.b16 %v5740, %v5736
    %v6449 = vpack.c.b16 %v5741, %v5737
    %v6450 = vpack.c.b16 %v5742, %v5738
    %v6451 = vpack.c.b16 %v5747, %v5743
    %v6452 = vpack.c.b16 %v5748, %v5744
    %v6453 = vpack.c.b16 %v5749, %v5745
    %v6454 = vpack.c.b16 %v5750, %v5746
    %v6455 = vpack.c.b16 %v5755, %v5751
    %v6456 = vpack.c.b16 %v5756, %v5752
    %v6457 = vpack.c.b16 %v5757, %v5753
    %v6458 = vpack.c.b16 %v5758, %v5754
    %v6459 = vpack.c.b16 %v5763, %v5759
    %v6460 = vpack.c.b16 %v5764, %v5760
    %v6461 = vpack.c.b16 %v5765, %v5761
    %v6462 = vpack.c.b16 %v5766, %v5762
    %v6463 = vpack.c.b16 %v5771, %v5767
    %v6464 = vpack.c.b16 %v5772, %v5768
    %v6465 = vpack.c.b16 %v5773, %v5769
    %v6466 = vpack.c.b16 %v5774, %v5770
    %v6467 = vpack.c.b16 %v5779, %v5775
    %v6468 = vpack.c.b16 %v5780, %v5776
    %v6469 = vpack.c.b16 %v5781, %v5777
    %v6470 = vpack.c.b16 %v5782, %v5778
    %v6471 = vpack.c.b16 %v5787, %v5783
    %v6472 = vpack.c.b16 %v5788, %v5784
    %v6473 = vpack.c.b16 %v5789, %v5785
    %v6474 = vpack.c.b16 %v5790, %v5786
    %v6475 = vpack.c.b16 %v5795, %v5791
    %v6476 = vpack.c.b16 %v5796, %v5792
    %v6477 = vpack.c.b16 %v5797, %v5793
    %v6478 = vpack.c.b16 %v5798, %v5794
    %v6479 = vpack.c.b16 %v5803, %v5799
    %v6480 = vpack.c.b16 %v5804, %v5800
    %v6481 = vpack.c.b16 %v5805, %v5801
    %v6482 = vpack.c.b16 %v5806, %v5802
    %v6483 = vpack.c.b16 %v5811, %v5807
    %v6484 = vpack.c.b16 %v5812, %v5808
    %v6485 = vpack.c.b16 %v5813, %v5809
    %v6486 = vpack.c.b16 %v5814, %v5810
    %v6487 = vpack.c.b16 %v5819, %v5815
    %v6488 = vpack.c.b16 %v5820, %v5816
    %v6489 = vpack.c.b16 %v5821, %v5817
    %v6490 = vpack.c.b16 %v5822, %v5818
    %v6491 = vpack.c.b16 %v5827, %v5823
    %v6492 = vpack.c.b16 %v5828, %v5824
    %v6493 = vpack.c.b16 %v5829, %v5825
    %v6494 = vpack.c.b16 %v5830, %v5826
    %v6495 = vpack.c.b16 %v5835, %v5831
    %v6496 = vpack.c.b16 %v5836, %v5832
    %v6497 = vpack.c.b16 %v5837, %v5833
    %v6498 = vpack.c.b16 %v5838, %v5834
    %v6499 = vpack.c.b16 %v5843, %v5839
    %v6500 = vpack.c.b16 %v5844, %v5840
    %v6501 = vpack.c.b16 %v5845, %v5841
    %v6502 = vpack.c.b16 %v5846, %v5842
    %v6503 = vpack.c.b16 %v5851, %v5847
    %v6504 = vpack.c.b16 %v5852, %v5848
    %v6505 = vpack.c.b16 %v5853, %v5849
    %v6506 = vpack.c.b16 %v5854, %v5850
    %v6507 = vpack.c.b16 %v5859, %v5855
    %v6508 = vpack.c.b16 %v5860, %v5856
    %v6509 = vpack.c.b16 %v5861, %v5857
    %v6510 = vpack.c.b16 %v5862, %v5858
    %v6511 = vpack.c.b16 %v5867, %v5863
    %v6512 = vpack.c.b16 %v5868, %v5864
    %v6513 = vpack.c.b16 %v5869, %v5865
    %v6514 = vpack.c.b16 %v5870, %v5866
    %v6515 = vpack.c.b16 %v5875, %v5871
    %v6516 = vpack.c.b16 %v5876, %v5872
    %v6517 = vpack.c.b16 %v5877, %v5873
    %v6518 = vpack.c.b16 %v5878, %v5874
    %v6519 = vpack.c.b16 %v5883, %v5879
    %v6520 = vpack.c.b16 %v5884, %v5880
    %v6521 = vpack.c.b16 %v5885, %v5881
    %v6522 = vpack.c.b16 %v5886, %v5882
    %v6523 = vpack.c.b16 %v5891, %v5887
    %v6524 = vpack.c.b16 %v5892, %v5888
    %v6525 = vpack.c.b16 %v5893, %v5889
    %v6526 = vpack.c.b16 %v5894, %v5890
    %v6527 = vpack.c.b16 %v5899, %v5895
    %v6528 = vpack.c.b16 %v5900, %v5896
    %v6529 = vpack.c.b16 %v5901, %v5897
    %v6530 = vpack.c.b16 %v5902, %v5898
    %v6531 = vpack.c.b16 %v5907, %v5903
    %v6532 = vpack.c.b16 %v5908, %v5904
    %v6533 = vpack.c.b16 %v5909, %v5905
    %v6534 = vpack.c.b16 %v5910, %v5906
    %v6535 = vpack.c.b16 %v5915, %v5911
    %v6536 = vpack.c.b16 %v5916, %v5912
    %v6537 = vpack.c.b16 %v5917, %v5913
    %v6538 = vpack.c.b16 %v5918, %v5914
    %v6539 = vpack.c.b16 %v5923, %v5919
    %v6540 = vpack.c.b16 %v5924, %v5920
    %v6541 = vpack.c.b16 %v5925, %v5921
    %v6542 = vpack.c.b16 %v5926, %v5922
    %v6543 = vpack.c.b16 %v5931, %v5927
    %v6544 = vpack.c.b16 %v5932, %v5928
    %v6545 = vpack.c.b16 %v5933, %v5929
    %v6546 = vpack.c.b16 %v5934, %v5930
    %v6547 = vpack.c.b16 %v5939, %v5935
    %v6548 = vpack.c.b16 %v5940, %v5936
    %v6549 = vpack.c.b16 %v5941, %v5937
    %v6550 = vpack.c.b16 %v5942, %v5938
    %v6551 = vpack.c.b16 %v5947, %v5943
    %v6552 = vpack.c.b16 %v5948, %v5944
    %v6553 = vpack.c.b16 %v5949, %v5945
    %v6554 = vpack.c.b16 %v5950, %v5946
    %v6555 = vpack.c.b16 %v5955, %v5951
    %v6556 = vpack.c.b16 %v5956, %v5952
    %v6557 = vpack.c.b16 %v5957, %v5953
    %v6558 = vpack.c.b16 %v5958, %v5954
    %v6559 = vpack.c.b16 %v5963, %v5959
    %v6560 = vpack.c.b16 %v5964, %v5960
    %v6561 = vpack.c.b16 %v5965, %v5961
    %v6562 = vpack.c.b16 %v5966, %v5962
    %v6563 = vpack.c.b16 %v5971, %v5967
    %v6564 = vpack.c.b16 %v5972, %v5968
    %v6565 = vpack.c.b16 %v5973, %v5969
    %v6566 = vpack.c.b16 %v5974, %v5970
    %v6567 = vpack.c.b16 %v5979, %v5975
    %v6568 = vpack.c.b16 %v5980, %v5976
    %v6569 = vpack.c.b16 %v5981, %v5977
    %v6570 = vpack.c.b16 %v5982, %v5978
    %v6571 = vpack.c.b16 %v5987, %v5983
    %v6572 = vpack.c.b16 %v5988, %v5984
    %v6573 = vpack.c.b16 %v5989, %v5985
    %v6574 = vpack.c.b16 %v5990, %v5986
    %v6575 = vpack.c.b16 %v5995, %v5991
    %v6576 = vpack.c.b16 %v5996, %v5992
    %v6577 = vpack.c.b16 %v5997, %v5993
    %v6578 = vpack.c.b16 %v5998, %v5994
    %v6579 = vpack.c.b16 %v6003, %v5999
    %v6580 = vpack.c.b16 %v6004, %v6000
    %v6581 = vpack.c.b16 %v6005, %v6001
    %v6582 = vpack.c.b16 %v6006, %v6002
    %v6583 = vpack.c.b16 %v6011, %v6007
    %v6584 = vpack.c.b16 %v6012, %v6008
    %v6585 = vpack.c.b16 %v6013, %v6009
    %v6586 = vpack.c.b16 %v6014, %v6010
    %v6587 = vpack.c.b16 %v6019, %v6015
    %v6588 = vpack.c.b16 %v6020, %v6016
    %v6589 = vpack.c.b16 %v6021, %v6017
    %v6590 = vpack.c.b16 %v6022, %v6018
    %v6591 = vpack.c.b16 %v6027, %v6023
    %v6592 = vpack.c.b16 %v6028, %v6024
    %v6593 = vpack.c.b16 %v6029, %v6025
    %v6594 = vpack.c.b16 %v6030, %v6026
    %v6595 = vpack.c.b16 %v6035, %v6031
    %v6596 = vpack.c.b16 %v6036, %v6032
    %v6597 = vpack.c.b16 %v6037, %v6033
    %v6598 = vpack.c.b16 %v6038, %v6034
    %v6599 = vpack.c.b16 %v6043, %v6039
    %v6600 = vpack.c.b16 %v6044, %v6040
    %v6601 = vpack.c.b16 %v6045, %v6041
    %v6602 = vpack.c.b16 %v6046, %v6042
    %v6603 = vpack.c.b16 %v6051, %v6047
    %v6604 = vpack.c.b16 %v6052, %v6048
    %v6605 = vpack.c.b16 %v6053, %v6049
    %v6606 = vpack.c.b16 %v6054, %v6050
    %v6607 = vpack.c.b16 %v6059, %v6055
    %v6608 = vpack.c.b16 %v6060, %v6056
    %v6609 = vpack.c.b16 %v6061, %v6057
    %v6610 = vpack.c.b16 %v6062, %v6058
    %v6611 = vpack.c.b16 %v6067, %v6063
    %v6612 = vpack.c.b16 %v6068, %v6064
    %v6613 = vpack.c.b16 %v6069, %v6065
    %v6614 = vpack.c.b16 %v6070, %v6066
    %v6615 = vpack.c.b16 %v6075, %v6071
    %v6616 = vpack.c.b16 %v6076, %v6072
    %v6617 = vpack.c.b16 %v6077, %v6073
    %v6618 = vpack.c.b16 %v6078, %v6074
    %v6619 = vpack.c.b16 %v6083, %v6079
    %v6620 = vpack.c.b16 %v6084, %v6080
    %v6621 = vpack.c.b16 %v6085, %v6081
    %v6622 = vpack.c.b16 %v6086, %v6082
    %v6623 = vpack.c.b16 %v6091, %v6087
    %v6624 = vpack.c.b16 %v6092, %v6088
    %v6625 = vpack.c.b16 %v6093, %v6089
    %v6626 = vpack.c.b16 %v6094, %v6090
    %v6627 = vpack.c.b16 %v6099, %v6095
    %v6628 = vpack.c.b16 %v6100, %v6096
    %v6629 = vpack.c.b16 %v6101, %v6097
    %v6630 = vpack.c.b16 %v6102, %v6098
    %v6631 = vpack.c.b16 %v6107, %v6103
    %v6632 = vpack.c.b16 %v6108, %v6104
    %v6633 = vpack.c.b16 %v6109, %v6105
    %v6634 = vpack.c.b16 %v6110, %v6106
    %v6635 = vpack.c.b16 %v6115, %v6111
    %v6636 = vpack.c.b16 %v6116, %v6112
    %v6637 = vpack.c.b16 %v6117, %v6113
    %v6638 = vpack.c.b16 %v6118, %v6114
    %v6639 = vpack.c.b16 %v6123, %v6119
    %v6640 = vpack.c.b16 %v6124, %v6120
    %v6641 = vpack.c.b16 %v6125, %v6121
    %v6642 = vpack.c.b16 %v6126, %v6122
    %v6643 = vpack.c.b16 %v6131, %v6127
    %v6644 = vpack.c.b16 %v6132, %v6128
    %v6645 = vpack.c.b16 %v6133, %v6129
    %v6646 = vpack.c.b16 %v6134, %v6130
    %7159 = vmatprep.subr.bf16.mxu0 %v6136
    %7160 = vmatpush1.bf16.msra.mxu0 %v6135
    %7161 = vmatprep.subr.bf16.mxu0 %v6140
    %7162 = vmatpush1.bf16.msra.mxu0 %v6139
    %7163 = vmatprep.subr.bf16.mxu0 %v6144
    %7164 = vmatpush1.bf16.msra.mxu0 %v6143
    %7165 = vmatprep.subr.bf16.mxu0 %v6148
    %7166 = vmatpush1.bf16.msra.mxu0 %v6147
    %7167 = vmatprep.subr.bf16.mxu0 %v6152
    %7168 = vmatpush1.bf16.msra.mxu0 %v6151
    %7169 = vmatprep.subr.bf16.mxu0 %v6156
    %7170 = vmatpush1.bf16.msra.mxu0 %v6155
    %7171 = vmatprep.subr.bf16.mxu0 %v6160
    %7172 = vmatpush1.bf16.msra.mxu0 %v6159
    %7173 = vmatprep.subr.bf16.mxu0 %v6164
    %7174 = vmatpush1.bf16.msra.mxu0 %v6163
    %7175 = vmatprep.subr.bf16.mxu0 %v6168
    %7176 = vmatpush1.bf16.msra.mxu0 %v6167
    %7177 = vmatprep.subr.bf16.mxu0 %v6172
    %7178 = vmatpush1.bf16.msra.mxu0 %v6171
    %7179 = vmatprep.subr.bf16.mxu0 %v6176
    %7180 = vmatpush1.bf16.msra.mxu0 %v6175
    %7181 = vmatprep.subr.bf16.mxu0 %v6180
    %7182 = vmatpush1.bf16.msra.mxu0 %v6179
    %7183 = vmatprep.subr.bf16.mxu0 %v6184
    %7184 = vmatpush1.bf16.msra.mxu0 %v6183
    %7185 = vmatprep.subr.bf16.mxu0 %v6188
    %7186 = vmatpush1.bf16.msra.mxu0 %v6187
    %7187 = vmatprep.subr.bf16.mxu0 %v6192
    %7188 = vmatpush1.bf16.msra.mxu0 %v6191
    %7189 = vmatprep.subr.bf16.mxu0 %v6196
    %7190 = vmatpush1.bf16.msra.mxu0 %v6195
    %7191 = vmatprep.mubr.bf16.mxu0 %v4050
    %7192 = vmatmul.mubr.bf16.gmra.mrb[0].mxu0 %v4049
    %v7193 = vpop.f32.mrb[0].mxu0
    %v7194 = vadd.f32 %v4582, %v7193
    %v7195 = vpop.f32.mrb[0].mxu0
    %v7196 = vadd.f32 %v4586, %v7195
    %v7197 = vpop.f32.mrb[0].mxu0
    %v7198 = vadd.f32 %v4582, %v7197
    %v7199 = vpop.f32.mrb[0].mxu0
    %v7200 = vadd.f32 %v4586, %v7199
    %7201 = vdwg.mxu0
    %7202 = vmatprep.subr.bf16.mxu0 %v6200
    %7203 = vmatpush1.bf16.msra.mxu0 %v6199
    %7204 = vmatprep.subr.bf16.mxu0 %v6204
    %7205 = vmatpush1.bf16.msra.mxu0 %v6203
    %7206 = vmatprep.subr.bf16.mxu0 %v6208
    %7207 = vmatpush1.bf16.msra.mxu0 %v6207
    %7208 = vmatprep.subr.bf16.mxu0 %v6212
    %7209 = vmatpush1.bf16.msra.mxu0 %v6211
    %7210 = vmatprep.subr.bf16.mxu0 %v6216
    %7211 = vmatpush1.bf16.msra.mxu0 %v6215
    %7212 = vmatprep.subr.bf16.mxu0 %v6220
    %7213 = vmatpush1.bf16.msra.mxu0 %v6219
    %7214 = vmatprep.subr.bf16.mxu0 %v6224
    %7215 = vmatpush1.bf16.msra.mxu0 %v6223
    %7216 = vmatprep.subr.bf16.mxu0 %v6228
    %7217 = vmatpush1.bf16.msra.mxu0 %v6227
    %7218 = vmatprep.subr.bf16.mxu0 %v6232
    %7219 = vmatpush1.bf16.msra.mxu0 %v6231
    %7220 = vmatprep.subr.bf16.mxu0 %v6236
    %7221 = vmatpush1.bf16.msra.mxu0 %v6235
    %7222 = vmatprep.subr.bf16.mxu0 %v6240
    %7223 = vmatpush1.bf16.msra.mxu0 %v6239
    %7224 = vmatprep.subr.bf16.mxu0 %v6244
    %7225 = vmatpush1.bf16.msra.mxu0 %v6243
    %7226 = vmatprep.subr.bf16.mxu0 %v6248
    %7227 = vmatpush1.bf16.msra.mxu0 %v6247
    %7228 = vmatprep.subr.bf16.mxu0 %v6252
    %7229 = vmatpush1.bf16.msra.mxu0 %v6251
    %7230 = vmatprep.subr.bf16.mxu0 %v6256
    %7231 = vmatpush1.bf16.msra.mxu0 %v6255
    %7232 = vmatprep.subr.bf16.mxu0 %v6260
    %7233 = vmatpush1.bf16.msra.mxu0 %v6259
    %7234 = vmatprep.mubr.bf16.mxu0 %v4052
    %7235 = vmatmul.mubr.bf16.gmra.mrb[0].mxu0 %v4051
    %v7236 = vpop.f32.mrb[0].mxu0
    %v7237 = vadd.f32 %v7194, %v7236
    %v7238 = vpop.f32.mrb[0].mxu0
    %v7239 = vadd.f32 %v7196, %v7238
    %v7240 = vpop.f32.mrb[0].mxu0
    %v7241 = vadd.f32 %v7198, %v7240
    %v7242 = vpop.f32.mrb[0].mxu0
    %v7243 = vadd.f32 %v7200, %v7242
    %7244 = vdwg.mxu0
    %7245 = vmatprep.subr.bf16.mxu0 %v6264
    %7246 = vmatpush1.bf16.msra.mxu0 %v6263
    %7247 = vmatprep.subr.bf16.mxu0 %v6268
    %7248 = vmatpush1.bf16.msra.mxu0 %v6267
    %7249 = vmatprep.subr.bf16.mxu0 %v6272
    %7250 = vmatpush1.bf16.msra.mxu0 %v6271
    %7251 = vmatprep.subr.bf16.mxu0 %v6276
    %7252 = vmatpush1.bf16.msra.mxu0 %v6275
    %7253 = vmatprep.subr.bf16.mxu0 %v6280
    %7254 = vmatpush1.bf16.msra.mxu0 %v6279
    %7255 = vmatprep.subr.bf16.mxu0 %v6284
    %7256 = vmatpush1.bf16.msra.mxu0 %v6283
    %7257 = vmatprep.subr.bf16.mxu0 %v6288
    %7258 = vmatpush1.bf16.msra.mxu0 %v6287
    %7259 = vmatprep.subr.bf16.mxu0 %v6292
    %7260 = vmatpush1.bf16.msra.mxu0 %v6291
    %7261 = vmatprep.subr.bf16.mxu0 %v6296
    %7262 = vmatpush1.bf16.msra.mxu0 %v6295
    %7263 = vmatprep.subr.bf16.mxu0 %v6300
    %7264 = vmatpush1.bf16.msra.mxu0 %v6299
    %7265 = vmatprep.subr.bf16.mxu0 %v6304
    %7266 = vmatpush1.bf16.msra.mxu0 %v6303
    %7267 = vmatprep.subr.bf16.mxu0 %v6308
    %7268 = vmatpush1.bf16.msra.mxu0 %v6307
    %7269 = vmatprep.subr.bf16.mxu0 %v6312
    %7270 = vmatpush1.bf16.msra.mxu0 %v6311
    %7271 = vmatprep.subr.bf16.mxu0 %v6316
    %7272 = vmatpush1.bf16.msra.mxu0 %v6315
    %7273 = vmatprep.subr.bf16.mxu0 %v6320
    %7274 = vmatpush1.bf16.msra.mxu0 %v6319
    %7275 = vmatprep.subr.bf16.mxu0 %v6324
    %7276 = vmatpush1.bf16.msra.mxu0 %v6323
    %7277 = vmatprep.mubr.bf16.mxu0 %v4054
    %7278 = vmatmul.mubr.bf16.gmra.mrb[0].mxu0 %v4053
    %v7279 = vpop.f32.mrb[0].mxu0
    %v7280 = vadd.f32 %v7237, %v7279
    %v7281 = vpop.f32.mrb[0].mxu0
    %v7282 = vadd.f32 %v7239, %v7281
    %v7283 = vpop.f32.mrb[0].mxu0
    %v7284 = vadd.f32 %v7241, %v7283
    %v7285 = vpop.f32.mrb[0].mxu0
    %v7286 = vadd.f32 %v7243, %v7285
    %7287 = vdwg.mxu0
    %7288 = vmatprep.subr.bf16.mxu0 %v6328
    %7289 = vmatpush1.bf16.msra.mxu0 %v6327
    %7290 = vmatprep.subr.bf16.mxu0 %v6332
    %7291 = vmatpush1.bf16.msra.mxu0 %v6331
    %7292 = vmatprep.subr.bf16.mxu0 %v6336
    %7293 = vmatpush1.bf16.msra.mxu0 %v6335
    %7294 = vmatprep.subr.bf16.mxu0 %v6340
    %7295 = vmatpush1.bf16.msra.mxu0 %v6339
    %7296 = vmatprep.subr.bf16.mxu0 %v6344
    %7297 = vmatpush1.bf16.msra.mxu0 %v6343
    %7298 = vmatprep.subr.bf16.mxu0 %v6348
    %7299 = vmatpush1.bf16.msra.mxu0 %v6347
    %7300 = vmatprep.subr.bf16.mxu0 %v6352
    %7301 = vmatpush1.bf16.msra.mxu0 %v6351
    %7302 = vmatprep.subr.bf16.mxu0 %v6356
    %7303 = vmatpush1.bf16.msra.mxu0 %v6355
    %7304 = vmatprep.subr.bf16.mxu0 %v6360
    %7305 = vmatpush1.bf16.msra.mxu0 %v6359
    %7306 = vmatprep.subr.bf16.mxu0 %v6364
    %7307 = vmatpush1.bf16.msra.mxu0 %v6363
    %7308 = vmatprep.subr.bf16.mxu0 %v6368
    %7309 = vmatpush1.bf16.msra.mxu0 %v6367
    %7310 = vmatprep.subr.bf16.mxu0 %v6372
    %7311 = vmatpush1.bf16.msra.mxu0 %v6371
    %7312 = vmatprep.subr.bf16.mxu0 %v6376
    %7313 = vmatpush1.bf16.msra.mxu0 %v6375
    %7314 = vmatprep.subr.bf16.mxu0 %v6380
    %7315 = vmatpush1.bf16.msra.mxu0 %v6379
    %7316 = vmatprep.subr.bf16.mxu0 %v6384
    %7317 = vmatpush1.bf16.msra.mxu0 %v6383
    %7318 = vmatprep.subr.bf16.mxu0 %v6388
    %7319 = vmatpush1.bf16.msra.mxu0 %v6387
    %7320 = vmatprep.mubr.bf16.mxu0 %v4056
    %7321 = vmatmul.mubr.bf16.gmra.mrb[0].mxu0 %v4055
    %v7322 = vpop.f32.mrb[0].mxu0
    %v7323 = vadd.f32 %v7280, %v7322
    %v7324 = vpop.f32.mrb[0].mxu0
    %v7325 = vadd.f32 %v7282, %v7324
    %v7326 = vpop.f32.mrb[0].mxu0
    %v7327 = vadd.f32 %v7284, %v7326
    %v7328 = vpop.f32.mrb[0].mxu0
    %v7329 = vadd.f32 %v7286, %v7328
    %7330 = vdwg.mxu0
    %7331 = vmatprep.subr.bf16.mxu0 %v6392
    %7332 = vmatpush1.bf16.msra.mxu0 %v6391
    %7333 = vmatprep.subr.bf16.mxu0 %v6396
    %7334 = vmatpush1.bf16.msra.mxu0 %v6395
    %7335 = vmatprep.subr.bf16.mxu0 %v6400
    %7336 = vmatpush1.bf16.msra.mxu0 %v6399
    %7337 = vmatprep.subr.bf16.mxu0 %v6404
    %7338 = vmatpush1.bf16.msra.mxu0 %v6403
    %7339 = vmatprep.subr.bf16.mxu0 %v6408
    %7340 = vmatpush1.bf16.msra.mxu0 %v6407
    %7341 = vmatprep.subr.bf16.mxu0 %v6412
    %7342 = vmatpush1.bf16.msra.mxu0 %v6411
    %7343 = vmatprep.subr.bf16.mxu0 %v6416
    %7344 = vmatpush1.bf16.msra.mxu0 %v6415
    %7345 = vmatprep.subr.bf16.mxu0 %v6420
    %7346 = vmatpush1.bf16.msra.mxu0 %v6419
    %7347 = vmatprep.subr.bf16.mxu0 %v6424
    %7348 = vmatpush1.bf16.msra.mxu0 %v6423
    %7349 = vmatprep.subr.bf16.mxu0 %v6428
    %7350 = vmatpush1.bf16.msra.mxu0 %v6427
    %7351 = vmatprep.subr.bf16.mxu0 %v6432
    %7352 = vmatpush1.bf16.msra.mxu0 %v6431
    %7353 = vmatprep.subr.bf16.mxu0 %v6436
    %7354 = vmatpush1.bf16.msra.mxu0 %v6435
    %7355 = vmatprep.subr.bf16.mxu0 %v6440
    %7356 = vmatpush1.bf16.msra.mxu0 %v6439
    %7357 = vmatprep.subr.bf16.mxu0 %v6444
    %7358 = vmatpush1.bf16.msra.mxu0 %v6443
    %7359 = vmatprep.subr.bf16.mxu0 %v6448
    %7360 = vmatpush1.bf16.msra.mxu0 %v6447
    %7361 = vmatprep.subr.bf16.mxu0 %v6452
    %7362 = vmatpush1.bf16.msra.mxu0 %v6451
    %7363 = vmatprep.mubr.bf16.mxu0 %v4058
    %7364 = vmatmul.mubr.bf16.gmra.mrb[0].mxu0 %v4057
    %v7365 = vpop.f32.mrb[0].mxu0
    %v7366 = vadd.f32 %v7323, %v7365
    %v7367 = vpop.f32.mrb[0].mxu0
    %v7368 = vadd.f32 %v7325, %v7367
    %v7369 = vpop.f32.mrb[0].mxu0
    %v7370 = vadd.f32 %v7327, %v7369
    %v7371 = vpop.f32.mrb[0].mxu0
    %v7372 = vadd.f32 %v7329, %v7371
    %7373 = vdwg.mxu0
    %7374 = vmatprep.subr.bf16.mxu0 %v6456
    %7375 = vmatpush1.bf16.msra.mxu0 %v6455
    %7376 = vmatprep.subr.bf16.mxu0 %v6460
    %7377 = vmatpush1.bf16.msra.mxu0 %v6459
    %7378 = vmatprep.subr.bf16.mxu0 %v6464
    %7379 = vmatpush1.bf16.msra.mxu0 %v6463
    %7380 = vmatprep.subr.bf16.mxu0 %v6468
    %7381 = vmatpush1.bf16.msra.mxu0 %v6467
    %7382 = vmatprep.subr.bf16.mxu0 %v6472
    %7383 = vmatpush1.bf16.msra.mxu0 %v6471
    %7384 = vmatprep.subr.bf16.mxu0 %v6476
    %7385 = vmatpush1.bf16.msra.mxu0 %v6475
    %7386 = vmatprep.subr.bf16.mxu0 %v6480
    %7387 = vmatpush1.bf16.msra.mxu0 %v6479
    %7388 = vmatprep.subr.bf16.mxu0 %v6484
    %7389 = vmatpush1.bf16.msra.mxu0 %v6483
    %7390 = vmatprep.subr.bf16.mxu0 %v6488
    %7391 = vmatpush1.bf16.msra.mxu0 %v6487
    %7392 = vmatprep.subr.bf16.mxu0 %v6492
    %7393 = vmatpush1.bf16.msra.mxu0 %v6491
    %7394 = vmatprep.subr.bf16.mxu0 %v6496
    %7395 = vmatpush1.bf16.msra.mxu0 %v6495
    %7396 = vmatprep.subr.bf16.mxu0 %v6500
    %7397 = vmatpush1.bf16.msra.mxu0 %v6499
    %7398 = vmatprep.subr.bf16.mxu0 %v6504
    %7399 = vmatpush1.bf16.msra.mxu0 %v6503
    %7400 = vmatprep.subr.bf16.mxu0 %v6508
    %7401 = vmatpush1.bf16.msra.mxu0 %v6507
    %7402 = vmatprep.subr.bf16.mxu0 %v6512
    %7403 = vmatpush1.bf16.msra.mxu0 %v6511
    %7404 = vmatprep.subr.bf16.mxu0 %v6516
    %7405 = vmatpush1.bf16.msra.mxu0 %v6515
    %7406 = vmatprep.mubr.bf16.mxu0 %v4060
    %7407 = vmatmul.mubr.bf16.gmra.mrb[0].mxu0 %v4059
    %v7408 = vpop.f32.mrb[0].mxu0
    %v7409 = vadd.f32 %v7366, %v7408
    %v7410 = vpop.f32.mrb[0].mxu0
    %v7411 = vadd.f32 %v7368, %v7410
    %v7412 = vpop.f32.mrb[0].mxu0
    %v7413 = vadd.f32 %v7370, %v7412
    %v7414 = vpop.f32.mrb[0].mxu0
    %v7415 = vadd.f32 %v7372, %v7414
    %7416 = vdwg.mxu0
    %7417 = vmatprep.subr.bf16.mxu0 %v6520
    %7418 = vmatpush1.bf16.msra.mxu0 %v6519
    %7419 = vmatprep.subr.bf16.mxu0 %v6524
    %7420 = vmatpush1.bf16.msra.mxu0 %v6523
    %7421 = vmatprep.subr.bf16.mxu0 %v6528
    %7422 = vmatpush1.bf16.msra.mxu0 %v6527
    %7423 = vmatprep.subr.bf16.mxu0 %v6532
    %7424 = vmatpush1.bf16.msra.mxu0 %v6531
    %7425 = vmatprep.subr.bf16.mxu0 %v6536
    %7426 = vmatpush1.bf16.msra.mxu0 %v6535
    %7427 = vmatprep.subr.bf16.mxu0 %v6540
    %7428 = vmatpush1.bf16.msra.mxu0 %v6539
    %7429 = vmatprep.subr.bf16.mxu0 %v6544
    %7430 = vmatpush1.bf16.msra.mxu0 %v6543
    %7431 = vmatprep.subr.bf16.mxu0 %v6548
    %7432 = vmatpush1.bf16.msra.mxu0 %v6547
    %7433 = vmatprep.subr.bf16.mxu0 %v6552
    %7434 = vmatpush1.bf16.msra.mxu0 %v6551
    %7435 = vmatprep.subr.bf16.mxu0 %v6556
    %7436 = vmatpush1.bf16.msra.mxu0 %v6555
    %7437 = vmatprep.subr.bf16.mxu0 %v6560
    %7438 = vmatpush1.bf16.msra.mxu0 %v6559
    %7439 = vmatprep.subr.bf16.mxu0 %v6564
    %7440 = vmatpush1.bf16.msra.mxu0 %v6563
    %7441 = vmatprep.subr.bf16.mxu0 %v6568
    %7442 = vmatpush1.bf16.msra.mxu0 %v6567
    %7443 = vmatprep.subr.bf16.mxu0 %v6572
    %7444 = vmatpush1.bf16.msra.mxu0 %v6571
    %7445 = vmatprep.subr.bf16.mxu0 %v6576
    %7446 = vmatpush1.bf16.msra.mxu0 %v6575
    %7447 = vmatprep.subr.bf16.mxu0 %v6580
    %7448 = vmatpush1.bf16.msra.mxu0 %v6579
    %7449 = vmatprep.mubr.bf16.mxu0 %v4062
    %7450 = vmatmul.mubr.bf16.gmra.mrb[0].mxu0 %v4061
    %v7451 = vpop.f32.mrb[0].mxu0
    %v7452 = vadd.f32 %v7409, %v7451
    %v7453 = vpop.f32.mrb[0].mxu0
    %v7454 = vadd.f32 %v7411, %v7453
    %v7455 = vpop.f32.mrb[0].mxu0
    %v7456 = vadd.f32 %v7413, %v7455
    %v7457 = vpop.f32.mrb[0].mxu0
    %v7458 = vadd.f32 %v7415, %v7457
    %7459 = vdwg.mxu0
    %7460 = vmatprep.subr.bf16.mxu0 %v6584
    %7461 = vmatpush1.bf16.msra.mxu0 %v6583
    %7462 = vmatprep.subr.bf16.mxu0 %v6588
    %7463 = vmatpush1.bf16.msra.mxu0 %v6587
    %7464 = vmatprep.subr.bf16.mxu0 %v6592
    %7465 = vmatpush1.bf16.msra.mxu0 %v6591
    %7466 = vmatprep.subr.bf16.mxu0 %v6596
    %7467 = vmatpush1.bf16.msra.mxu0 %v6595
    %7468 = vmatprep.subr.bf16.mxu0 %v6600
    %7469 = vmatpush1.bf16.msra.mxu0 %v6599
    %7470 = vmatprep.subr.bf16.mxu0 %v6604
    %7471 = vmatpush1.bf16.msra.mxu0 %v6603
    %7472 = vmatprep.subr.bf16.mxu0 %v6608
    %7473 = vmatpush1.bf16.msra.mxu0 %v6607
    %7474 = vmatprep.subr.bf16.mxu0 %v6612
    %7475 = vmatpush1.bf16.msra.mxu0 %v6611
    %7476 = vmatprep.subr.bf16.mxu0 %v6616
    %7477 = vmatpush1.bf16.msra.mxu0 %v6615
    %7478 = vmatprep.subr.bf16.mxu0 %v6620
    %7479 = vmatpush1.bf16.msra.mxu0 %v6619
    %7480 = vmatprep.subr.bf16.mxu0 %v6624
    %7481 = vmatpush1.bf16.msra.mxu0 %v6623
    %7482 = vmatprep.subr.bf16.mxu0 %v6628
    %7483 = vmatpush1.bf16.msra.mxu0 %v6627
    %7484 = vmatprep.subr.bf16.mxu0 %v6632
    %7485 = vmatpush1.bf16.msra.mxu0 %v6631
    %7486 = vmatprep.subr.bf16.mxu0 %v6636
    %7487 = vmatpush1.bf16.msra.mxu0 %v6635
    %7488 = vmatprep.subr.bf16.mxu0 %v6640
    %7489 = vmatpush1.bf16.msra.mxu0 %v6639
    %7490 = vmatprep.subr.bf16.mxu0 %v6644
    %7491 = vmatpush1.bf16.msra.mxu0 %v6643
    %7492 = vmatprep.mubr.bf16.mxu0 %v4064
    %7493 = vmatmul.mubr.bf16.gmra.mrb[0].mxu0 %v4063
    %v7494 = vpop.f32.mrb[0].mxu0
    %v7495 = vadd.f32 %v7452, %v7494
    %v7496 = vpop.f32.mrb[0].mxu0
    %v7497 = vadd.f32 %v7454, %v7496
    %v7498 = vpop.f32.mrb[0].mxu0
    %v7499 = vadd.f32 %v7456, %v7498
    %v7500 = vpop.f32.mrb[0].mxu0
    %v7501 = vadd.f32 %v7458, %v7500
    %7502 = vdwg.mxu0
    %7503 = vmatprep.subr.bf16.mxu0 %v6138
    %7504 = vmatpush1.bf16.msra.mxu0 %v6137
    %7505 = vmatprep.subr.bf16.mxu0 %v6142
    %7506 = vmatpush1.bf16.msra.mxu0 %v6141
    %7507 = vmatprep.subr.bf16.mxu0 %v6146
    %7508 = vmatpush1.bf16.msra.mxu0 %v6145
    %7509 = vmatprep.subr.bf16.mxu0 %v6150
    %7510 = vmatpush1.bf16.msra.mxu0 %v6149
    %7511 = vmatprep.subr.bf16.mxu0 %v6154
    %7512 = vmatpush1.bf16.msra.mxu0 %v6153
    %7513 = vmatprep.subr.bf16.mxu0 %v6158
    %7514 = vmatpush1.bf16.msra.mxu0 %v6157
    %7515 = vmatprep.subr.bf16.mxu0 %v6162
    %7516 = vmatpush1.bf16.msra.mxu0 %v6161
    %7517 = vmatprep.subr.bf16.mxu0 %v6166
    %7518 = vmatpush1.bf16.msra.mxu0 %v6165
    %7519 = vmatprep.subr.bf16.mxu0 %v6170
    %7520 = vmatpush1.bf16.msra.mxu0 %v6169
    %7521 = vmatprep.subr.bf16.mxu0 %v6174
    %7522 = vmatpush1.bf16.msra.mxu0 %v6173
    %7523 = vmatprep.subr.bf16.mxu0 %v6178
    %7524 = vmatpush1.bf16.msra.mxu0 %v6177
    %7525 = vmatprep.subr.bf16.mxu0 %v6182
    %7526 = vmatpush1.bf16.msra.mxu0 %v6181
    %7527 = vmatprep.subr.bf16.mxu0 %v6186
    %7528 = vmatpush1.bf16.msra.mxu0 %v6185
    %7529 = vmatprep.subr.bf16.mxu0 %v6190
    %7530 = vmatpush1.bf16.msra.mxu0 %v6189
    %7531 = vmatprep.subr.bf16.mxu0 %v6194
    %7532 = vmatpush1.bf16.msra.mxu0 %v6193
    %7533 = vmatprep.subr.bf16.mxu0 %v6198
    %7534 = vmatpush1.bf16.msra.mxu0 %v6197
    %7535 = vmatprep.mubr.bf16.mxu0 %v4050
    %7536 = vmatmul.mubr.bf16.gmra.mrb[0].mxu0 %v4049
    %v7537 = vpop.f32.mrb[0].mxu0
    %v7538 = vadd.f32 %v4590, %v7537
    %v7539 = vpop.f32.mrb[0].mxu0
    %v7540 = vadd.f32 %v4594, %v7539
    %v7541 = vpop.f32.mrb[0].mxu0
    %v7542 = vadd.f32 %v4590, %v7541
    %v7543 = vpop.f32.mrb[0].mxu0
    %v7544 = vadd.f32 %v4594, %v7543
    %7545 = vdwg.mxu0
    %7546 = vmatprep.subr.bf16.mxu0 %v6202
    %7547 = vmatpush1.bf16.msra.mxu0 %v6201
    %7548 = vmatprep.subr.bf16.mxu0 %v6206
    %7549 = vmatpush1.bf16.msra.mxu0 %v6205
    %7550 = vmatprep.subr.bf16.mxu0 %v6210
    %7551 = vmatpush1.bf16.msra.mxu0 %v6209
    %7552 = vmatprep.subr.bf16.mxu0 %v6214
    %7553 = vmatpush1.bf16.msra.mxu0 %v6213
    %7554 = vmatprep.subr.bf16.mxu0 %v6218
    %7555 = vmatpush1.bf16.msra.mxu0 %v6217
    %7556 = vmatprep.subr.bf16.mxu0 %v6222
    %7557 = vmatpush1.bf16.msra.mxu0 %v6221
    %7558 = vmatprep.subr.bf16.mxu0 %v6226
    %7559 = vmatpush1.bf16.msra.mxu0 %v6225
    %7560 = vmatprep.subr.bf16.mxu0 %v6230
    %7561 = vmatpush1.bf16.msra.mxu0 %v6229
    %7562 = vmatprep.subr.bf16.mxu0 %v6234
    %7563 = vmatpush1.bf16.msra.mxu0 %v6233
    %7564 = vmatprep.subr.bf16.mxu0 %v6238
    %7565 = vmatpush1.bf16.msra.mxu0 %v6237
    %7566 = vmatprep.subr.bf16.mxu0 %v6242
    %7567 = vmatpush1.bf16.msra.mxu0 %v6241
    %7568 = vmatprep.subr.bf16.mxu0 %v6246
    %7569 = vmatpush1.bf16.msra.mxu0 %v6245
    %7570 = vmatprep.subr.bf16.mxu0 %v6250
    %7571 = vmatpush1.bf16.msra.mxu0 %v6249
    %7572 = vmatprep.subr.bf16.mxu0 %v6254
    %7573 = vmatpush1.bf16.msra.mxu0 %v6253
    %7574 = vmatprep.subr.bf16.mxu0 %v6258
    %7575 = vmatpush1.bf16.msra.mxu0 %v6257
    %7576 = vmatprep.subr.bf16.mxu0 %v6262
    %7577 = vmatpush1.bf16.msra.mxu0 %v6261
    %7578 = vmatprep.mubr.bf16.mxu0 %v4052
    %7579 = vmatmul.mubr.bf16.gmra.mrb[0].mxu0 %v4051
    %v7580 = vpop.f32.mrb[0].mxu0
    %v7581 = vadd.f32 %v7538, %v7580
    %v7582 = vpop.f32.mrb[0].mxu0
    %v7583 = vadd.f32 %v7540, %v7582
    %v7584 = vpop.f32.mrb[0].mxu0
    %v7585 = vadd.f32 %v7542, %v7584
    %v7586 = vpop.f32.mrb[0].mxu0
    %v7587 = vadd.f32 %v7544, %v7586
    %7588 = vdwg.mxu0
    %7589 = vmatprep.subr.bf16.mxu0 %v6266
    %7590 = vmatpush1.bf16.msra.mxu0 %v6265
    %7591 = vmatprep.subr.bf16.mxu0 %v6270
    %7592 = vmatpush1.bf16.msra.mxu0 %v6269
    %7593 = vmatprep.subr.bf16.mxu0 %v6274
    %7594 = vmatpush1.bf16.msra.mxu0 %v6273
    %7595 = vmatprep.subr.bf16.mxu0 %v6278
    %7596 = vmatpush1.bf16.msra.mxu0 %v6277
    %7597 = vmatprep.subr.bf16.mxu0 %v6282
    %7598 = vmatpush1.bf16.msra.mxu0 %v6281
    %7599 = vmatprep.subr.bf16.mxu0 %v6286
    %7600 = vmatpush1.bf16.msra.mxu0 %v6285
    %7601 = vmatprep.subr.bf16.mxu0 %v6290
    %7602 = vmatpush1.bf16.msra.mxu0 %v6289
    %7603 = vmatprep.subr.bf16.mxu0 %v6294
    %7604 = vmatpush1.bf16.msra.mxu0 %v6293
    %7605 = vmatprep.subr.bf16.mxu0 %v6298
    %7606 = vmatpush1.bf16.msra.mxu0 %v6297
    %7607 = vmatprep.subr.bf16.mxu0 %v6302
    %7608 = vmatpush1.bf16.msra.mxu0 %v6301
    %7609 = vmatprep.subr.bf16.mxu0 %v6306
    %7610 = vmatpush1.bf16.msra.mxu0 %v6305
    %7611 = vmatprep.subr.bf16.mxu0 %v6310
    %7612 = vmatpush1.bf16.msra.mxu0 %v6309
    %7613 = vmatprep.subr.bf16.mxu0 %v6314
    %7614 = vmatpush1.bf16.msra.mxu0 %v6313
    %7615 = vmatprep.subr.bf16.mxu0 %v6318
    %7616 = vmatpush1.bf16.msra.mxu0 %v6317
    %7617 = vmatprep.subr.bf16.mxu0 %v6322
    %7618 = vmatpush1.bf16.msra.mxu0 %v6321
    %7619 = vmatprep.subr.bf16.mxu0 %v6326
    %7620 = vmatpush1.bf16.msra.mxu0 %v6325
    %7621 = vmatprep.mubr.bf16.mxu0 %v4054
    %7622 = vmatmul.mubr.bf16.gmra.mrb[0].mxu0 %v4053
    %v7623 = vpop.f32.mrb[0].mxu0
    %v7624 = vadd.f32 %v7581, %v7623
    %v7625 = vpop.f32.mrb[0].mxu0
    %v7626 = vadd.f32 %v7583, %v7625
    %v7627 = vpop.f32.mrb[0].mxu0
    %v7628 = vadd.f32 %v7585, %v7627
    %v7629 = vpop.f32.mrb[0].mxu0
    %v7630 = vadd.f32 %v7587, %v7629
    %7631 = vdwg.mxu0
    %7632 = vmatprep.subr.bf16.mxu0 %v6330
    %7633 = vmatpush1.bf16.msra.mxu0 %v6329
    %7634 = vmatprep.subr.bf16.mxu0 %v6334
    %7635 = vmatpush1.bf16.msra.mxu0 %v6333
    %7636 = vmatprep.subr.bf16.mxu0 %v6338
    %7637 = vmatpush1.bf16.msra.mxu0 %v6337
    %7638 = vmatprep.subr.bf16.mxu0 %v6342
    %7639 = vmatpush1.bf16.msra.mxu0 %v6341
    %7640 = vmatprep.subr.bf16.mxu0 %v6346
    %7641 = vmatpush1.bf16.msra.mxu0 %v6345
    %7642 = vmatprep.subr.bf16.mxu0 %v6350
    %7643 = vmatpush1.bf16.msra.mxu0 %v6349
    %7644 = vmatprep.subr.bf16.mxu0 %v6354
    %7645 = vmatpush1.bf16.msra.mxu0 %v6353
    %7646 = vmatprep.subr.bf16.mxu0 %v6358
    %7647 = vmatpush1.bf16.msra.mxu0 %v6357
    %7648 = vmatprep.subr.bf16.mxu0 %v6362
    %7649 = vmatpush1.bf16.msra.mxu0 %v6361
    %7650 = vmatprep.subr.bf16.mxu0 %v6366
    %7651 = vmatpush1.bf16.msra.mxu0 %v6365
    %7652 = vmatprep.subr.bf16.mxu0 %v6370
    %7653 = vmatpush1.bf16.msra.mxu0 %v6369
    %7654 = vmatprep.subr.bf16.mxu0 %v6374
    %7655 = vmatpush1.bf16.msra.mxu0 %v6373
    %7656 = vmatprep.subr.bf16.mxu0 %v6378
    %7657 = vmatpush1.bf16.msra.mxu0 %v6377
    %7658 = vmatprep.subr.bf16.mxu0 %v6382
    %7659 = vmatpush1.bf16.msra.mxu0 %v6381
    %7660 = vmatprep.subr.bf16.mxu0 %v6386
    %7661 = vmatpush1.bf16.msra.mxu0 %v6385
    %7662 = vmatprep.subr.bf16.mxu0 %v6390
    %7663 = vmatpush1.bf16.msra.mxu0 %v6389
    %7664 = vmatprep.mubr.bf16.mxu0 %v4056
    %7665 = vmatmul.mubr.bf16.gmra.mrb[0].mxu0 %v4055
    %v7666 = vpop.f32.mrb[0].mxu0
    %v7667 = vadd.f32 %v7624, %v7666
    %v7668 = vpop.f32.mrb[0].mxu0
    %v7669 = vadd.f32 %v7626, %v7668
    %v7670 = vpop.f32.mrb[0].mxu0
    %v7671 = vadd.f32 %v7628, %v7670
    %v7672 = vpop.f32.mrb[0].mxu0
    %v7673 = vadd.f32 %v7630, %v7672
    %7674 = vdwg.mxu0
    %7675 = vmatprep.subr.bf16.mxu0 %v6394
    %7676 = vmatpush1.bf16.msra.mxu0 %v6393
    %7677 = vmatprep.subr.bf16.mxu0 %v6398
    %7678 = vmatpush1.bf16.msra.mxu0 %v6397
    %7679 = vmatprep.subr.bf16.mxu0 %v6402
    %7680 = vmatpush1.bf16.msra.mxu0 %v6401
    %7681 = vmatprep.subr.bf16.mxu0 %v6406
    %7682 = vmatpush1.bf16.msra.mxu0 %v6405
    %7683 = vmatprep.subr.bf16.mxu0 %v6410
    %7684 = vmatpush1.bf16.msra.mxu0 %v6409
    %7685 = vmatprep.subr.bf16.mxu0 %v6414
    %7686 = vmatpush1.bf16.msra.mxu0 %v6413
    %7687 = vmatprep.subr.bf16.mxu0 %v6418
    %7688 = vmatpush1.bf16.msra.mxu0 %v6417
    %7689 = vmatprep.subr.bf16.mxu0 %v6422
    %7690 = vmatpush1.bf16.msra.mxu0 %v6421
    %7691 = vmatprep.subr.bf16.mxu0 %v6426
    %7692 = vmatpush1.bf16.msra.mxu0 %v6425
    %7693 = vmatprep.subr.bf16.mxu0 %v6430
    %7694 = vmatpush1.bf16.msra.mxu0 %v6429
    %7695 = vmatprep.subr.bf16.mxu0 %v6434
    %7696 = vmatpush1.bf16.msra.mxu0 %v6433
    %7697 = vmatprep.subr.bf16.mxu0 %v6438
    %7698 = vmatpush1.bf16.msra.mxu0 %v6437
    %7699 = vmatprep.subr.bf16.mxu0 %v6442
    %7700 = vmatpush1.bf16.msra.mxu0 %v6441
    %7701 = vmatprep.subr.bf16.mxu0 %v6446
    %7702 = vmatpush1.bf16.msra.mxu0 %v6445
    %7703 = vmatprep.subr.bf16.mxu0 %v6450
    %7704 = vmatpush1.bf16.msra.mxu0 %v6449
    %7705 = vmatprep.subr.bf16.mxu0 %v6454
    %7706 = vmatpush1.bf16.msra.mxu0 %v6453
    %7707 = vmatprep.mubr.bf16.mxu0 %v4058
    %7708 = vmatmul.mubr.bf16.gmra.mrb[0].mxu0 %v4057
    %v7709 = vpop.f32.mrb[0].mxu0
    %v7710 = vadd.f32 %v7667, %v7709
    %v7711 = vpop.f32.mrb[0].mxu0
    %v7712 = vadd.f32 %v7669, %v7711
    %v7713 = vpop.f32.mrb[0].mxu0
    %v7714 = vadd.f32 %v7671, %v7713
    %v7715 = vpop.f32.mrb[0].mxu0
    %v7716 = vadd.f32 %v7673, %v7715
    %7717 = vdwg.mxu0
    %7718 = vmatprep.subr.bf16.mxu0 %v6458
    %7719 = vmatpush1.bf16.msra.mxu0 %v6457
    %7720 = vmatprep.subr.bf16.mxu0 %v6462
    %7721 = vmatpush1.bf16.msra.mxu0 %v6461
    %7722 = vmatprep.subr.bf16.mxu0 %v6466
    %7723 = vmatpush1.bf16.msra.mxu0 %v6465
    %7724 = vmatprep.subr.bf16.mxu0 %v6470
    %7725 = vmatpush1.bf16.msra.mxu0 %v6469
    %7726 = vmatprep.subr.bf16.mxu0 %v6474
    %7727 = vmatpush1.bf16.msra.mxu0 %v6473
    %7728 = vmatprep.subr.bf16.mxu0 %v6478
    %7729 = vmatpush1.bf16.msra.mxu0 %v6477
    %7730 = vmatprep.subr.bf16.mxu0 %v6482
    %7731 = vmatpush1.bf16.msra.mxu0 %v6481
    %7732 = vmatprep.subr.bf16.mxu0 %v6486
    %7733 = vmatpush1.bf16.msra.mxu0 %v6485
    %7734 = vmatprep.subr.bf16.mxu0 %v6490
    %7735 = vmatpush1.bf16.msra.mxu0 %v6489
    %7736 = vmatprep.subr.bf16.mxu0 %v6494
    %7737 = vmatpush1.bf16.msra.mxu0 %v6493
    %7738 = vmatprep.subr.bf16.mxu0 %v6498
    %7739 = vmatpush1.bf16.msra.mxu0 %v6497
    %7740 = vmatprep.subr.bf16.mxu0 %v6502
    %7741 = vmatpush1.bf16.msra.mxu0 %v6501
    %7742 = vmatprep.subr.bf16.mxu0 %v6506
    %7743 = vmatpush1.bf16.msra.mxu0 %v6505
    %7744 = vmatprep.subr.bf16.mxu0 %v6510
    %7745 = vmatpush1.bf16.msra.mxu0 %v6509
    %7746 = vmatprep.subr.bf16.mxu0 %v6514
    %7747 = vmatpush1.bf16.msra.mxu0 %v6513
    %7748 = vmatprep.subr.bf16.mxu0 %v6518
    %7749 = vmatpush1.bf16.msra.mxu0 %v6517
    %7750 = vmatprep.mubr.bf16.mxu0 %v4060
    %7751 = vmatmul.mubr.bf16.gmra.mrb[0].mxu0 %v4059
    %v7752 = vpop.f32.mrb[0].mxu0
    %v7753 = vadd.f32 %v7710, %v7752
    %v7754 = vpop.f32.mrb[0].mxu0
    %v7755 = vadd.f32 %v7712, %v7754
    %v7756 = vpop.f32.mrb[0].mxu0
    %v7757 = vadd.f32 %v7714, %v7756
    %v7758 = vpop.f32.mrb[0].mxu0
    %v7759 = vadd.f32 %v7716, %v7758
    %7760 = vdwg.mxu0
    %7761 = vmatprep.subr.bf16.mxu0 %v6522
    %7762 = vmatpush1.bf16.msra.mxu0 %v6521
    %7763 = vmatprep.subr.bf16.mxu0 %v6526
    %7764 = vmatpush1.bf16.msra.mxu0 %v6525
    %7765 = vmatprep.subr.bf16.mxu0 %v6530
    %7766 = vmatpush1.bf16.msra.mxu0 %v6529
    %7767 = vmatprep.subr.bf16.mxu0 %v6534
    %7768 = vmatpush1.bf16.msra.mxu0 %v6533
    %7769 = vmatprep.subr.bf16.mxu0 %v6538
    %7770 = vmatpush1.bf16.msra.mxu0 %v6537
    %7771 = vmatprep.subr.bf16.mxu0 %v6542
    %7772 = vmatpush1.bf16.msra.mxu0 %v6541
    %7773 = vmatprep.subr.bf16.mxu0 %v6546
    %7774 = vmatpush1.bf16.msra.mxu0 %v6545
    %7775 = vmatprep.subr.bf16.mxu0 %v6550
    %7776 = vmatpush1.bf16.msra.mxu0 %v6549
    %7777 = vmatprep.subr.bf16.mxu0 %v6554
    %7778 = vmatpush1.bf16.msra.mxu0 %v6553
    %7779 = vmatprep.subr.bf16.mxu0 %v6558
    %7780 = vmatpush1.bf16.msra.mxu0 %v6557
    %7781 = vmatprep.subr.bf16.mxu0 %v6562
    %7782 = vmatpush1.bf16.msra.mxu0 %v6561
    %7783 = vmatprep.subr.bf16.mxu0 %v6566
    %7784 = vmatpush1.bf16.msra.mxu0 %v6565
    %7785 = vmatprep.subr.bf16.mxu0 %v6570
    %7786 = vmatpush1.bf16.msra.mxu0 %v6569
    %7787 = vmatprep.subr.bf16.mxu0 %v6574
    %7788 = vmatpush1.bf16.msra.mxu0 %v6573
    %7789 = vmatprep.subr.bf16.mxu0 %v6578
    %7790 = vmatpush1.bf16.msra.mxu0 %v6577
    %7791 = vmatprep.subr.bf16.mxu0 %v6582
    %7792 = vmatpush1.bf16.msra.mxu0 %v6581
    %7793 = vmatprep.mubr.bf16.mxu0 %v4062
    %7794 = vmatmul.mubr.bf16.gmra.mrb[0].mxu0 %v4061
    %v7795 = vpop.f32.mrb[0].mxu0
    %v7796 = vadd.f32 %v7753, %v7795
    %v7797 = vpop.f32.mrb[0].mxu0
    %v7798 = vadd.f32 %v7755, %v7797
    %v7799 = vpop.f32.mrb[0].mxu0
    %v7800 = vadd.f32 %v7757, %v7799
    %v7801 = vpop.f32.mrb[0].mxu0
    %v7802 = vadd.f32 %v7759, %v7801
    %7803 = vdwg.mxu0
    %7804 = vmatprep.subr.bf16.mxu0 %v6586
    %7805 = vmatpush1.bf16.msra.mxu0 %v6585
    %7806 = vmatprep.subr.bf16.mxu0 %v6590
    %7807 = vmatpush1.bf16.msra.mxu0 %v6589
    %7808 = vmatprep.subr.bf16.mxu0 %v6594
    %7809 = vmatpush1.bf16.msra.mxu0 %v6593
    %7810 = vmatprep.subr.bf16.mxu0 %v6598
    %7811 = vmatpush1.bf16.msra.mxu0 %v6597
    %7812 = vmatprep.subr.bf16.mxu0 %v6602
    %7813 = vmatpush1.bf16.msra.mxu0 %v6601
    %7814 = vmatprep.subr.bf16.mxu0 %v6606
    %7815 = vmatpush1.bf16.msra.mxu0 %v6605
    %7816 = vmatprep.subr.bf16.mxu0 %v6610
    %7817 = vmatpush1.bf16.msra.mxu0 %v6609
    %7818 = vmatprep.subr.bf16.mxu0 %v6614
    %7819 = vmatpush1.bf16.msra.mxu0 %v6613
    %7820 = vmatprep.subr.bf16.mxu0 %v6618
    %7821 = vmatpush1.bf16.msra.mxu0 %v6617
    %7822 = vmatprep.subr.bf16.mxu0 %v6622
    %7823 = vmatpush1.bf16.msra.mxu0 %v6621
    %7824 = vmatprep.subr.bf16.mxu0 %v6626
    %7825 = vmatpush1.bf16.msra.mxu0 %v6625
    %7826 = vmatprep.subr.bf16.mxu0 %v6630
    %7827 = vmatpush1.bf16.msra.mxu0 %v6629
    %7828 = vmatprep.subr.bf16.mxu0 %v6634
    %7829 = vmatpush1.bf16.msra.mxu0 %v6633
    %7830 = vmatprep.subr.bf16.mxu0 %v6638
    %7831 = vmatpush1.bf16.msra.mxu0 %v6637
    %7832 = vmatprep.subr.bf16.mxu0 %v6642
    %7833 = vmatpush1.bf16.msra.mxu0 %v6641
    %7834 = vmatprep.subr.bf16.mxu0 %v6646
    %7835 = vmatpush1.bf16.msra.mxu0 %v6645
    %7836 = vmatprep.mubr.bf16.mxu0 %v4064
    %7837 = vmatmul.mubr.bf16.gmra.mrb[0].mxu0 %v4063
    %v7838 = vpop.f32.mrb[0].mxu0
    %v7839 = vadd.f32 %v7796, %v7838
    %v7840 = vpop.f32.mrb[0].mxu0
    %v7841 = vadd.f32 %v7798, %v7840
    %v7842 = vpop.f32.mrb[0].mxu0
    %v7843 = vadd.f32 %v7800, %v7842
    %v7844 = vpop.f32.mrb[0].mxu0
    %v7845 = vadd.f32 %v7802, %v7844
    %7846 = vdwg.mxu0
    %7847 = vst [vmem:[#allocation2] sm:$0xff] %v7495
    %7848 = vst [vmem:[#allocation2 + $0x8] sm:$0xff] %v7497
    %7849 = vst [vmem:[#allocation2 + $0x10] sm:$0xff] %v7839
    %7850 = vst [vmem:[#allocation2 + $0x18] sm:$0xff] %v7841
    %7851 = vst [vmem:[#allocation2 + $0x20] sm:$0xff] %v7499
    %7852 = vst [vmem:[#allocation2 + $0x28] sm:$0xff] %v7501
    %7853 = vst [vmem:[#allocation2 + $0x30] sm:$0xff] %v7843
    %7854 = vst [vmem:[#allocation2 + $0x38] sm:$0xff] %v7845
    // Predicated region
    $region22: #{gpt_neox_mlp.1} parent=1 // pred_check
      _
    $region23: #{gpt_neox_mlp.1} parent=1 // pred_check_branch
      %7856 = sbr.rel (0) target = $region25
    $region24: #{gpt_neox_mlp.1} parent=1 // pred_region
      %s7858 = ssub.s32 1024, 1024
      %7859 = vsyncadd [#allocation3], %s7858
      %s7860 = sshll.u32 [#allocation2], 4
      %s7861 = int_to_ptr.vmem [resolvable:$true] %s7860
      %7866 = dma.vmem_to_hbm [thread:$0]  %s7861, 1024, %s5, [#allocation3], 512, 512, 32
    $region25: #{gpt_neox_mlp.1} parent=1 // pred_fallthru
      _
    // Predicated region
    $region26: #{gpt_neox_mlp.1} parent=1 // pred_check
      _
    $region27: #{gpt_neox_mlp.1} parent=1 // pred_check_branch
      %7868 = sbr.rel (0) target = $region29
    $region28: #{gpt_neox_mlp.1} parent=1 // pred_region
      %7869 = dma.done [#allocation3], 1024
    $region29: #{gpt_neox_mlp.1} parent=1 // pred_fallthru
      _
    %7870 = vsyncpa [#allocation3], 1

</llo_original>
